<compile_context>
chip_gen: v5e
topology: v5e:2x2
jax: 0.10.0
libtpu: 0.0.40
codegen_flags: <defaults>
</compile_context>

<pallas_src>
import functools

import numpy as np
import jax
import jax.numpy as jnp
from jax import lax
from jax.experimental import pallas as pl
from jax.experimental.pallas import tpu as pltpu


# ------------------------------ Fused kernel ---------------------------------
def _dense_block_kernel(*refs, H, W, rate, cpg, mm_dtype):
    # refs layout (activations NHWC with spatial flattened to H*W rows):
    #   x_ref:    (1, H*W, Cin)
    #   w1_ref:   (Cin, C1)            b1/gamma/beta: (1, C1)
    #   w3_ref:   (9*C1, C2) im2col-ordered weight   b3: (1, C2)
    #   mask_ref: (H*W, 9)   0/1 validity mask per dilated-conv tap
    #   gmap_ref: (C1, C1)   only present when cpg > 1
    #   o_ref:    (1, H*W, C2)
    if cpg == 1:
        (x_ref, w1_ref, b1_ref, gamma_ref, beta_ref, w3_ref, b3_ref,
         mask_ref, o_ref) = refs
        gmap_ref = None
    else:
        (x_ref, w1_ref, b1_ref, gamma_ref, beta_ref, w3_ref, b3_ref,
         mask_ref, gmap_ref, o_ref) = refs

    C1 = w1_ref.shape[1]
    r = rate

    # ---- stage 1: 1x1 conv (matmul) + GroupNorm + ReLU -----------------------
    x = x_ref[0].astype(mm_dtype)                            # (H*W, Cin)
    y = jnp.dot(x, w1_ref[...], preferred_element_type=jnp.float32)
    y = y + b1_ref[...]                                      # (H*W, C1) f32

    mean_c = jnp.mean(y, axis=0, keepdims=True)              # (1, C1)
    d = y - mean_c
    var_c = jnp.mean(d * d, axis=0, keepdims=True)           # two-pass variance
    if cpg == 1:
        # GroupNorm degenerates to per-channel normalization; skip gmap matmuls.
        gmean, gvar = mean_c, var_c
    else:
        gmap = gmap_ref[...]
        gmean = jnp.dot(mean_c, gmap, preferred_element_type=jnp.float32)
        gm2 = jnp.dot(var_c + mean_c * mean_c, gmap,
                      preferred_element_type=jnp.float32)
        gvar = gm2 - gmean * gmean

    scale = lax.rsqrt(gvar + 1e-5) * gamma_ref[...]
    shift = beta_ref[...] - gmean * scale
    y1 = jnp.maximum(y * scale + shift, 0.0)                 # ReLU, (H*W, C1)

    # ---- stage 2: dilated 3x3 conv = 9 shifted+masked MXU matmuls ------------
    # For tap (ky, kx): out(y, x) needs in(y + (ky-1)*r, x + (kx-1)*r), which in
    # flat row index is a constant shift s; rows whose source falls outside the
    # image get zeroed by the precomputed mask (== the conv's zero padding).
    acc = None
    for ky in range(3):
        for kx in range(3):
            t = ky * 3 + kx
            s = ((ky - 1) * W + (kx - 1)) * r                # flat row shift
            if s == 0:
                tap = y1                                     # center tap: no shift/mask
            else:
                tap = jnp.roll(y1, -s, axis=0) * mask_ref[:, t:t + 1]
            p = jnp.dot(tap.astype(mm_dtype),
                        w3_ref[t * C1:(t + 1) * C1, :],
                        preferred_element_type=jnp.float32)  # (H*W, C2)
            acc = p if acc is None else acc + p

    acc = acc + b3_ref[...]
    o_ref[0] = jnp.maximum(acc, 0.0).astype(o_ref.dtype)     # ReLU
    # Dropout: identity (eval mode).
    # TODO(synk): training-mode dropout (pltpu.prng_seed / prng_random_bits) not implemented.


# -------------------------------- Wrappers ------------------------------------
def dense_block_forward_nhwc(x_nhwc, params, *, rate, num_groups=32,
                             matmul_dtype=jnp.float32):
    """DenseBlock forward on NHWC activations (no boundary transposes)."""
    w1, b1, gamma, beta, w3, b3 = (params[k] for k in
                                   ("w1", "b1", "gamma", "beta", "w3", "b3"))
    N, H, W, Cin = x_nhwc.shape
    C1 = w1.shape[0]                    # conv1x1 out channels (PyTorch OIHW)
    C2 = w3.shape[0]                    # dilaconv out channels
    assert C1 % num_groups == 0
    cpg = C1 // num_groups
    HW = H * W

    # Pre-flatten spatial (free contiguous reshape in XLA).
    x_flat = x_nhwc.reshape(N, HW, Cin)

    # Kernel-side parameter layouts.
    w1_k = jnp.transpose(w1[:, :, 0, 0], (1, 0)).astype(matmul_dtype)   # (Cin, C1)
    # (C2, C1, 3, 3) -> (ky, kx, Cin, Cout) -> (9*C1, C2) im2col weight
    w3_k = jnp.transpose(w3, (2, 3, 1, 0)).reshape(9 * C1, C2).astype(matmul_dtype)
    b1_k = b1.reshape(1, C1).astype(jnp.float32)
    b3_k = b3.reshape(1, C2).astype(jnp.float32)
    gamma_k = gamma.reshape(1, C1).astype(jnp.float32)
    beta_k = beta.reshape(1, C1).astype(jnp.float32)

    # 0/1 validity mask per (flat spatial row, tap): encodes the dilated conv's
    # implicit zero padding.  Built host-side with numpy (no in-kernel div/mod).
    ys, xs = np.meshgrid(np.arange(H), np.arange(W), indexing="ij")
    mask_np = np.zeros((HW, 9), np.float32)
    for ky in range(3):
        for kx in range(3):
            dy, dx = (ky - 1) * rate, (kx - 1) * rate
            valid = ((ys + dy >= 0) & (ys + dy < H)
                     & (xs + dx >= 0) & (xs + dx < W))
            mask_np[:, ky * 3 + kx] = valid.reshape(-1)
    mask_k = jnp.asarray(mask_np)

    inputs = [x_flat, w1_k, b1_k, gamma_k, beta_k, w3_k, b3_k, mask_k]
    in_specs = [
        pl.BlockSpec((1, HW, Cin), lambda n: (n, 0, 0)),
        pl.BlockSpec((Cin, C1), lambda n: (0, 0)),
        pl.BlockSpec((1, C1), lambda n: (0, 0)),
        pl.BlockSpec((1, C1), lambda n: (0, 0)),
        pl.BlockSpec((1, C1), lambda n: (0, 0)),
        pl.BlockSpec((9 * C1, C2), lambda n: (0, 0)),
        pl.BlockSpec((1, C2), lambda n: (0, 0)),
        pl.BlockSpec((HW, 9), lambda n: (0, 0)),
    ]
    if cpg > 1:
        # Group-averaging matrix: M[i, j] = 1/cpg if channels i, j share a group.
        idx = np.arange(C1)
        gmap = ((idx[:, None] // cpg) == (idx[None, :] // cpg)
                ).astype(np.float32) / cpg
        inputs.append(jnp.asarray(gmap))
        in_specs.append(pl.BlockSpec((C1, C1), lambda n: (0, 0)))

    kernel = functools.partial(_dense_block_kernel, H=H, W=W, rate=rate,
                               cpg=cpg, mm_dtype=matmul_dtype)

    y = pl.pallas_call(
        kernel,
        out_shape=jax.ShapeDtypeStruct((N, HW, C2), jnp.float32),
        grid=(N,),
        in_specs=in_specs,
        out_specs=pl.BlockSpec((1, HW, C2), lambda n: (n, 0, 0)),
        compiler_params=pltpu.CompilerParams(
            dimension_semantics=("parallel",)),
    )(*inputs)

    return y.reshape(N, H, W, C2)


def dense_block_forward(x_nchw, params, *, rate, matmul_dtype=jnp.float32):
    """PyTorch-convention entry point: x_nchw (N, Cin, H, W) float32."""
    x_nhwc = jnp.transpose(x_nchw, (0, 2, 3, 1))
    y = dense_block_forward_nhwc(x_nhwc, params, rate=rate,
                                 matmul_dtype=matmul_dtype)
    return jnp.transpose(y, (0, 3, 1, 2))


# --------------------------- Pure-JAX reference --------------------------------
def dense_block_reference(x, params, *, rate):
    w1, b1, gamma, beta, w3, b3 = (params[k] for k in
                                   ("w1", "b1", "gamma", "beta", "w3", "b3"))
    dn = ("NCHW", "OIHW", "NCHW")
    y = lax.conv_general_dilated(x, w1, (1, 1), "VALID", dimension_numbers=dn)
    y = y + b1[None, :, None, None]
    N, C, H, W = y.shape
    G = 32
    yr = y.reshape(N, G, C // G, H, W)
    mean = yr.mean(axis=(2, 3, 4), keepdims=True)
    var = yr.var(axis=(2, 3, 4), keepdims=True)
    yr = (yr - mean) / jnp.sqrt(var + 1e-5)
    y = yr.reshape(N, C, H, W) * gamma[None, :, None, None] + beta[None, :, None, None]
    y = jnp.maximum(y, 0.0)
    y = lax.conv_general_dilated(y, w3, (1, 1),
                                 [(rate, rate), (rate, rate)],
                                 rhs_dilation=(rate, rate),
                                 dimension_numbers=dn)
    y = y + b3[None, :, None, None]
    y = jnp.maximum(y, 0.0)
    return y


# ------------------------------------ Main -------------------------------------
if __name__ == "__main__":
    # DenseBlock(input_num=16, num1=32, num2=32, rate=2, drop_out=0.1)
    N, Cin, H, W = 2, 16, 16, 16
    C1, C2, rate = 32, 32, 2

    key = jax.random.PRNGKey(0)
    k = jax.random.split(key, 7)
    x = jax.random.normal(k[0], (N, Cin, H, W), jnp.float32)

    params = {
        "w1": jax.random.normal(k[1], (C1, Cin, 1, 1), jnp.float32) * 0.1,
        "b1": jax.random.normal(k[2], (C1,), jnp.float32) * 0.1,
        "gamma": 1.0 + 0.1 * jax.random.normal(k[3], (C1,), jnp.float32),
        "beta": 0.1 * jax.random.normal(k[4], (C1,), jnp.float32),
        "w3": jax.random.normal(k[5], (C2, C1, 3, 3), jnp.float32) * 0.05,
        "b3": jax.random.normal(k[6], (C2,), jnp.float32) * 0.1,
    }

    out = dense_block_forward(x, params, rate=rate)
    out = jax.block_until_ready(out)

    ref = dense_block_reference(x, params, rate=rate)
    assert out.shape == (N, C2, H, W), out.shape
    assert jnp.allclose(out, ref, atol=1e-3, rtol=1e-3), \
        float(jnp.max(jnp.abs(out - ref)))

    print("KERNEL_OK")
</pallas_src>

<mosaic_0001>
module attributes {stable_mosaic.version = 11 : i64} {
  func.func @_dense_block_kernel(%arg0: i32, %arg1: memref<1x256x16xf32, #tpu.memory_space<vmem>>, %arg2: memref<16x32xf32, #tpu.memory_space<vmem>>, %arg3: memref<1x32xf32, #tpu.memory_space<vmem>>, %arg4: memref<1x32xf32, #tpu.memory_space<vmem>>, %arg5: memref<1x32xf32, #tpu.memory_space<vmem>>, %arg6: memref<288x32xf32, #tpu.memory_space<vmem>>, %arg7: memref<1x32xf32, #tpu.memory_space<vmem>>, %arg8: memref<256x9xf32, #tpu.memory_space<vmem>>, %arg9: memref<1x256x32xf32, #tpu.memory_space<vmem>>) attributes {dimension_semantics = [#tpu.dimension_semantics<parallel>], iteration_bounds = array<i64: 2>, scalar_prefetch = 0 : i64, scratch_operands = 0 : i64, tpu.core_type = #tpu.core_type<tc>, window_params = [{transform_indices = @transform_0, window_bounds = array<i64: 1, 256, 16>}, {pipeline_mode = #tpu.pipeline_mode<synchronous>, transform_indices = @transform_1, window_bounds = array<i64: 16, 32>}, {pipeline_mode = #tpu.pipeline_mode<synchronous>, transform_indices = @transform_2, window_bounds = array<i64: 1, 32>}, {pipeline_mode = #tpu.pipeline_mode<synchronous>, transform_indices = @transform_3, window_bounds = array<i64: 1, 32>}, {pipeline_mode = #tpu.pipeline_mode<synchronous>, transform_indices = @transform_4, window_bounds = array<i64: 1, 32>}, {pipeline_mode = #tpu.pipeline_mode<synchronous>, transform_indices = @transform_5, window_bounds = array<i64: 288, 32>}, {pipeline_mode = #tpu.pipeline_mode<synchronous>, transform_indices = @transform_6, window_bounds = array<i64: 1, 32>}, {pipeline_mode = #tpu.pipeline_mode<synchronous>, transform_indices = @transform_7, window_bounds = array<i64: 256, 9>}, {transform_indices = @transform_8, window_bounds = array<i64: 1, 256, 32>}]} {
    %c0 = arith.constant 0 : index
    %c0_0 = arith.constant 0 : index
    %c0_1 = arith.constant 0 : index
    %0 = vector.load %arg1[%c0, %c0_0, %c0_1] : memref<1x256x16xf32, #tpu.memory_space<vmem>>, vector<1x256x16xf32>
    %1 = vector.shape_cast %0 : vector<1x256x16xf32> to vector<256x16xf32>
    %c0_2 = arith.constant 0 : index
    %c0_3 = arith.constant 0 : index
    %2 = vector.load %arg2[%c0_2, %c0_3] : memref<16x32xf32, #tpu.memory_space<vmem>>, vector<16x32xf32>
    %cst = arith.constant dense<0.000000e+00> : vector<256x32xf32>
    %3 = tpu.matmul %1, %2, %cst {dimension_numbers = #tpu.dot_dimension_numbers<[1], [0], [0], [1], [0, 0, 1, 1], [], []>} : vector<256x16xf32>, vector<16x32xf32>, vector<256x32xf32> -> vector<256x32xf32>
    %c0_4 = arith.constant 0 : index
    %c0_5 = arith.constant 0 : index
    %4 = vector.load %arg3[%c0_4, %c0_5] : memref<1x32xf32, #tpu.memory_space<vmem>>, vector<1x32xf32>
    %5 = vector.broadcast %4 : vector<1x32xf32> to vector<256x32xf32>
    %6 = arith.addf %3, %5 : vector<256x32xf32>
    %cst_6 = arith.constant dense<0.000000e+00> : vector<32xf32>
    %7 = vector.multi_reduction <add>, %6, %cst_6 [0] : vector<256x32xf32> to vector<32xf32>
    %8 = vector.shape_cast %7 : vector<32xf32> to vector<1x32xf32>
    %cst_7 = arith.constant 2.560000e+02 : f32
    %9 = vector.broadcast %cst_7 : f32 to vector<1x32xf32>
    %10 = arith.divf %8, %9 : vector<1x32xf32>
    %11 = vector.broadcast %10 : vector<1x32xf32> to vector<256x32xf32>
    %12 = arith.subf %6, %11 : vector<256x32xf32>
    %13 = arith.mulf %12, %12 : vector<256x32xf32>
    %cst_8 = arith.constant dense<0.000000e+00> : vector<32xf32>
    %14 = vector.multi_reduction <add>, %13, %cst_8 [0] : vector<256x32xf32> to vector<32xf32>
    %15 = vector.shape_cast %14 : vector<32xf32> to vector<1x32xf32>
    %cst_9 = arith.constant 2.560000e+02 : f32
    %16 = vector.broadcast %cst_9 : f32 to vector<1x32xf32>
    %17 = arith.divf %15, %16 : vector<1x32xf32>
    %cst_10 = arith.constant 9.99999974E-6 : f32
    %18 = vector.broadcast %cst_10 : f32 to vector<1x32xf32>
    %19 = arith.addf %17, %18 : vector<1x32xf32>
    %20 = math.rsqrt %19 : vector<1x32xf32>
    %c0_11 = arith.constant 0 : index
    %c0_12 = arith.constant 0 : index
    %21 = vector.load %arg4[%c0_11, %c0_12] : memref<1x32xf32, #tpu.memory_space<vmem>>, vector<1x32xf32>
    %22 = arith.mulf %20, %21 : vector<1x32xf32>
    %c0_13 = arith.constant 0 : index
    %c0_14 = arith.constant 0 : index
    %23 = vector.load %arg5[%c0_13, %c0_14] : memref<1x32xf32, #tpu.memory_space<vmem>>, vector<1x32xf32>
    %24 = arith.mulf %10, %22 : vector<1x32xf32>
    %25 = arith.subf %23, %24 : vector<1x32xf32>
    %26 = vector.broadcast %22 : vector<1x32xf32> to vector<256x32xf32>
    %27 = arith.mulf %6, %26 : vector<256x32xf32>
    %28 = vector.broadcast %25 : vector<1x32xf32> to vector<256x32xf32>
    %29 = arith.addf %27, %28 : vector<256x32xf32>
    %cst_15 = arith.constant 0.000000e+00 : f32
    %30 = vector.broadcast %cst_15 : f32 to vector<256x32xf32>
    %31 = arith.maximumf %29, %30 : vector<256x32xf32>
    %32 = vector.extract_strided_slice %31 {offsets = [222, 0], sizes = [34, 32], strides = [1, 1]} : vector<256x32xf32> to vector<34x32xf32>
    %33 = vector.extract_strided_slice %31 {offsets = [0, 0], sizes = [222, 32], strides = [1, 1]} : vector<256x32xf32> to vector<222x32xf32>
    %34 = tpu.concatenate %32, %33 in 0 : vector<34x32xf32>, vector<222x32xf32> -> vector<256x32xf32>
    %c0_16 = arith.constant 0 : index
    %c0_17 = arith.constant 0 : index
    %35 = vector.load %arg8[%c0_16, %c0_17] : memref<256x9xf32, #tpu.memory_space<vmem>>, vector<256x1xf32>
    %36 = vector.broadcast %35 : vector<256x1xf32> to vector<256x32xf32>
    %37 = arith.mulf %34, %36 : vector<256x32xf32>
    %c0_18 = arith.constant 0 : index
    %c0_19 = arith.constant 0 : index
    %38 = vector.load %arg6[%c0_18, %c0_19] : memref<288x32xf32, #tpu.memory_space<vmem>>, vector<32x32xf32>
    %cst_20 = arith.constant dense<0.000000e+00> : vector<256x32xf32>
    %39 = tpu.matmul %37, %38, %cst_20 {dimension_numbers = #tpu.dot_dimension_numbers<[1], [0], [0], [1], [0, 0, 1, 1], [], []>} : vector<256x32xf32>, vector<32x32xf32>, vector<256x32xf32> -> vector<256x32xf32>
    %40 = vector.extract_strided_slice %31 {offsets = [224, 0], sizes = [32, 32], strides = [1, 1]} : vector<256x32xf32> to vector<32x32xf32>
    %41 = vector.extract_strided_slice %31 {offsets = [0, 0], sizes = [224, 32], strides = [1, 1]} : vector<256x32xf32> to vector<224x32xf32>
    %42 = tpu.concatenate %40, %41 in 0 : vector<32x32xf32>, vector<224x32xf32> -> vector<256x32xf32>
    %c0_21 = arith.constant 0 : index
    %c1 = arith.constant 1 : index
    %43 = vector.load %arg8[%c0_21, %c1] : memref<256x9xf32, #tpu.memory_space<vmem>>, vector<256x1xf32>
    %44 = vector.broadcast %43 : vector<256x1xf32> to vector<256x32xf32>
    %45 = arith.mulf %42, %44 : vector<256x32xf32>
    %c32 = arith.constant 32 : index
    %c0_22 = arith.constant 0 : index
    %46 = vector.load %arg6[%c32, %c0_22] : memref<288x32xf32, #tpu.memory_space<vmem>>, vector<32x32xf32>
    %cst_23 = arith.constant dense<0.000000e+00> : vector<256x32xf32>
    %47 = tpu.matmul %45, %46, %cst_23 {dimension_numbers = #tpu.dot_dimension_numbers<[1], [0], [0], [1], [0, 0, 1, 1], [], []>} : vector<256x32xf32>, vector<32x32xf32>, vector<256x32xf32> -> vector<256x32xf32>
    %48 = arith.addf %39, %47 : vector<256x32xf32>
    %49 = vector.extract_strided_slice %31 {offsets = [226, 0], sizes = [30, 32], strides = [1, 1]} : vector<256x32xf32> to vector<30x32xf32>
    %50 = vector.extract_strided_slice %31 {offsets = [0, 0], sizes = [226, 32], strides = [1, 1]} : vector<256x32xf32> to vector<226x32xf32>
    %51 = tpu.concatenate %49, %50 in 0 : vector<30x32xf32>, vector<226x32xf32> -> vector<256x32xf32>
    %c0_24 = arith.constant 0 : index
    %c2 = arith.constant 2 : index
    %52 = vector.load %arg8[%c0_24, %c2] : memref<256x9xf32, #tpu.memory_space<vmem>>, vector<256x1xf32>
    %53 = vector.broadcast %52 : vector<256x1xf32> to vector<256x32xf32>
    %54 = arith.mulf %51, %53 : vector<256x32xf32>
    %c64 = arith.constant 64 : index
    %c0_25 = arith.constant 0 : index
    %55 = vector.load %arg6[%c64, %c0_25] : memref<288x32xf32, #tpu.memory_space<vmem>>, vector<32x32xf32>
    %cst_26 = arith.constant dense<0.000000e+00> : vector<256x32xf32>
    %56 = tpu.matmul %54, %55, %cst_26 {dimension_numbers = #tpu.dot_dimension_numbers<[1], [0], [0], [1], [0, 0, 1, 1], [], []>} : vector<256x32xf32>, vector<32x32xf32>, vector<256x32xf32> -> vector<256x32xf32>
    %57 = arith.addf %48, %56 : vector<256x32xf32>
    %58 = vector.extract_strided_slice %31 {offsets = [254, 0], sizes = [2, 32], strides = [1, 1]} : vector<256x32xf32> to vector<2x32xf32>
    %59 = vector.extract_strided_slice %31 {offsets = [0, 0], sizes = [254, 32], strides = [1, 1]} : vector<256x32xf32> to vector<254x32xf32>
    %60 = tpu.concatenate %58, %59 in 0 : vector<2x32xf32>, vector<254x32xf32> -> vector<256x32xf32>
    %c0_27 = arith.constant 0 : index
    %c3 = arith.constant 3 : index
    %61 = vector.load %arg8[%c0_27, %c3] : memref<256x9xf32, #tpu.memory_space<vmem>>, vector<256x1xf32>
    %62 = vector.broadcast %61 : vector<256x1xf32> to vector<256x32xf32>
    %63 = arith.mulf %60, %62 : vector<256x32xf32>
    %c96 = arith.constant 96 : index
    %c0_28 = arith.constant 0 : index
    %64 = vector.load %arg6[%c96, %c0_28] : memref<288x32xf32, #tpu.memory_space<vmem>>, vector<32x32xf32>
    %cst_29 = arith.constant dense<0.000000e+00> : vector<256x32xf32>
    %65 = tpu.matmul %63, %64, %cst_29 {dimension_numbers = #tpu.dot_dimension_numbers<[1], [0], [0], [1], [0, 0, 1, 1], [], []>} : vector<256x32xf32>, vector<32x32xf32>, vector<256x32xf32> -> vector<256x32xf32>
    %66 = arith.addf %57, %65 : vector<256x32xf32>
    %c128 = arith.constant 128 : index
    %c0_30 = arith.constant 0 : index
    %67 = vector.load %arg6[%c128, %c0_30] : memref<288x32xf32, #tpu.memory_space<vmem>>, vector<32x32xf32>
    %cst_31 = arith.constant dense<0.000000e+00> : vector<256x32xf32>
    %68 = tpu.matmul %31, %67, %cst_31 {dimension_numbers = #tpu.dot_dimension_numbers<[1], [0], [0], [1], [0, 0, 1, 1], [], []>} : vector<256x32xf32>, vector<32x32xf32>, vector<256x32xf32> -> vector<256x32xf32>
    %69 = arith.addf %66, %68 : vector<256x32xf32>
    %70 = vector.extract_strided_slice %31 {offsets = [2, 0], sizes = [254, 32], strides = [1, 1]} : vector<256x32xf32> to vector<254x32xf32>
    %71 = vector.extract_strided_slice %31 {offsets = [0, 0], sizes = [2, 32], strides = [1, 1]} : vector<256x32xf32> to vector<2x32xf32>
    %72 = tpu.concatenate %70, %71 in 0 : vector<254x32xf32>, vector<2x32xf32> -> vector<256x32xf32>
    %c0_32 = arith.constant 0 : index
    %c5 = arith.constant 5 : index
    %73 = vector.load %arg8[%c0_32, %c5] : memref<256x9xf32, #tpu.memory_space<vmem>>, vector<256x1xf32>
    %74 = vector.broadcast %73 : vector<256x1xf32> to vector<256x32xf32>
    %75 = arith.mulf %72, %74 : vector<256x32xf32>
    %c160 = arith.constant 160 : index
    %c0_33 = arith.constant 0 : index
    %76 = vector.load %arg6[%c160, %c0_33] : memref<288x32xf32, #tpu.memory_space<vmem>>, vector<32x32xf32>
    %cst_34 = arith.constant dense<0.000000e+00> : vector<256x32xf32>
    %77 = tpu.matmul %75, %76, %cst_34 {dimension_numbers = #tpu.dot_dimension_numbers<[1], [0], [0], [1], [0, 0, 1, 1], [], []>} : vector<256x32xf32>, vector<32x32xf32>, vector<256x32xf32> -> vector<256x32xf32>
    %78 = arith.addf %69, %77 : vector<256x32xf32>
    %79 = vector.extract_strided_slice %31 {offsets = [30, 0], sizes = [226, 32], strides = [1, 1]} : vector<256x32xf32> to vector<226x32xf32>
    %80 = vector.extract_strided_slice %31 {offsets = [0, 0], sizes = [30, 32], strides = [1, 1]} : vector<256x32xf32> to vector<30x32xf32>
    %81 = tpu.concatenate %79, %80 in 0 : vector<226x32xf32>, vector<30x32xf32> -> vector<256x32xf32>
    %c0_35 = arith.constant 0 : index
    %c6 = arith.constant 6 : index
    %82 = vector.load %arg8[%c0_35, %c6] : memref<256x9xf32, #tpu.memory_space<vmem>>, vector<256x1xf32>
    %83 = vector.broadcast %82 : vector<256x1xf32> to vector<256x32xf32>
    %84 = arith.mulf %81, %83 : vector<256x32xf32>
    %c192 = arith.constant 192 : index
    %c0_36 = arith.constant 0 : index
    %85 = vector.load %arg6[%c192, %c0_36] : memref<288x32xf32, #tpu.memory_space<vmem>>, vector<32x32xf32>
    %cst_37 = arith.constant dense<0.000000e+00> : vector<256x32xf32>
    %86 = tpu.matmul %84, %85, %cst_37 {dimension_numbers = #tpu.dot_dimension_numbers<[1], [0], [0], [1], [0, 0, 1, 1], [], []>} : vector<256x32xf32>, vector<32x32xf32>, vector<256x32xf32> -> vector<256x32xf32>
    %87 = arith.addf %78, %86 : vector<256x32xf32>
    %88 = vector.extract_strided_slice %31 {offsets = [32, 0], sizes = [224, 32], strides = [1, 1]} : vector<256x32xf32> to vector<224x32xf32>
    %89 = vector.extract_strided_slice %31 {offsets = [0, 0], sizes = [32, 32], strides = [1, 1]} : vector<256x32xf32> to vector<32x32xf32>
    %90 = tpu.concatenate %88, %89 in 0 : vector<224x32xf32>, vector<32x32xf32> -> vector<256x32xf32>
    %c0_38 = arith.constant 0 : index
    %c7 = arith.constant 7 : index
    %91 = vector.load %arg8[%c0_38, %c7] : memref<256x9xf32, #tpu.memory_space<vmem>>, vector<256x1xf32>
    %92 = vector.broadcast %91 : vector<256x1xf32> to vector<256x32xf32>
    %93 = arith.mulf %90, %92 : vector<256x32xf32>
    %c224 = arith.constant 224 : index
    %c0_39 = arith.constant 0 : index
    %94 = vector.load %arg6[%c224, %c0_39] : memref<288x32xf32, #tpu.memory_space<vmem>>, vector<32x32xf32>
    %cst_40 = arith.constant dense<0.000000e+00> : vector<256x32xf32>
    %95 = tpu.matmul %93, %94, %cst_40 {dimension_numbers = #tpu.dot_dimension_numbers<[1], [0], [0], [1], [0, 0, 1, 1], [], []>} : vector<256x32xf32>, vector<32x32xf32>, vector<256x32xf32> -> vector<256x32xf32>
    %96 = arith.addf %87, %95 : vector<256x32xf32>
    %97 = vector.extract_strided_slice %31 {offsets = [34, 0], sizes = [222, 32], strides = [1, 1]} : vector<256x32xf32> to vector<222x32xf32>
    %98 = vector.extract_strided_slice %31 {offsets = [0, 0], sizes = [34, 32], strides = [1, 1]} : vector<256x32xf32> to vector<34x32xf32>
    %99 = tpu.concatenate %97, %98 in 0 : vector<222x32xf32>, vector<34x32xf32> -> vector<256x32xf32>
    %c0_41 = arith.constant 0 : index
    %c8 = arith.constant 8 : index
    %100 = vector.load %arg8[%c0_41, %c8] : memref<256x9xf32, #tpu.memory_space<vmem>>, vector<256x1xf32>
    %101 = vector.broadcast %100 : vector<256x1xf32> to vector<256x32xf32>
    %102 = arith.mulf %99, %101 : vector<256x32xf32>
    %c256 = arith.constant 256 : index
    %c0_42 = arith.constant 0 : index
    %103 = vector.load %arg6[%c256, %c0_42] : memref<288x32xf32, #tpu.memory_space<vmem>>, vector<32x32xf32>
    %cst_43 = arith.constant dense<0.000000e+00> : vector<256x32xf32>
    %104 = tpu.matmul %102, %103, %cst_43 {dimension_numbers = #tpu.dot_dimension_numbers<[1], [0], [0], [1], [0, 0, 1, 1], [], []>} : vector<256x32xf32>, vector<32x32xf32>, vector<256x32xf32> -> vector<256x32xf32>
    %105 = arith.addf %96, %104 : vector<256x32xf32>
    %c0_44 = arith.constant 0 : index
    %c0_45 = arith.constant 0 : index
    %106 = vector.load %arg7[%c0_44, %c0_45] : memref<1x32xf32, #tpu.memory_space<vmem>>, vector<1x32xf32>
    %107 = vector.broadcast %106 : vector<1x32xf32> to vector<256x32xf32>
    %108 = arith.addf %105, %107 : vector<256x32xf32>
    %cst_46 = arith.constant 0.000000e+00 : f32
    %109 = vector.broadcast %cst_46 : f32 to vector<256x32xf32>
    %110 = arith.maximumf %108, %109 : vector<256x32xf32>
    %c0_47 = arith.constant 0 : index
    %c0_48 = arith.constant 0 : index
    %c0_49 = arith.constant 0 : index
    %111 = vector.load %arg9[%c0_47, %c0_48, %c0_49] : memref<1x256x32xf32, #tpu.memory_space<vmem>>, vector<1x256x32xf32>
    %112 = vector.shape_cast %111 : vector<1x256x32xf32> to vector<256x32xf32>
    %113 = vector.shape_cast %110 : vector<256x32xf32> to vector<1x256x32xf32>
    tpu.vector_store %arg9[%c0_47, %c0_48, %c0_49], %113 {strides = array<i32>} : memref<1x256x32xf32, #tpu.memory_space<vmem>>, vector<1x256x32xf32>,
    return
  }
  func.func @transform_0(%arg0: i32) -> (i32, i32, i32) {
    %c0_i32 = arith.constant 0 : i32
    %c0_i32_0 = arith.constant 0 : i32
    %c0_i32_1 = arith.constant 0 : i32
    return %arg0, %c0_i32, %c0_i32_0 : i32, i32, i32
  }
  func.func @transform_1(%arg0: i32) -> (i32, i32) {
    %c0_i32 = arith.constant 0 : i32
    %c0_i32_0 = arith.constant 0 : i32
    %c0_i32_1 = arith.constant 0 : i32
    return %c0_i32, %c0_i32_0 : i32, i32
  }
  func.func @transform_2(%arg0: i32) -> (i32, i32) {
    %c0_i32 = arith.constant 0 : i32
    %c0_i32_0 = arith.constant 0 : i32
    %c0_i32_1 = arith.constant 0 : i32
    return %c0_i32, %c0_i32_0 : i32, i32
  }
  func.func @transform_3(%arg0: i32) -> (i32, i32) {
    %c0_i32 = arith.constant 0 : i32
    %c0_i32_0 = arith.constant 0 : i32
    %c0_i32_1 = arith.constant 0 : i32
    return %c0_i32, %c0_i32_0 : i32, i32
  }
  func.func @transform_4(%arg0: i32) -> (i32, i32) {
    %c0_i32 = arith.constant 0 : i32
    %c0_i32_0 = arith.constant 0 : i32
    %c0_i32_1 = arith.constant 0 : i32
    return %c0_i32, %c0_i32_0 : i32, i32
  }
  func.func @transform_5(%arg0: i32) -> (i32, i32) {
    %c0_i32 = arith.constant 0 : i32
    %c0_i32_0 = arith.constant 0 : i32
    %c0_i32_1 = arith.constant 0 : i32
    return %c0_i32, %c0_i32_0 : i32, i32
  }
  func.func @transform_6(%arg0: i32) -> (i32, i32) {
    %c0_i32 = arith.constant 0 : i32
    %c0_i32_0 = arith.constant 0 : i32
    %c0_i32_1 = arith.constant 0 : i32
    return %c0_i32, %c0_i32_0 : i32, i32
  }
  func.func @transform_7(%arg0: i32) -> (i32, i32) {
    %c0_i32 = arith.constant 0 : i32
    %c0_i32_0 = arith.constant 0 : i32
    %c0_i32_1 = arith.constant 0 : i32
    return %c0_i32, %c0_i32_0 : i32, i32
  }
  func.func @transform_8(%arg0: i32) -> (i32, i32, i32) {
    %c0_i32 = arith.constant 0 : i32
    %c0_i32_0 = arith.constant 0 : i32
    %c0_i32_1 = arith.constant 0 : i32
    return %arg0, %c0_i32, %c0_i32_0 : i32, i32, i32
  }
}

</mosaic_0001>

<llo_original>
// kernel: tpu_custom_call.1
$region0: #{tpu_custom_call.1}
  #allocation0 [shape = 'u32[]', space=smem, size = 0x4, offset = 0x4, fixed_abs, tag = 'smem constant byte address 0x4 - core index']
  #allocation1 [shape = 'u32[72,128]{1,0:T(1,128)}', space=vmem, size = 0x9000, scoped, tag = 'internal scratch']
  %s0 = inlined_call_operand.vmem [shape: f32[2,256,16], index: 0, kind: input, shape index: {}]
  %s1 = inlined_call_operand.vmem [shape: f32[16,32], index: 1, kind: input, shape index: {}]
  %s2 = inlined_call_operand.vmem [shape: f32[1,32], index: 2, kind: input, shape index: {}]
  %s3 = inlined_call_operand.vmem [shape: f32[1,32], index: 3, kind: input, shape index: {}]
  %s4 = inlined_call_operand.vmem [shape: f32[1,32], index: 4, kind: input, shape index: {}]
  %s5 = inlined_call_operand.vmem [shape: f32[288,32], index: 5, kind: input, shape index: {}]
  %s6 = inlined_call_operand.vmem [shape: f32[1,32], index: 6, kind: input, shape index: {}]
  %s7 = inlined_call_operand.vmem [shape: f32[256,9], index: 7, kind: input, shape index: {}]
  %s8 = inlined_call_operand.vmem [shape: f32[2,256,32], index: 8, kind: output, shape index: {}]
  %s9 = sld [smem:[#allocation0]]
  $region65: #{tpu_custom_call.1} parent=0
    _
  %s11 = ssub.s32 1, %s9
  %s12 = scalar_select 0, %s11, %s9
  loop: start=0, step=1, limit=4
  $region2: #{tpu_custom_call.1} parent=0 // loop_pre_header
    _
  $region3: #{tpu_custom_call.1} parent=0 // loop_header
    %s14 = sphi 0, %s18
    %p15 = scmp.ge.s32.totalorder %s14, 4
    %s24 = sphi 0, %s26
    %s27 = sphi 0, %s24
    %s28 = sphi 0, %s27
    %s44 = sphi 0, %s28
    %s48 = sphi 0, %s48
    %s50 = sphi 0, %s48
    %s51 = sphi 0, %s50
    %s65 = sphi 0, %s51
    %s69 = sphi 0, %s69
    %s71 = sphi 0, %s69
    %s72 = sphi 0, %s71
    %s86 = sphi 0, %s72
    %s90 = sphi 0, %s90
    %s92 = sphi 0, %s90
    %s93 = sphi 0, %s92
    %s107 = sphi 0, %s93
    %s111 = sphi 0, %s111
    %s113 = sphi 0, %s111
    %s114 = sphi 0, %s113
    %s128 = sphi 0, %s114
    %s132 = sphi 0, %s132
    %s134 = sphi 0, %s132
    %s135 = sphi 0, %s134
    %s149 = sphi 0, %s135
    %s153 = sphi 0, %s153
    %s155 = sphi 0, %s153
    %s156 = sphi 0, %s155
    %s170 = sphi 0, %s156
    %s174 = sphi 0, %s174
    %s176 = sphi 0, %s174
    %s177 = sphi 0, %s176
    %s191 = sphi 0, %s177
    %s197 = sphi 0, %s199
    %s200 = sphi 0, %s197
    %s201 = sphi 0, %s200
    %s217 = sphi 0, %s201
  $region4: #{tpu_custom_call.1} parent=0 // loop_header_branch
    %17 = sbr.rel (%p15) target = $region8
  $region5: #{tpu_custom_call.1} parent=0 // loop_body
    %s19 = ssub.s32 %s14, 1
    %s20 = ssub.s32 %s14, 2
    %s21 = sadd.s32 %s14, 1
    %s22 = ssub.s32 %s14, %s21
    %p23 = scmp.eq.s32.totalorder %s22, 0
    %s25 = sadd.s32 %s24, 1
    %s26 = scalar_select %p23, %s24, %s25
    %p29 = pneg %p23
    %p30 = scmp.eq.s32.totalorder %s14, 1
    %p31 = por %p29, %p30
    %p32 = scmp.ne.s32.totalorder %s24, %s27
    %p33 = scmp.eq.s32.totalorder %s14, 0
    %p34 = por %p32, %p33
    %p35 = scmp.ne.s32.totalorder %s24, %s27
    %p36 = scmp.eq.s32.totalorder %s19, 1
    %p37 = por %p35, %p36
    %p38 = scmp.ne.s32.totalorder %s27, %s28
    %p39 = scmp.eq.s32.totalorder %s19, 0
    %p40 = por %p38, %p39
    %p41 = scmp.ne.s32.totalorder %s27, %s28
    %p42 = scmp.eq.s32.totalorder %s20, 1
    %p43 = por %p41, %p42
    %p45 = scmp.ne.s32.totalorder %s28, %s44
    %p46 = scmp.eq.s32.totalorder %s20, 0
    %p47 = por %p45, %p46
    %s49 = sadd.s32 %s48, 1
    %p52 = scmp.eq.s32.totalorder %s14, 1
    %p53 = scmp.ne.s32.totalorder %s48, %s50
    %p54 = scmp.eq.s32.totalorder %s14, 0
    %p55 = por %p53, %p54
    %p56 = scmp.ne.s32.totalorder %s48, %s50
    %p57 = scmp.eq.s32.totalorder %s19, 1
    %p58 = por %p56, %p57
    %p59 = scmp.ne.s32.totalorder %s50, %s51
    %p60 = scmp.eq.s32.totalorder %s19, 0
    %p61 = por %p59, %p60
    %p62 = scmp.ne.s32.totalorder %s50, %s51
    %p63 = scmp.eq.s32.totalorder %s20, 1
    %p64 = por %p62, %p63
    %p66 = scmp.ne.s32.totalorder %s51, %s65
    %p67 = scmp.eq.s32.totalorder %s20, 0
    %p68 = por %p66, %p67
    %s70 = sadd.s32 %s69, 1
    %p73 = scmp.eq.s32.totalorder %s14, 1
    %p74 = scmp.ne.s32.totalorder %s69, %s71
    %p75 = scmp.eq.s32.totalorder %s14, 0
    %p76 = por %p74, %p75
    %p77 = scmp.ne.s32.totalorder %s69, %s71
    %p78 = scmp.eq.s32.totalorder %s19, 1
    %p79 = por %p77, %p78
    %p80 = scmp.ne.s32.totalorder %s71, %s72
    %p81 = scmp.eq.s32.totalorder %s19, 0
    %p82 = por %p80, %p81
    %p83 = scmp.ne.s32.totalorder %s71, %s72
    %p84 = scmp.eq.s32.totalorder %s20, 1
    %p85 = por %p83, %p84
    %p87 = scmp.ne.s32.totalorder %s72, %s86
    %p88 = scmp.eq.s32.totalorder %s20, 0
    %p89 = por %p87, %p88
    %s91 = sadd.s32 %s90, 1
    %p94 = scmp.eq.s32.totalorder %s14, 1
    %p95 = scmp.ne.s32.totalorder %s90, %s92
    %p96 = scmp.eq.s32.totalorder %s14, 0
    %p97 = por %p95, %p96
    %p98 = scmp.ne.s32.totalorder %s90, %s92
    %p99 = scmp.eq.s32.totalorder %s19, 1
    %p100 = por %p98, %p99
    %p101 = scmp.ne.s32.totalorder %s92, %s93
    %p102 = scmp.eq.s32.totalorder %s19, 0
    %p103 = por %p101, %p102
    %p104 = scmp.ne.s32.totalorder %s92, %s93
    %p105 = scmp.eq.s32.totalorder %s20, 1
    %p106 = por %p104, %p105
    %p108 = scmp.ne.s32.totalorder %s93, %s107
    %p109 = scmp.eq.s32.totalorder %s20, 0
    %p110 = por %p108, %p109
    %s112 = sadd.s32 %s111, 1
    %p115 = scmp.eq.s32.totalorder %s14, 1
    %p116 = scmp.ne.s32.totalorder %s111, %s113
    %p117 = scmp.eq.s32.totalorder %s14, 0
    %p118 = por %p116, %p117
    %p119 = scmp.ne.s32.totalorder %s111, %s113
    %p120 = scmp.eq.s32.totalorder %s19, 1
    %p121 = por %p119, %p120
    %p122 = scmp.ne.s32.totalorder %s113, %s114
    %p123 = scmp.eq.s32.totalorder %s19, 0
    %p124 = por %p122, %p123
    %p125 = scmp.ne.s32.totalorder %s113, %s114
    %p126 = scmp.eq.s32.totalorder %s20, 1
    %p127 = por %p125, %p126
    %p129 = scmp.ne.s32.totalorder %s114, %s128
    %p130 = scmp.eq.s32.totalorder %s20, 0
    %p131 = por %p129, %p130
    %s133 = sadd.s32 %s132, 1
    %p136 = scmp.eq.s32.totalorder %s14, 1
    %p137 = scmp.ne.s32.totalorder %s132, %s134
    %p138 = scmp.eq.s32.totalorder %s14, 0
    %p139 = por %p137, %p138
    %p140 = scmp.ne.s32.totalorder %s132, %s134
    %p141 = scmp.eq.s32.totalorder %s19, 1
    %p142 = por %p140, %p141
    %p143 = scmp.ne.s32.totalorder %s134, %s135
    %p144 = scmp.eq.s32.totalorder %s19, 0
    %p145 = por %p143, %p144
    %p146 = scmp.ne.s32.totalorder %s134, %s135
    %p147 = scmp.eq.s32.totalorder %s20, 1
    %p148 = por %p146, %p147
    %p150 = scmp.ne.s32.totalorder %s135, %s149
    %p151 = scmp.eq.s32.totalorder %s20, 0
    %p152 = por %p150, %p151
    %s154 = sadd.s32 %s153, 1
    %p157 = scmp.eq.s32.totalorder %s14, 1
    %p158 = scmp.ne.s32.totalorder %s153, %s155
    %p159 = scmp.eq.s32.totalorder %s14, 0
    %p160 = por %p158, %p159
    %p161 = scmp.ne.s32.totalorder %s153, %s155
    %p162 = scmp.eq.s32.totalorder %s19, 1
    %p163 = por %p161, %p162
    %p164 = scmp.ne.s32.totalorder %s155, %s156
    %p165 = scmp.eq.s32.totalorder %s19, 0
    %p166 = por %p164, %p165
    %p167 = scmp.ne.s32.totalorder %s155, %s156
    %p168 = scmp.eq.s32.totalorder %s20, 1
    %p169 = por %p167, %p168
    %p171 = scmp.ne.s32.totalorder %s156, %s170
    %p172 = scmp.eq.s32.totalorder %s20, 0
    %p173 = por %p171, %p172
    %s175 = sadd.s32 %s174, 1
    %p178 = scmp.eq.s32.totalorder %s14, 1
    %p179 = scmp.ne.s32.totalorder %s174, %s176
    %p180 = scmp.eq.s32.totalorder %s14, 0
    %p181 = por %p179, %p180
    %p182 = scmp.ne.s32.totalorder %s174, %s176
    %p183 = scmp.eq.s32.totalorder %s19, 1
    %p184 = por %p182, %p183
    %p185 = scmp.ne.s32.totalorder %s176, %s177
    %p186 = scmp.eq.s32.totalorder %s19, 0
    %p187 = por %p185, %p186
    %p188 = scmp.ne.s32.totalorder %s176, %s177
    %p189 = scmp.eq.s32.totalorder %s20, 1
    %p190 = por %p188, %p189
    %p192 = scmp.ne.s32.totalorder %s177, %s191
    %p193 = scmp.eq.s32.totalorder %s20, 0
    %p194 = por %p192, %p193
    %s195 = ssub.s32 %s14, %s21
    %p196 = scmp.eq.s32.totalorder %s195, 0
    %s198 = sadd.s32 %s197, 1
    %s199 = scalar_select %p196, %s197, %s198
    %p202 = pneg %p196
    %p203 = scmp.eq.s32.totalorder %s14, 1
    %p204 = por %p202, %p203
    %p205 = scmp.ne.s32.totalorder %s197, %s200
    %p206 = scmp.eq.s32.totalorder %s14, 0
    %p207 = por %p205, %p206
    %p208 = scmp.ne.s32.totalorder %s197, %s200
    %p209 = scmp.eq.s32.totalorder %s19, 1
    %p210 = por %p208, %p209
    %p211 = scmp.ne.s32.totalorder %s200, %s201
    %p212 = scmp.eq.s32.totalorder %s19, 0
    %p213 = por %p211, %p212
    %p214 = scmp.ne.s32.totalorder %s200, %s201
    %p215 = scmp.eq.s32.totalorder %s20, 1
    %p216 = por %p214, %p215
    %p218 = scmp.ne.s32.totalorder %s201, %s217
    %p219 = scmp.eq.s32.totalorder %s20, 0
    %p220 = por %p218, %p219
    %p221 = scmp.le.s32.totalorder 1, %s14
    %p222 = scmp.lt.s32.totalorder %s14, 3
    %p223 = pnand %p221, %p222
    %p224 = pneg %p223
    // Predicated region
    $region9: #{tpu_custom_call.1} parent=5 // pred_check
      _
    $region10: #{tpu_custom_call.1} parent=5 // pred_check_branch
      %226 = sbr.rel (%p223) target = $region12
    $region11: #{tpu_custom_call.1} parent=5 // pred_region
      %s227 = ssub.s32 %s14, 1
      // Predicated region
      $region13: #{tpu_custom_call.1} parent=11 // pred_check
        %p228 = pneg %p61
      $region14: #{tpu_custom_call.1} parent=11 // pred_check_branch
        %230 = sbr.rel (%p228) target = $region16
      $region15: #{tpu_custom_call.1} parent=11 // pred_region
        _
      $region16: #{tpu_custom_call.1} parent=11 // pred_fallthru
        _
      // Predicated region
      $region17: #{tpu_custom_call.1} parent=11 // pred_check
        %p231 = pneg %p82
      $region18: #{tpu_custom_call.1} parent=11 // pred_check_branch
        %233 = sbr.rel (%p231) target = $region20
      $region19: #{tpu_custom_call.1} parent=11 // pred_region
        _
      $region20: #{tpu_custom_call.1} parent=11 // pred_fallthru
        _
      // Predicated region
      $region21: #{tpu_custom_call.1} parent=11 // pred_check
        %p234 = pneg %p103
      $region22: #{tpu_custom_call.1} parent=11 // pred_check_branch
        %236 = sbr.rel (%p234) target = $region24
      $region23: #{tpu_custom_call.1} parent=11 // pred_region
        _
      $region24: #{tpu_custom_call.1} parent=11 // pred_fallthru
        _
      // Predicated region
      $region25: #{tpu_custom_call.1} parent=11 // pred_check
        %p237 = pneg %p124
      $region26: #{tpu_custom_call.1} parent=11 // pred_check_branch
        %239 = sbr.rel (%p237) target = $region28
      $region27: #{tpu_custom_call.1} parent=11 // pred_region
        _
      $region28: #{tpu_custom_call.1} parent=11 // pred_fallthru
        _
      // Predicated region
      $region29: #{tpu_custom_call.1} parent=11 // pred_check
        %p240 = pneg %p145
      $region30: #{tpu_custom_call.1} parent=11 // pred_check_branch
        %242 = sbr.rel (%p240) target = $region32
      $region31: #{tpu_custom_call.1} parent=11 // pred_region
        _
      $region32: #{tpu_custom_call.1} parent=11 // pred_fallthru
        _
      // Predicated region
      $region33: #{tpu_custom_call.1} parent=11 // pred_check
        %p243 = pneg %p166
      $region34: #{tpu_custom_call.1} parent=11 // pred_check_branch
        %245 = sbr.rel (%p243) target = $region36
      $region35: #{tpu_custom_call.1} parent=11 // pred_region
        _
      $region36: #{tpu_custom_call.1} parent=11 // pred_fallthru
        _
      // Predicated region
      $region37: #{tpu_custom_call.1} parent=11 // pred_check
        %p246 = pneg %p187
      $region38: #{tpu_custom_call.1} parent=11 // pred_check_branch
        %248 = sbr.rel (%p246) target = $region40
      $region39: #{tpu_custom_call.1} parent=11 // pred_region
        _
      $region40: #{tpu_custom_call.1} parent=11 // pred_fallthru
        _
    $region12: #{tpu_custom_call.1} parent=5 // pred_fallthru
      _
    %p249 = scmp.lt.s32.totalorder %s14, 2
    // Predicated region
    $region41: #{tpu_custom_call.1} parent=5 // pred_check
      %p250 = pneg %p249
    $region42: #{tpu_custom_call.1} parent=5 // pred_check_branch
      %252 = sbr.rel (%p250) target = $region44
    $region43: #{tpu_custom_call.1} parent=5 // pred_region
      // Predicated region
      $region45: #{tpu_custom_call.1} parent=43 // pred_check
        %p253 = pneg %p34
      $region46: #{tpu_custom_call.1} parent=43 // pred_check_branch
        %255 = sbr.rel (%p253) target = $region48
      $region47: #{tpu_custom_call.1} parent=43 // pred_region
        %p256 = scmp.lt.s32.totalorder %s14, 1
        %s257 = scalar_select %p256, %s14, 1
        %s258 = smul.addr %s257, 32
        %s259 = smul.addr %s258, 8
        %s260 = scalar_lea.vmem %s0, %s259
      $region48: #{tpu_custom_call.1} parent=43 // pred_fallthru
        _
    $region44: #{tpu_custom_call.1} parent=5 // pred_fallthru
      _
    %p261 = scmp.le.s32.totalorder 1, %s14
    %p262 = scmp.lt.s32.totalorder %s14, 3
    %p263 = pnand %p261, %p262
    %p264 = pneg %p263
    // Predicated region
    $region49: #{tpu_custom_call.1} parent=5 // pred_check
      _
    $region50: #{tpu_custom_call.1} parent=5 // pred_check_branch
      %266 = sbr.rel (%p263) target = $region52
    $region51: #{tpu_custom_call.1} parent=5 // pred_region
      %s267 = ssub.s32 %s14, 1
      %p268 = scmp.lt.s32.totalorder %s19, 1
      %s269 = scalar_select %p268, %s19, 1
      %s270 = smul.addr %s269, 32
      %s271 = smul.addr %s270, 8
      %s272 = scalar_lea.vmem %s0, %s271
      %p273 = pneg %p40
      %p274 = pneg %p37
      %p275 = pneg %p61
      %p276 = pneg %p58
      %p277 = pneg %p82
      %p278 = pneg %p79
      %p279 = pneg %p103
      %p280 = pneg %p100
      %p281 = pneg %p124
      %p282 = pneg %p121
      %p283 = pneg %p145
      %p284 = pneg %p142
      %p285 = pneg %p166
      %p286 = pneg %p163
      %p287 = pneg %p187
      %p288 = pneg %p184
      %p289 = pneg %p213
      %p290 = pneg %p210
      %p291 = scmp.lt.s32.totalorder %s19, 1
      %s292 = scalar_select %p291, %s19, 1
      %s293 = smul.addr %s292, 32
      %s294 = smul.addr %s293, 8
      %s295 = scalar_lea.vmem %s8, %s294
      %p296 = scmp.lt.s32.totalorder %s19, 1
      %s297 = scalar_select %p296, %s19, 1
      %s298 = smul.addr %s297, 32
      %s299 = smul.addr %s298, 8
      %s300 = scalar_lea.vmem %s0, %s299
      %p301 = scmp.lt.s32.totalorder %s19, 1
      %s302 = scalar_select %p301, %s19, 1
      %s303 = smul.addr %s302, 32
      %s304 = smul.addr %s303, 8
      %s305 = scalar_lea.vmem %s8, %s304
      %v306 = vld [vmem:[%s300] sm:$0xff]
      %v307 = vld [vmem:[%s300 + $0x8] sm:$0xff]
      %v308 = vld [vmem:[%s300 + $0x10] sm:$0xff]
      %v309 = vld [vmem:[%s300 + $0x18] sm:$0xff]
      %v310 = vld [vmem:[%s300 + $0x20] sm:$0xff]
      %v311 = vld [vmem:[%s300 + $0x28] sm:$0xff]
      %v312 = vld [vmem:[%s300 + $0x30] sm:$0xff]
      %v313 = vld [vmem:[%s300 + $0x38] sm:$0xff]
      %v314 = vld [vmem:[%s300 + $0x40] sm:$0xff]
      %v315 = vld [vmem:[%s300 + $0x48] sm:$0xff]
      %v316 = vld [vmem:[%s300 + $0x50] sm:$0xff]
      %v317 = vld [vmem:[%s300 + $0x58] sm:$0xff]
      %v318 = vld [vmem:[%s300 + $0x60] sm:$0xff]
      %v319 = vld [vmem:[%s300 + $0x68] sm:$0xff]
      %v320 = vld [vmem:[%s300 + $0x70] sm:$0xff]
      %v321 = vld [vmem:[%s300 + $0x78] sm:$0xff]
      %v322 = vld [vmem:[%s300 + $0x80] sm:$0xff]
      %v323 = vld [vmem:[%s300 + $0x88] sm:$0xff]
      %v324 = vld [vmem:[%s300 + $0x90] sm:$0xff]
      %v325 = vld [vmem:[%s300 + $0x98] sm:$0xff]
      %v326 = vld [vmem:[%s300 + $0xa0] sm:$0xff]
      %v327 = vld [vmem:[%s300 + $0xa8] sm:$0xff]
      %v328 = vld [vmem:[%s300 + $0xb0] sm:$0xff]
      %v329 = vld [vmem:[%s300 + $0xb8] sm:$0xff]
      %v330 = vld [vmem:[%s300 + $0xc0] sm:$0xff]
      %v331 = vld [vmem:[%s300 + $0xc8] sm:$0xff]
      %v332 = vld [vmem:[%s300 + $0xd0] sm:$0xff]
      %v333 = vld [vmem:[%s300 + $0xd8] sm:$0xff]
      %v334 = vld [vmem:[%s300 + $0xe0] sm:$0xff]
      %v335 = vld [vmem:[%s300 + $0xe8] sm:$0xff]
      %v336 = vld [vmem:[%s300 + $0xf0] sm:$0xff]
      %v337 = vld [vmem:[%s300 + $0xf8] sm:$0xff]
      %v338 = vld [vmem:[%s1] sm:$0xff]
      %v339 = vld [vmem:[%s1 + $0x8] sm:$0xff]
      %v340 = vld [vmem:[%s2] sm:$0x1]
      %v342 = vperm.slane %v340, 0
      %vm344 = vcmask 130048
      %v346 = vsel %vm344, %v306, 0
      %v349 = vsel %vm344, %v307, 0
      %v352 = vsel %vm344, %v308, 0
      %v355 = vsel %vm344, %v309, 0
      %v358 = vsel %vm344, %v310, 0
      %v361 = vsel %vm344, %v311, 0
      %v364 = vsel %vm344, %v312, 0
      %v367 = vsel %vm344, %v313, 0
      %v370 = vsel %vm344, %v314, 0
      %v373 = vsel %vm344, %v315, 0
      %v376 = vsel %vm344, %v316, 0
      %v379 = vsel %vm344, %v317, 0
      %v382 = vsel %vm344, %v318, 0
      %v385 = vsel %vm344, %v319, 0
      %v388 = vsel %vm344, %v320, 0
      %v391 = vsel %vm344, %v321, 0
      %v394 = vsel %vm344, %v322, 0
      %v397 = vsel %vm344, %v323, 0
      %v400 = vsel %vm344, %v324, 0
      %v403 = vsel %vm344, %v325, 0
      %v406 = vsel %vm344, %v326, 0
      %v409 = vsel %vm344, %v327, 0
      %v412 = vsel %vm344, %v328, 0
      %v415 = vsel %vm344, %v329, 0
      %v418 = vsel %vm344, %v330, 0
      %v421 = vsel %vm344, %v331, 0
      %v424 = vsel %vm344, %v332, 0
      %v427 = vsel %vm344, %v333, 0
      %v430 = vsel %vm344, %v334, 0
      %v433 = vsel %vm344, %v335, 0
      %v436 = vsel %vm344, %v336, 0
      %v439 = vsel %vm344, %v337, 0
      %441 = vmatpush.msra.mxu0 0.0
      %442 = vmatpush.msra.mxu0 0.0
      %443 = vmatpush.msra.mxu0 0.0
      %444 = vmatpush.msra.mxu0 0.0
      %445 = vmatpush.msra.mxu0 0.0
      %446 = vmatpush.msra.mxu0 0.0
      %447 = vmatpush.msra.mxu0 0.0
      %448 = vmatpush.msra.mxu0 0.0
      %449 = vmatpush.msra.mxu0 0.0
      %450 = vmatpush.msra.mxu0 0.0
      %451 = vmatpush.msra.mxu0 0.0
      %452 = vmatpush.msra.mxu0 0.0
      %453 = vmatpush.msra.mxu0 0.0
      %454 = vmatpush.msra.mxu0 0.0
      %455 = vmatpush.msra.mxu0 %v339
      %456 = vmatpush.msra.mxu0 %v338
      %457 = vmatmul.f32.gmra.mxu0 %v346
      %v458 = vpop.f32.mrf.mxu0
      %v459 = vadd.f32 %v342, %v458
      %460 = vmatmul.f32.gmra.mxu0 %v349
      %v461 = vpop.f32.mrf.mxu0
      %v462 = vadd.f32 %v342, %v461
      %463 = vmatmul.f32.gmra.mxu0 %v352
      %v464 = vpop.f32.mrf.mxu0
      %v465 = vadd.f32 %v342, %v464
      %466 = vmatmul.f32.gmra.mxu0 %v355
      %v467 = vpop.f32.mrf.mxu0
      %v468 = vadd.f32 %v342, %v467
      %469 = vmatmul.f32.gmra.mxu0 %v358
      %v470 = vpop.f32.mrf.mxu0
      %v471 = vadd.f32 %v342, %v470
      %472 = vmatmul.f32.gmra.mxu0 %v361
      %v473 = vpop.f32.mrf.mxu0
      %v474 = vadd.f32 %v342, %v473
      %475 = vmatmul.f32.gmra.mxu0 %v364
      %v476 = vpop.f32.mrf.mxu0
      %v477 = vadd.f32 %v342, %v476
      %478 = vmatmul.f32.gmra.mxu0 %v367
      %v479 = vpop.f32.mrf.mxu0
      %v480 = vadd.f32 %v342, %v479
      %481 = vmatmul.f32.gmra.mxu0 %v370
      %v482 = vpop.f32.mrf.mxu0
      %v483 = vadd.f32 %v342, %v482
      %484 = vmatmul.f32.gmra.mxu0 %v373
      %v485 = vpop.f32.mrf.mxu0
      %v486 = vadd.f32 %v342, %v485
      %487 = vmatmul.f32.gmra.mxu0 %v376
      %v488 = vpop.f32.mrf.mxu0
      %v489 = vadd.f32 %v342, %v488
      %490 = vmatmul.f32.gmra.mxu0 %v379
      %v491 = vpop.f32.mrf.mxu0
      %v492 = vadd.f32 %v342, %v491
      %493 = vmatmul.f32.gmra.mxu0 %v382
      %v494 = vpop.f32.mrf.mxu0
      %v495 = vadd.f32 %v342, %v494
      %496 = vmatmul.f32.gmra.mxu0 %v385
      %v497 = vpop.f32.mrf.mxu0
      %v498 = vadd.f32 %v342, %v497
      %499 = vmatmul.f32.gmra.mxu0 %v388
      %v500 = vpop.f32.mrf.mxu0
      %v501 = vadd.f32 %v342, %v500
      %502 = vmatmul.f32.gmra.mxu0 %v391
      %v503 = vpop.f32.mrf.mxu0
      %v504 = vadd.f32 %v342, %v503
      %505 = vmatmul.f32.gmra.mxu0 %v394
      %v506 = vpop.f32.mrf.mxu0
      %v507 = vadd.f32 %v342, %v506
      %508 = vmatmul.f32.gmra.mxu0 %v397
      %v509 = vpop.f32.mrf.mxu0
      %v510 = vadd.f32 %v342, %v509
      %511 = vmatmul.f32.gmra.mxu0 %v400
      %v512 = vpop.f32.mrf.mxu0
      %v513 = vadd.f32 %v342, %v512
      %514 = vmatmul.f32.gmra.mxu0 %v403
      %v515 = vpop.f32.mrf.mxu0
      %v516 = vadd.f32 %v342, %v515
      %517 = vmatmul.f32.gmra.mxu0 %v406
      %v518 = vpop.f32.mrf.mxu0
      %v519 = vadd.f32 %v342, %v518
      %520 = vmatmul.f32.gmra.mxu0 %v409
      %v521 = vpop.f32.mrf.mxu0
      %v522 = vadd.f32 %v342, %v521
      %523 = vmatmul.f32.gmra.mxu0 %v412
      %v524 = vpop.f32.mrf.mxu0
      %v525 = vadd.f32 %v342, %v524
      %526 = vmatmul.f32.gmra.mxu0 %v415
      %v527 = vpop.f32.mrf.mxu0
      %v528 = vadd.f32 %v342, %v527
      %529 = vmatmul.f32.gmra.mxu0 %v418
      %v530 = vpop.f32.mrf.mxu0
      %v531 = vadd.f32 %v342, %v530
      %532 = vmatmul.f32.gmra.mxu0 %v421
      %v533 = vpop.f32.mrf.mxu0
      %v534 = vadd.f32 %v342, %v533
      %535 = vmatmul.f32.gmra.mxu0 %v424
      %v536 = vpop.f32.mrf.mxu0
      %v537 = vadd.f32 %v342, %v536
      %538 = vmatmul.f32.gmra.mxu0 %v427
      %v539 = vpop.f32.mrf.mxu0
      %v540 = vadd.f32 %v342, %v539
      %541 = vmatmul.f32.gmra.mxu0 %v430
      %v542 = vpop.f32.mrf.mxu0
      %v543 = vadd.f32 %v342, %v542
      %544 = vmatmul.f32.gmra.mxu0 %v433
      %v545 = vpop.f32.mrf.mxu0
      %v546 = vadd.f32 %v342, %v545
      %547 = vmatmul.f32.gmra.mxu0 %v436
      %v548 = vpop.f32.mrf.mxu0
      %v549 = vadd.f32 %v342, %v548
      %550 = vmatmul.f32.gmra.mxu0 %v439
      %v551 = vpop.f32.mrf.mxu0
      %v552 = vadd.f32 %v342, %v551
      %553 = vdwg.mxu0
      %vm554 = vcmask 261120
      %v555 = vsel %vm554, %v459, 0.0
      %v556 = vsel %vm554, %v462, 0.0
      %v557 = vadd.f32 %v555, %v556
      %v558 = vsel %vm554, %v465, 0.0
      %v559 = vadd.f32 %v557, %v558
      %v560 = vsel %vm554, %v468, 0.0
      %v561 = vadd.f32 %v559, %v560
      %v562 = vsel %vm554, %v471, 0.0
      %v563 = vadd.f32 %v561, %v562
      %v564 = vsel %vm554, %v474, 0.0
      %v565 = vadd.f32 %v563, %v564
      %v566 = vsel %vm554, %v477, 0.0
      %v567 = vadd.f32 %v565, %v566
      %v568 = vsel %vm554, %v480, 0.0
      %v569 = vadd.f32 %v567, %v568
      %v570 = vsel %vm554, %v483, 0.0
      %v571 = vadd.f32 %v569, %v570
      %v572 = vsel %vm554, %v486, 0.0
      %v573 = vadd.f32 %v571, %v572
      %v574 = vsel %vm554, %v489, 0.0
      %v575 = vadd.f32 %v573, %v574
      %v576 = vsel %vm554, %v492, 0.0
      %v577 = vadd.f32 %v575, %v576
      %v578 = vsel %vm554, %v495, 0.0
      %v579 = vadd.f32 %v577, %v578
      %v580 = vsel %vm554, %v498, 0.0
      %v581 = vadd.f32 %v579, %v580
      %v582 = vsel %vm554, %v501, 0.0
      %v583 = vadd.f32 %v581, %v582
      %v584 = vsel %vm554, %v504, 0.0
      %v585 = vadd.f32 %v583, %v584
      %v586 = vsel %vm554, %v507, 0.0
      %v587 = vadd.f32 %v585, %v586
      %v588 = vsel %vm554, %v510, 0.0
      %v589 = vadd.f32 %v587, %v588
      %v590 = vsel %vm554, %v513, 0.0
      %v591 = vadd.f32 %v589, %v590
      %v592 = vsel %vm554, %v516, 0.0
      %v593 = vadd.f32 %v591, %v592
      %v594 = vsel %vm554, %v519, 0.0
      %v595 = vadd.f32 %v593, %v594
      %v596 = vsel %vm554, %v522, 0.0
      %v597 = vadd.f32 %v595, %v596
      %v598 = vsel %vm554, %v525, 0.0
      %v599 = vadd.f32 %v597, %v598
      %v600 = vsel %vm554, %v528, 0.0
      %v601 = vadd.f32 %v599, %v600
      %v602 = vsel %vm554, %v531, 0.0
      %v603 = vadd.f32 %v601, %v602
      %v604 = vsel %vm554, %v534, 0.0
      %v605 = vadd.f32 %v603, %v604
      %v606 = vsel %vm554, %v537, 0.0
      %v607 = vadd.f32 %v605, %v606
      %v608 = vsel %vm554, %v540, 0.0
      %v609 = vadd.f32 %v607, %v608
      %v610 = vsel %vm554, %v543, 0.0
      %v611 = vadd.f32 %v609, %v610
      %v612 = vsel %vm554, %v546, 0.0
      %v613 = vadd.f32 %v611, %v612
      %v614 = vsel %vm554, %v549, 0.0
      %v615 = vadd.f32 %v613, %v614
      %v616 = vsel %vm554, %v552, 0.0
      %v617 = vadd.f32 %v615, %v616
      %v618 = vrot.slane %v617, 4
      %v619 = vadd.f32 %v617, %v618
      %v620 = vrot.slane %v619, 2
      %v621 = vadd.f32 %v619, %v620
      %v622 = vrot.slane %v621, 1
      %v623 = vadd.f32 %v621, %v622
      %v624 = vrcp.pop 256.0
      %v625 = vmul.f32 256.0, %v624
      %v626 = vsub.f32 1.0, %v625
      %v627 = vmul.f32 %v624, %v626
      %v628 = vadd.f32 %v624, %v627
      %vm629 = vweird.f32 %v624
      %v630 = vsel %vm629, %v624, %v628
      %v631 = vmul.f32 %v623, %v630
      %v632 = vsub.f32 %v459, %v631
      %v633 = vsub.f32 %v462, %v631
      %v634 = vsub.f32 %v465, %v631
      %v635 = vsub.f32 %v468, %v631
      %v636 = vsub.f32 %v471, %v631
      %v637 = vsub.f32 %v474, %v631
      %v638 = vsub.f32 %v477, %v631
      %v639 = vsub.f32 %v480, %v631
      %v640 = vsub.f32 %v483, %v631
      %v641 = vsub.f32 %v486, %v631
      %v642 = vsub.f32 %v489, %v631
      %v643 = vsub.f32 %v492, %v631
      %v644 = vsub.f32 %v495, %v631
      %v645 = vsub.f32 %v498, %v631
      %v646 = vsub.f32 %v501, %v631
      %v647 = vsub.f32 %v504, %v631
      %v648 = vsub.f32 %v507, %v631
      %v649 = vsub.f32 %v510, %v631
      %v650 = vsub.f32 %v513, %v631
      %v651 = vsub.f32 %v516, %v631
      %v652 = vsub.f32 %v519, %v631
      %v653 = vsub.f32 %v522, %v631
      %v654 = vsub.f32 %v525, %v631
      %v655 = vsub.f32 %v528, %v631
      %v656 = vsub.f32 %v531, %v631
      %v657 = vsub.f32 %v534, %v631
      %v658 = vsub.f32 %v537, %v631
      %v659 = vsub.f32 %v540, %v631
      %v660 = vsub.f32 %v543, %v631
      %v661 = vsub.f32 %v546, %v631
      %v662 = vsub.f32 %v549, %v631
      %v663 = vsub.f32 %v552, %v631
      %v664 = vmul.f32 %v632, %v632
      %v665 = vmul.f32 %v633, %v633
      %v666 = vmul.f32 %v634, %v634
      %v667 = vmul.f32 %v635, %v635
      %v668 = vmul.f32 %v636, %v636
      %v669 = vmul.f32 %v637, %v637
      %v670 = vmul.f32 %v638, %v638
      %v671 = vmul.f32 %v639, %v639
      %v672 = vmul.f32 %v640, %v640
      %v673 = vmul.f32 %v641, %v641
      %v674 = vmul.f32 %v642, %v642
      %v675 = vmul.f32 %v643, %v643
      %v676 = vmul.f32 %v644, %v644
      %v677 = vmul.f32 %v645, %v645
      %v678 = vmul.f32 %v646, %v646
      %v679 = vmul.f32 %v647, %v647
      %v680 = vmul.f32 %v648, %v648
      %v681 = vmul.f32 %v649, %v649
      %v682 = vmul.f32 %v650, %v650
      %v683 = vmul.f32 %v651, %v651
      %v684 = vmul.f32 %v652, %v652
      %v685 = vmul.f32 %v653, %v653
      %v686 = vmul.f32 %v654, %v654
      %v687 = vmul.f32 %v655, %v655
      %v688 = vmul.f32 %v656, %v656
      %v689 = vmul.f32 %v657, %v657
      %v690 = vmul.f32 %v658, %v658
      %v691 = vmul.f32 %v659, %v659
      %v692 = vmul.f32 %v660, %v660
      %v693 = vmul.f32 %v661, %v661
      %v694 = vmul.f32 %v662, %v662
      %v695 = vmul.f32 %v663, %v663
      %v696 = vsel %vm554, %v664, 0.0
      %v697 = vsel %vm554, %v665, 0.0
      %v698 = vadd.f32 %v696, %v697
      %v699 = vsel %vm554, %v666, 0.0
      %v700 = vadd.f32 %v698, %v699
      %v701 = vsel %vm554, %v667, 0.0
      %v702 = vadd.f32 %v700, %v701
      %v703 = vsel %vm554, %v668, 0.0
      %v704 = vadd.f32 %v702, %v703
      %v705 = vsel %vm554, %v669, 0.0
      %v706 = vadd.f32 %v704, %v705
      %v707 = vsel %vm554, %v670, 0.0
      %v708 = vadd.f32 %v706, %v707
      %v709 = vsel %vm554, %v671, 0.0
      %v710 = vadd.f32 %v708, %v709
      %v711 = vsel %vm554, %v672, 0.0
      %v712 = vadd.f32 %v710, %v711
      %v713 = vsel %vm554, %v673, 0.0
      %v714 = vadd.f32 %v712, %v713
      %v715 = vsel %vm554, %v674, 0.0
      %v716 = vadd.f32 %v714, %v715
      %v717 = vsel %vm554, %v675, 0.0
      %v718 = vadd.f32 %v716, %v717
      %v719 = vsel %vm554, %v676, 0.0
      %v720 = vadd.f32 %v718, %v719
      %v721 = vsel %vm554, %v677, 0.0
      %v722 = vadd.f32 %v720, %v721
      %v723 = vsel %vm554, %v678, 0.0
      %v724 = vadd.f32 %v722, %v723
      %v725 = vsel %vm554, %v679, 0.0
      %v726 = vadd.f32 %v724, %v725
      %v727 = vsel %vm554, %v680, 0.0
      %v728 = vadd.f32 %v726, %v727
      %v729 = vsel %vm554, %v681, 0.0
      %v730 = vadd.f32 %v728, %v729
      %v731 = vsel %vm554, %v682, 0.0
      %v732 = vadd.f32 %v730, %v731
      %v733 = vsel %vm554, %v683, 0.0
      %v734 = vadd.f32 %v732, %v733
      %v735 = vsel %vm554, %v684, 0.0
      %v736 = vadd.f32 %v734, %v735
      %v737 = vsel %vm554, %v685, 0.0
      %v738 = vadd.f32 %v736, %v737
      %v739 = vsel %vm554, %v686, 0.0
      %v740 = vadd.f32 %v738, %v739
      %v741 = vsel %vm554, %v687, 0.0
      %v742 = vadd.f32 %v740, %v741
      %v743 = vsel %vm554, %v688, 0.0
      %v744 = vadd.f32 %v742, %v743
      %v745 = vsel %vm554, %v689, 0.0
      %v746 = vadd.f32 %v744, %v745
      %v747 = vsel %vm554, %v690, 0.0
      %v748 = vadd.f32 %v746, %v747
      %v749 = vsel %vm554, %v691, 0.0
      %v750 = vadd.f32 %v748, %v749
      %v751 = vsel %vm554, %v692, 0.0
      %v752 = vadd.f32 %v750, %v751
      %v753 = vsel %vm554, %v693, 0.0
      %v754 = vadd.f32 %v752, %v753
      %v755 = vsel %vm554, %v694, 0.0
      %v756 = vadd.f32 %v754, %v755
      %v757 = vsel %vm554, %v695, 0.0
      %v758 = vadd.f32 %v756, %v757
      %v759 = vrot.slane %v758, 4
      %v760 = vadd.f32 %v758, %v759
      %v761 = vrot.slane %v760, 2
      %v762 = vadd.f32 %v760, %v761
      %v763 = vrot.slane %v762, 1
      %v764 = vadd.f32 %v762, %v763
      %v765 = vmul.f32 %v764, %v630
      %v766 = vadd.f32 %v765, 1e-05
      %v767 = vrsqrt.pop %v766
      %v768 = vmul.f32 %v767, %v766
      %v769 = vmul.f32 %v768, %v767
      %v770 = vmul.f32 0.5, %v769
      %v771 = vsub.f32 1.5, %v770
      %v772 = vmul.f32 %v767, %v771
      %vm773 = vweird.f32 %v766
      %vm774 = vweird.f32 %v767
      %vm775 = vmor %vm773, %vm774
      %v776 = vsel %vm775, %v767, %v772
      %v777 = vld [vmem:[%s3] sm:$0x1]
      %v778 = vmul.f32 %v776, %v777
      %v779 = vld [vmem:[%s4] sm:$0x1]
      %v780 = vmul.f32 %v631, %v778
      %v781 = vsub.f32 %v779, %v780
      %v782 = vperm.slane %v778, 0
      %v783 = vmul.f32 %v459, %v782
      %v784 = vmul.f32 %v462, %v782
      %v785 = vmul.f32 %v465, %v782
      %v786 = vmul.f32 %v468, %v782
      %v787 = vmul.f32 %v471, %v782
      %v788 = vmul.f32 %v474, %v782
      %v789 = vmul.f32 %v477, %v782
      %v790 = vmul.f32 %v480, %v782
      %v791 = vmul.f32 %v483, %v782
      %v792 = vmul.f32 %v486, %v782
      %v793 = vmul.f32 %v489, %v782
      %v794 = vmul.f32 %v492, %v782
      %v795 = vmul.f32 %v495, %v782
      %v796 = vmul.f32 %v498, %v782
      %v797 = vmul.f32 %v501, %v782
      %v798 = vmul.f32 %v504, %v782
      %v799 = vmul.f32 %v507, %v782
      %v800 = vmul.f32 %v510, %v782
      %v801 = vmul.f32 %v513, %v782
      %v802 = vmul.f32 %v516, %v782
      %v803 = vmul.f32 %v519, %v782
      %v804 = vmul.f32 %v522, %v782
      %v805 = vmul.f32 %v525, %v782
      %v806 = vmul.f32 %v528, %v782
      %v807 = vmul.f32 %v531, %v782
      %v808 = vmul.f32 %v534, %v782
      %v809 = vmul.f32 %v537, %v782
      %v810 = vmul.f32 %v540, %v782
      %v811 = vmul.f32 %v543, %v782
      %v812 = vmul.f32 %v546, %v782
      %v813 = vmul.f32 %v549, %v782
      %v814 = vmul.f32 %v552, %v782
      %v816 = vperm.slane %v781, 0
      %v818 = vadd.f32 %v783, %v816
      %v819 = vadd.f32 %v784, %v816
      %v820 = vadd.f32 %v785, %v816
      %v821 = vadd.f32 %v786, %v816
      %v822 = vadd.f32 %v787, %v816
      %v823 = vadd.f32 %v788, %v816
      %v824 = vadd.f32 %v789, %v816
      %v825 = vadd.f32 %v790, %v816
      %v826 = vadd.f32 %v791, %v816
      %v827 = vadd.f32 %v792, %v816
      %v828 = vadd.f32 %v793, %v816
      %v829 = vadd.f32 %v794, %v816
      %v830 = vadd.f32 %v795, %v816
      %v831 = vadd.f32 %v796, %v816
      %v832 = vadd.f32 %v797, %v816
      %v833 = vadd.f32 %v798, %v816
      %v834 = vadd.f32 %v799, %v816
      %v835 = vadd.f32 %v800, %v816
      %v836 = vadd.f32 %v801, %v816
      %v837 = vadd.f32 %v802, %v816
      %v838 = vadd.f32 %v803, %v816
      %v839 = vadd.f32 %v804, %v816
      %v840 = vadd.f32 %v805, %v816
      %v841 = vadd.f32 %v806, %v816
      %v842 = vadd.f32 %v807, %v816
      %v843 = vadd.f32 %v808, %v816
      %v844 = vadd.f32 %v809, %v816
      %v845 = vadd.f32 %v810, %v816
      %v846 = vadd.f32 %v811, %v816
      %v847 = vadd.f32 %v812, %v816
      %v848 = vadd.f32 %v813, %v816
      %v849 = vadd.f32 %v814, %v816
      %v850 = vmax.f32 %v818, 0.0
      %v851 = vmax.f32 %v819, 0.0
      %v852 = vmax.f32 %v820, 0.0
      %v853 = vmax.f32 %v821, 0.0
      %v854 = vmax.f32 %v822, 0.0
      %v855 = vmax.f32 %v823, 0.0
      %v856 = vmax.f32 %v824, 0.0
      %v857 = vmax.f32 %v825, 0.0
      %v858 = vmax.f32 %v826, 0.0
      %v859 = vmax.f32 %v827, 0.0
      %v860 = vmax.f32 %v828, 0.0
      %v861 = vmax.f32 %v829, 0.0
      %v862 = vmax.f32 %v830, 0.0
      %v863 = vmax.f32 %v831, 0.0
      %v864 = vmax.f32 %v832, 0.0
      %v865 = vmax.f32 %v833, 0.0
      %v866 = vmax.f32 %v834, 0.0
      %v867 = vmax.f32 %v835, 0.0
      %v868 = vmax.f32 %v836, 0.0
      %v869 = vmax.f32 %v837, 0.0
      %v870 = vmax.f32 %v838, 0.0
      %v871 = vmax.f32 %v839, 0.0
      %v872 = vmax.f32 %v840, 0.0
      %v873 = vmax.f32 %v841, 0.0
      %v874 = vmax.f32 %v842, 0.0
      %v875 = vmax.f32 %v843, 0.0
      %v876 = vmax.f32 %v844, 0.0
      %v877 = vmax.f32 %v845, 0.0
      %v878 = vmax.f32 %v846, 0.0
      %v879 = vmax.f32 %v847, 0.0
      %v880 = vmax.f32 %v848, 0.0
      %v881 = vmax.f32 %v849, 0.0
      %vm887 = vcmask 1041408
      %v888 = vrot.slane %v877, 6
      %v889 = vrot.slane %v878, 6
      %v890 = vsel %vm887, %v888, %v889
      %v891 = vrot.slane %v879, 6
      %v892 = vsel %vm887, %v889, %v891
      %v893 = vrot.slane %v880, 6
      %v894 = vsel %vm887, %v891, %v893
      %v895 = vrot.slane %v881, 6
      %v896 = vsel %vm887, %v893, %v895
      %v929 = vrot.slane %v850, 6
      %v930 = vrot.slane %v851, 6
      %v931 = vsel %vm887, %v929, %v930
      %v932 = vrot.slane %v852, 6
      %v933 = vsel %vm887, %v930, %v932
      %v934 = vrot.slane %v853, 6
      %v935 = vsel %vm887, %v932, %v934
      %v936 = vrot.slane %v854, 6
      %v937 = vsel %vm887, %v934, %v936
      %v938 = vrot.slane %v855, 6
      %v939 = vsel %vm887, %v936, %v938
      %v940 = vrot.slane %v856, 6
      %v941 = vsel %vm887, %v938, %v940
      %v942 = vrot.slane %v857, 6
      %v943 = vsel %vm887, %v940, %v942
      %v944 = vrot.slane %v858, 6
      %v945 = vsel %vm887, %v942, %v944
      %v946 = vrot.slane %v859, 6
      %v947 = vsel %vm887, %v944, %v946
      %v948 = vrot.slane %v860, 6
      %v949 = vsel %vm887, %v946, %v948
      %v950 = vrot.slane %v861, 6
      %v951 = vsel %vm887, %v948, %v950
      %v952 = vrot.slane %v862, 6
      %v953 = vsel %vm887, %v950, %v952
      %v954 = vrot.slane %v863, 6
      %v955 = vsel %vm887, %v952, %v954
      %v956 = vrot.slane %v864, 6
      %v957 = vsel %vm887, %v954, %v956
      %v958 = vrot.slane %v865, 6
      %v959 = vsel %vm887, %v956, %v958
      %v960 = vrot.slane %v866, 6
      %v961 = vsel %vm887, %v958, %v960
      %v962 = vrot.slane %v867, 6
      %v963 = vsel %vm887, %v960, %v962
      %v964 = vrot.slane %v868, 6
      %v965 = vsel %vm887, %v962, %v964
      %v966 = vrot.slane %v869, 6
      %v967 = vsel %vm887, %v964, %v966
      %v968 = vrot.slane %v870, 6
      %v969 = vsel %vm887, %v966, %v968
      %v970 = vrot.slane %v871, 6
      %v971 = vsel %vm887, %v968, %v970
      %v972 = vrot.slane %v872, 6
      %v973 = vsel %vm887, %v970, %v972
      %v974 = vrot.slane %v873, 6
      %v975 = vsel %vm887, %v972, %v974
      %v976 = vrot.slane %v874, 6
      %v977 = vsel %vm887, %v974, %v976
      %v978 = vrot.slane %v875, 6
      %v979 = vsel %vm887, %v976, %v978
      %v980 = vrot.slane %v876, 6
      %v981 = vsel %vm887, %v978, %v980
      %v982 = vsel %vm887, %v980, %v888
      %v1011 = vsel %vm887, %v895, %v929
      %v1012 = vld [vmem:[%s7] sm:$0xff]
      %v1013 = vld [vmem:[%s7 + $0x8] sm:$0xff]
      %v1014 = vld [vmem:[%s7 + $0x10] sm:$0xff]
      %v1015 = vld [vmem:[%s7 + $0x18] sm:$0xff]
      %v1016 = vld [vmem:[%s7 + $0x20] sm:$0xff]
      %v1017 = vld [vmem:[%s7 + $0x28] sm:$0xff]
      %v1018 = vld [vmem:[%s7 + $0x30] sm:$0xff]
      %v1019 = vld [vmem:[%s7 + $0x38] sm:$0xff]
      %v1020 = vld [vmem:[%s7 + $0x40] sm:$0xff]
      %v1021 = vld [vmem:[%s7 + $0x48] sm:$0xff]
      %v1022 = vld [vmem:[%s7 + $0x50] sm:$0xff]
      %v1023 = vld [vmem:[%s7 + $0x58] sm:$0xff]
      %v1024 = vld [vmem:[%s7 + $0x60] sm:$0xff]
      %v1025 = vld [vmem:[%s7 + $0x68] sm:$0xff]
      %v1026 = vld [vmem:[%s7 + $0x70] sm:$0xff]
      %v1027 = vld [vmem:[%s7 + $0x78] sm:$0xff]
      %v1028 = vld [vmem:[%s7 + $0x80] sm:$0xff]
      %v1029 = vld [vmem:[%s7 + $0x88] sm:$0xff]
      %v1030 = vld [vmem:[%s7 + $0x90] sm:$0xff]
      %v1031 = vld [vmem:[%s7 + $0x98] sm:$0xff]
      %v1032 = vld [vmem:[%s7 + $0xa0] sm:$0xff]
      %v1033 = vld [vmem:[%s7 + $0xa8] sm:$0xff]
      %v1034 = vld [vmem:[%s7 + $0xb0] sm:$0xff]
      %v1035 = vld [vmem:[%s7 + $0xb8] sm:$0xff]
      %v1036 = vld [vmem:[%s7 + $0xc0] sm:$0xff]
      %v1037 = vld [vmem:[%s7 + $0xc8] sm:$0xff]
      %v1038 = vld [vmem:[%s7 + $0xd0] sm:$0xff]
      %v1039 = vld [vmem:[%s7 + $0xd8] sm:$0xff]
      %v1040 = vld [vmem:[%s7 + $0xe0] sm:$0xff]
      %v1041 = vld [vmem:[%s7 + $0xe8] sm:$0xff]
      %v1042 = vld [vmem:[%s7 + $0xf0] sm:$0xff]
      %v1043 = vld [vmem:[%s7 + $0xf8] sm:$0xff]
      %1045 = vset.pattern.permute.xlu0 0
      %1046 = vperm.xlu0 %1045, %v1012
      %v1047 = vpop.permute.xlu0 %1046
      %1050 = vset.pattern.permute.xlu0 0
      %1051 = vperm.xlu0 %1050, %v1013
      %v1052 = vpop.permute.xlu0 %1051
      %1055 = vset.pattern.permute.xlu0 0
      %1056 = vperm.xlu0 %1055, %v1014
      %v1057 = vpop.permute.xlu0 %1056
      %1060 = vset.pattern.permute.xlu0 0
      %1061 = vperm.xlu0 %1060, %v1015
      %v1062 = vpop.permute.xlu0 %1061
      %1065 = vset.pattern.permute.xlu0 0
      %1066 = vperm.xlu0 %1065, %v1016
      %v1067 = vpop.permute.xlu0 %1066
      %1070 = vset.pattern.permute.xlu0 0
      %1071 = vperm.xlu0 %1070, %v1017
      %v1072 = vpop.permute.xlu0 %1071
      %1075 = vset.pattern.permute.xlu0 0
      %1076 = vperm.xlu0 %1075, %v1018
      %v1077 = vpop.permute.xlu0 %1076
      %1080 = vset.pattern.permute.xlu0 0
      %1081 = vperm.xlu0 %1080, %v1019
      %v1082 = vpop.permute.xlu0 %1081
      %1085 = vset.pattern.permute.xlu0 0
      %1086 = vperm.xlu0 %1085, %v1020
      %v1087 = vpop.permute.xlu0 %1086
      %1090 = vset.pattern.permute.xlu0 0
      %1091 = vperm.xlu0 %1090, %v1021
      %v1092 = vpop.permute.xlu0 %1091
      %1095 = vset.pattern.permute.xlu0 0
      %1096 = vperm.xlu0 %1095, %v1022
      %v1097 = vpop.permute.xlu0 %1096
      %1100 = vset.pattern.permute.xlu0 0
      %1101 = vperm.xlu0 %1100, %v1023
      %v1102 = vpop.permute.xlu0 %1101
      %1105 = vset.pattern.permute.xlu0 0
      %1106 = vperm.xlu0 %1105, %v1024
      %v1107 = vpop.permute.xlu0 %1106
      %1110 = vset.pattern.permute.xlu0 0
      %1111 = vperm.xlu0 %1110, %v1025
      %v1112 = vpop.permute.xlu0 %1111
      %1115 = vset.pattern.permute.xlu0 0
      %1116 = vperm.xlu0 %1115, %v1026
      %v1117 = vpop.permute.xlu0 %1116
      %1120 = vset.pattern.permute.xlu0 0
      %1121 = vperm.xlu0 %1120, %v1027
      %v1122 = vpop.permute.xlu0 %1121
      %1125 = vset.pattern.permute.xlu0 0
      %1126 = vperm.xlu0 %1125, %v1028
      %v1127 = vpop.permute.xlu0 %1126
      %1130 = vset.pattern.permute.xlu0 0
      %1131 = vperm.xlu0 %1130, %v1029
      %v1132 = vpop.permute.xlu0 %1131
      %1135 = vset.pattern.permute.xlu0 0
      %1136 = vperm.xlu0 %1135, %v1030
      %v1137 = vpop.permute.xlu0 %1136
      %1140 = vset.pattern.permute.xlu0 0
      %1141 = vperm.xlu0 %1140, %v1031
      %v1142 = vpop.permute.xlu0 %1141
      %1145 = vset.pattern.permute.xlu0 0
      %1146 = vperm.xlu0 %1145, %v1032
      %v1147 = vpop.permute.xlu0 %1146
      %1150 = vset.pattern.permute.xlu0 0
      %1151 = vperm.xlu0 %1150, %v1033
      %v1152 = vpop.permute.xlu0 %1151
      %1155 = vset.pattern.permute.xlu0 0
      %1156 = vperm.xlu0 %1155, %v1034
      %v1157 = vpop.permute.xlu0 %1156
      %1160 = vset.pattern.permute.xlu0 0
      %1161 = vperm.xlu0 %1160, %v1035
      %v1162 = vpop.permute.xlu0 %1161
      %1165 = vset.pattern.permute.xlu0 0
      %1166 = vperm.xlu0 %1165, %v1036
      %v1167 = vpop.permute.xlu0 %1166
      %1170 = vset.pattern.permute.xlu0 0
      %1171 = vperm.xlu0 %1170, %v1037
      %v1172 = vpop.permute.xlu0 %1171
      %1175 = vset.pattern.permute.xlu0 0
      %1176 = vperm.xlu0 %1175, %v1038
      %v1177 = vpop.permute.xlu0 %1176
      %1180 = vset.pattern.permute.xlu0 0
      %1181 = vperm.xlu0 %1180, %v1039
      %v1182 = vpop.permute.xlu0 %1181
      %1185 = vset.pattern.permute.xlu0 0
      %1186 = vperm.xlu0 %1185, %v1040
      %v1187 = vpop.permute.xlu0 %1186
      %1190 = vset.pattern.permute.xlu0 0
      %1191 = vperm.xlu0 %1190, %v1041
      %v1192 = vpop.permute.xlu0 %1191
      %1195 = vset.pattern.permute.xlu0 0
      %1196 = vperm.xlu0 %1195, %v1042
      %v1197 = vpop.permute.xlu0 %1196
      %1200 = vset.pattern.permute.xlu0 0
      %1201 = vperm.xlu0 %1200, %v1043
      %v1202 = vpop.permute.xlu0 %1201
      %v1204 = vmul.f32 %v890, %v1047
      %v1205 = vmul.f32 %v892, %v1052
      %v1206 = vmul.f32 %v894, %v1057
      %v1207 = vmul.f32 %v896, %v1062
      %v1208 = vmul.f32 %v1011, %v1067
      %v1209 = vmul.f32 %v931, %v1072
      %v1210 = vmul.f32 %v933, %v1077
      %v1211 = vmul.f32 %v935, %v1082
      %v1212 = vmul.f32 %v937, %v1087
      %v1213 = vmul.f32 %v939, %v1092
      %v1214 = vmul.f32 %v941, %v1097
      %v1215 = vmul.f32 %v943, %v1102
      %v1216 = vmul.f32 %v945, %v1107
      %v1217 = vmul.f32 %v947, %v1112
      %v1218 = vmul.f32 %v949, %v1117
      %v1219 = vmul.f32 %v951, %v1122
      %v1220 = vmul.f32 %v953, %v1127
      %v1221 = vmul.f32 %v955, %v1132
      %v1222 = vmul.f32 %v957, %v1137
      %v1223 = vmul.f32 %v959, %v1142
      %v1224 = vmul.f32 %v961, %v1147
      %v1225 = vmul.f32 %v963, %v1152
      %v1226 = vmul.f32 %v965, %v1157
      %v1227 = vmul.f32 %v967, %v1162
      %v1228 = vmul.f32 %v969, %v1167
      %v1229 = vmul.f32 %v971, %v1172
      %v1230 = vmul.f32 %v973, %v1177
      %v1231 = vmul.f32 %v975, %v1182
      %v1232 = vmul.f32 %v977, %v1187
      %v1233 = vmul.f32 %v979, %v1192
      %v1234 = vmul.f32 %v981, %v1197
      %v1235 = vmul.f32 %v982, %v1202
      %v1236 = vld [vmem:[%s5] sm:$0xff]
      %v1237 = vld [vmem:[%s5 + $0x8] sm:$0xff]
      %v1238 = vld [vmem:[%s5 + $0x10] sm:$0xff]
      %v1239 = vld [vmem:[%s5 + $0x18] sm:$0xff]
      %1240 = vset.pattern.permute.xlu0 1
      %1241 = vperm.xlu0 %1240, %v1012
      %v1242 = vpop.permute.xlu0 %1241
      %1244 = vset.pattern.permute.xlu0 1
      %1245 = vperm.xlu0 %1244, %v1013
      %v1246 = vpop.permute.xlu0 %1245
      %1248 = vset.pattern.permute.xlu0 1
      %1249 = vperm.xlu0 %1248, %v1014
      %v1250 = vpop.permute.xlu0 %1249
      %1252 = vset.pattern.permute.xlu0 1
      %1253 = vperm.xlu0 %1252, %v1015
      %v1254 = vpop.permute.xlu0 %1253
      %1256 = vset.pattern.permute.xlu0 1
      %1257 = vperm.xlu0 %1256, %v1016
      %v1258 = vpop.permute.xlu0 %1257
      %1260 = vset.pattern.permute.xlu0 1
      %1261 = vperm.xlu0 %1260, %v1017
      %v1262 = vpop.permute.xlu0 %1261
      %1264 = vset.pattern.permute.xlu0 1
      %1265 = vperm.xlu0 %1264, %v1018
      %v1266 = vpop.permute.xlu0 %1265
      %1268 = vset.pattern.permute.xlu0 1
      %1269 = vperm.xlu0 %1268, %v1019
      %v1270 = vpop.permute.xlu0 %1269
      %1272 = vset.pattern.permute.xlu0 1
      %1273 = vperm.xlu0 %1272, %v1020
      %v1274 = vpop.permute.xlu0 %1273
      %1276 = vset.pattern.permute.xlu0 1
      %1277 = vperm.xlu0 %1276, %v1021
      %v1278 = vpop.permute.xlu0 %1277
      %1280 = vset.pattern.permute.xlu0 1
      %1281 = vperm.xlu0 %1280, %v1022
      %v1282 = vpop.permute.xlu0 %1281
      %1284 = vset.pattern.permute.xlu0 1
      %1285 = vperm.xlu0 %1284, %v1023
      %v1286 = vpop.permute.xlu0 %1285
      %1288 = vset.pattern.permute.xlu0 1
      %1289 = vperm.xlu0 %1288, %v1024
      %v1290 = vpop.permute.xlu0 %1289
      %1292 = vset.pattern.permute.xlu0 1
      %1293 = vperm.xlu0 %1292, %v1025
      %v1294 = vpop.permute.xlu0 %1293
      %1296 = vset.pattern.permute.xlu0 1
      %1297 = vperm.xlu0 %1296, %v1026
      %v1298 = vpop.permute.xlu0 %1297
      %1300 = vset.pattern.permute.xlu0 1
      %1301 = vperm.xlu0 %1300, %v1027
      %v1302 = vpop.permute.xlu0 %1301
      %1304 = vset.pattern.permute.xlu0 1
      %1305 = vperm.xlu0 %1304, %v1028
      %v1306 = vpop.permute.xlu0 %1305
      %1308 = vset.pattern.permute.xlu0 1
      %1309 = vperm.xlu0 %1308, %v1029
      %v1310 = vpop.permute.xlu0 %1309
      %1312 = vset.pattern.permute.xlu0 1
      %1313 = vperm.xlu0 %1312, %v1030
      %v1314 = vpop.permute.xlu0 %1313
      %1316 = vset.pattern.permute.xlu0 1
      %1317 = vperm.xlu0 %1316, %v1031
      %v1318 = vpop.permute.xlu0 %1317
      %1320 = vset.pattern.permute.xlu0 1
      %1321 = vperm.xlu0 %1320, %v1032
      %v1322 = vpop.permute.xlu0 %1321
      %1324 = vset.pattern.permute.xlu0 1
      %1325 = vperm.xlu0 %1324, %v1033
      %v1326 = vpop.permute.xlu0 %1325
      %1328 = vset.pattern.permute.xlu0 1
      %1329 = vperm.xlu0 %1328, %v1034
      %v1330 = vpop.permute.xlu0 %1329
      %1332 = vset.pattern.permute.xlu0 1
      %1333 = vperm.xlu0 %1332, %v1035
      %v1334 = vpop.permute.xlu0 %1333
      %1336 = vset.pattern.permute.xlu0 1
      %1337 = vperm.xlu0 %1336, %v1036
      %v1338 = vpop.permute.xlu0 %1337
      %1340 = vset.pattern.permute.xlu0 1
      %1341 = vperm.xlu0 %1340, %v1037
      %v1342 = vpop.permute.xlu0 %1341
      %1344 = vset.pattern.permute.xlu0 1
      %1345 = vperm.xlu0 %1344, %v1038
      %v1346 = vpop.permute.xlu0 %1345
      %1348 = vset.pattern.permute.xlu0 1
      %1349 = vperm.xlu0 %1348, %v1039
      %v1350 = vpop.permute.xlu0 %1349
      %1352 = vset.pattern.permute.xlu0 1
      %1353 = vperm.xlu0 %1352, %v1040
      %v1354 = vpop.permute.xlu0 %1353
      %1356 = vset.pattern.permute.xlu0 1
      %1357 = vperm.xlu0 %1356, %v1041
      %v1358 = vpop.permute.xlu0 %1357
      %1360 = vset.pattern.permute.xlu0 1
      %1361 = vperm.xlu0 %1360, %v1042
      %v1362 = vpop.permute.xlu0 %1361
      %1364 = vset.pattern.permute.xlu0 1
      %1365 = vperm.xlu0 %1364, %v1043
      %v1366 = vpop.permute.xlu0 %1365
      %v1368 = vmul.f32 %v878, %v1242
      %v1369 = vmul.f32 %v879, %v1246
      %v1370 = vmul.f32 %v880, %v1250
      %v1371 = vmul.f32 %v881, %v1254
      %v1372 = vmul.f32 %v850, %v1258
      %v1373 = vmul.f32 %v851, %v1262
      %v1374 = vmul.f32 %v852, %v1266
      %v1375 = vmul.f32 %v853, %v1270
      %v1376 = vmul.f32 %v854, %v1274
      %v1377 = vmul.f32 %v855, %v1278
      %v1378 = vmul.f32 %v856, %v1282
      %v1379 = vmul.f32 %v857, %v1286
      %v1380 = vmul.f32 %v858, %v1290
      %v1381 = vmul.f32 %v859, %v1294
      %v1382 = vmul.f32 %v860, %v1298
      %v1383 = vmul.f32 %v861, %v1302
      %v1384 = vmul.f32 %v862, %v1306
      %v1385 = vmul.f32 %v863, %v1310
      %v1386 = vmul.f32 %v864, %v1314
      %v1387 = vmul.f32 %v865, %v1318
      %v1388 = vmul.f32 %v866, %v1322
      %v1389 = vmul.f32 %v867, %v1326
      %v1390 = vmul.f32 %v868, %v1330
      %v1391 = vmul.f32 %v869, %v1334
      %v1392 = vmul.f32 %v870, %v1338
      %v1393 = vmul.f32 %v871, %v1342
      %v1394 = vmul.f32 %v872, %v1346
      %v1395 = vmul.f32 %v873, %v1350
      %v1396 = vmul.f32 %v874, %v1354
      %v1397 = vmul.f32 %v875, %v1358
      %v1398 = vmul.f32 %v876, %v1362
      %v1399 = vmul.f32 %v877, %v1366
      %v1400 = vld [vmem:[%s5 + $0x20] sm:$0xff]
      %v1401 = vld [vmem:[%s5 + $0x28] sm:$0xff]
      %v1402 = vld [vmem:[%s5 + $0x30] sm:$0xff]
      %v1403 = vld [vmem:[%s5 + $0x38] sm:$0xff]
      %v1405 = vsel %vm554, %v1368, 0
      %v1408 = vsel %vm554, %v1369, 0
      %v1411 = vsel %vm554, %v1370, 0
      %v1414 = vsel %vm554, %v1371, 0
      %v1417 = vsel %vm554, %v1372, 0
      %v1420 = vsel %vm554, %v1373, 0
      %v1423 = vsel %vm554, %v1374, 0
      %v1426 = vsel %vm554, %v1375, 0
      %v1429 = vsel %vm554, %v1376, 0
      %v1432 = vsel %vm554, %v1377, 0
      %v1435 = vsel %vm554, %v1378, 0
      %v1438 = vsel %vm554, %v1379, 0
      %v1441 = vsel %vm554, %v1380, 0
      %v1444 = vsel %vm554, %v1381, 0
      %v1447 = vsel %vm554, %v1382, 0
      %v1450 = vsel %vm554, %v1383, 0
      %v1453 = vsel %vm554, %v1384, 0
      %v1456 = vsel %vm554, %v1385, 0
      %v1459 = vsel %vm554, %v1386, 0
      %v1462 = vsel %vm554, %v1387, 0
      %v1465 = vsel %vm554, %v1388, 0
      %v1468 = vsel %vm554, %v1389, 0
      %v1471 = vsel %vm554, %v1390, 0
      %v1474 = vsel %vm554, %v1391, 0
      %v1477 = vsel %vm554, %v1392, 0
      %v1480 = vsel %vm554, %v1393, 0
      %v1483 = vsel %vm554, %v1394, 0
      %v1486 = vsel %vm554, %v1395, 0
      %v1489 = vsel %vm554, %v1396, 0
      %v1492 = vsel %vm554, %v1397, 0
      %v1495 = vsel %vm554, %v1398, 0
      %v1498 = vsel %vm554, %v1399, 0
      %1500 = vmatpush.msra.mxu0 0.0
      %1501 = vmatpush.msra.mxu0 0.0
      %1502 = vmatpush.msra.mxu0 0.0
      %1503 = vmatpush.msra.mxu0 0.0
      %1504 = vmatpush.msra.mxu0 0.0
      %1505 = vmatpush.msra.mxu0 0.0
      %1506 = vmatpush.msra.mxu0 0.0
      %1507 = vmatpush.msra.mxu0 0.0
      %1508 = vmatpush.msra.mxu0 0.0
      %1509 = vmatpush.msra.mxu0 0.0
      %1510 = vmatpush.msra.mxu0 0.0
      %1511 = vmatpush.msra.mxu0 0.0
      %1512 = vmatpush.msra.mxu0 %v1403
      %1513 = vmatpush.msra.mxu0 %v1402
      %1514 = vmatpush.msra.mxu0 %v1401
      %1515 = vmatpush.msra.mxu0 %v1400
      %1516 = vmatmul.f32.gmra.mxu0 %v1405
      %v1517 = vpop.f32.mrf.mxu0
      %v1518 = vadd.f32 0.0, %v1517
      %1519 = vmatmul.f32.gmra.mxu0 %v1408
      %v1520 = vpop.f32.mrf.mxu0
      %v1521 = vadd.f32 0.0, %v1520
      %1522 = vmatmul.f32.gmra.mxu0 %v1411
      %v1523 = vpop.f32.mrf.mxu0
      %v1524 = vadd.f32 0.0, %v1523
      %1525 = vmatmul.f32.gmra.mxu0 %v1414
      %v1526 = vpop.f32.mrf.mxu0
      %v1527 = vadd.f32 0.0, %v1526
      %1528 = vmatmul.f32.gmra.mxu0 %v1417
      %v1529 = vpop.f32.mrf.mxu0
      %v1530 = vadd.f32 0.0, %v1529
      %1531 = vmatmul.f32.gmra.mxu0 %v1420
      %v1532 = vpop.f32.mrf.mxu0
      %v1533 = vadd.f32 0.0, %v1532
      %1534 = vmatmul.f32.gmra.mxu0 %v1423
      %v1535 = vpop.f32.mrf.mxu0
      %v1536 = vadd.f32 0.0, %v1535
      %1537 = vmatmul.f32.gmra.mxu0 %v1426
      %v1538 = vpop.f32.mrf.mxu0
      %v1539 = vadd.f32 0.0, %v1538
      %1540 = vmatmul.f32.gmra.mxu0 %v1429
      %v1541 = vpop.f32.mrf.mxu0
      %v1542 = vadd.f32 0.0, %v1541
      %1543 = vmatmul.f32.gmra.mxu0 %v1432
      %v1544 = vpop.f32.mrf.mxu0
      %v1545 = vadd.f32 0.0, %v1544
      %1546 = vmatmul.f32.gmra.mxu0 %v1435
      %v1547 = vpop.f32.mrf.mxu0
      %v1548 = vadd.f32 0.0, %v1547
      %1549 = vmatmul.f32.gmra.mxu0 %v1438
      %v1550 = vpop.f32.mrf.mxu0
      %v1551 = vadd.f32 0.0, %v1550
      %1552 = vmatmul.f32.gmra.mxu0 %v1441
      %v1553 = vpop.f32.mrf.mxu0
      %v1554 = vadd.f32 0.0, %v1553
      %1555 = vmatmul.f32.gmra.mxu0 %v1444
      %v1556 = vpop.f32.mrf.mxu0
      %v1557 = vadd.f32 0.0, %v1556
      %1558 = vmatmul.f32.gmra.mxu0 %v1447
      %v1559 = vpop.f32.mrf.mxu0
      %v1560 = vadd.f32 0.0, %v1559
      %1561 = vmatmul.f32.gmra.mxu0 %v1450
      %v1562 = vpop.f32.mrf.mxu0
      %v1563 = vadd.f32 0.0, %v1562
      %1564 = vmatmul.f32.gmra.mxu0 %v1453
      %v1565 = vpop.f32.mrf.mxu0
      %v1566 = vadd.f32 0.0, %v1565
      %1567 = vmatmul.f32.gmra.mxu0 %v1456
      %v1568 = vpop.f32.mrf.mxu0
      %v1569 = vadd.f32 0.0, %v1568
      %1570 = vmatmul.f32.gmra.mxu0 %v1459
      %v1571 = vpop.f32.mrf.mxu0
      %v1572 = vadd.f32 0.0, %v1571
      %1573 = vmatmul.f32.gmra.mxu0 %v1462
      %v1574 = vpop.f32.mrf.mxu0
      %v1575 = vadd.f32 0.0, %v1574
      %1576 = vmatmul.f32.gmra.mxu0 %v1465
      %v1577 = vpop.f32.mrf.mxu0
      %v1578 = vadd.f32 0.0, %v1577
      %1579 = vmatmul.f32.gmra.mxu0 %v1468
      %v1580 = vpop.f32.mrf.mxu0
      %v1581 = vadd.f32 0.0, %v1580
      %1582 = vmatmul.f32.gmra.mxu0 %v1471
      %v1583 = vpop.f32.mrf.mxu0
      %v1584 = vadd.f32 0.0, %v1583
      %1585 = vmatmul.f32.gmra.mxu0 %v1474
      %v1586 = vpop.f32.mrf.mxu0
      %v1587 = vadd.f32 0.0, %v1586
      %1588 = vmatmul.f32.gmra.mxu0 %v1477
      %v1589 = vpop.f32.mrf.mxu0
      %v1590 = vadd.f32 0.0, %v1589
      %1591 = vmatmul.f32.gmra.mxu0 %v1480
      %v1592 = vpop.f32.mrf.mxu0
      %v1593 = vadd.f32 0.0, %v1592
      %1594 = vmatmul.f32.gmra.mxu0 %v1483
      %v1595 = vpop.f32.mrf.mxu0
      %v1596 = vadd.f32 0.0, %v1595
      %1597 = vmatmul.f32.gmra.mxu0 %v1486
      %v1598 = vpop.f32.mrf.mxu0
      %v1599 = vadd.f32 0.0, %v1598
      %1600 = vmatmul.f32.gmra.mxu0 %v1489
      %v1601 = vpop.f32.mrf.mxu0
      %v1602 = vadd.f32 0.0, %v1601
      %1603 = vmatmul.f32.gmra.mxu0 %v1492
      %v1604 = vpop.f32.mrf.mxu0
      %v1605 = vadd.f32 0.0, %v1604
      %1606 = vmatmul.f32.gmra.mxu0 %v1495
      %v1607 = vpop.f32.mrf.mxu0
      %v1608 = vadd.f32 0.0, %v1607
      %1609 = vmatmul.f32.gmra.mxu0 %v1498
      %v1610 = vpop.f32.mrf.mxu0
      %v1611 = vadd.f32 0.0, %v1610
      %1612 = vdwg.mxu0
      %v1614 = vsel %vm554, %v1204, 0
      %v1617 = vsel %vm554, %v1205, 0
      %v1620 = vsel %vm554, %v1206, 0
      %v1623 = vsel %vm554, %v1207, 0
      %v1626 = vsel %vm554, %v1208, 0
      %v1629 = vsel %vm554, %v1209, 0
      %v1632 = vsel %vm554, %v1210, 0
      %v1635 = vsel %vm554, %v1211, 0
      %v1638 = vsel %vm554, %v1212, 0
      %v1641 = vsel %vm554, %v1213, 0
      %v1644 = vsel %vm554, %v1214, 0
      %v1647 = vsel %vm554, %v1215, 0
      %v1650 = vsel %vm554, %v1216, 0
      %v1653 = vsel %vm554, %v1217, 0
      %v1656 = vsel %vm554, %v1218, 0
      %v1659 = vsel %vm554, %v1219, 0
      %v1662 = vsel %vm554, %v1220, 0
      %v1665 = vsel %vm554, %v1221, 0
      %v1668 = vsel %vm554, %v1222, 0
      %v1671 = vsel %vm554, %v1223, 0
      %v1674 = vsel %vm554, %v1224, 0
      %v1677 = vsel %vm554, %v1225, 0
      %v1680 = vsel %vm554, %v1226, 0
      %v1683 = vsel %vm554, %v1227, 0
      %v1686 = vsel %vm554, %v1228, 0
      %v1689 = vsel %vm554, %v1229, 0
      %v1692 = vsel %vm554, %v1230, 0
      %v1695 = vsel %vm554, %v1231, 0
      %v1698 = vsel %vm554, %v1232, 0
      %v1701 = vsel %vm554, %v1233, 0
      %v1704 = vsel %vm554, %v1234, 0
      %v1707 = vsel %vm554, %v1235, 0
      %1709 = vmatpush.msra.mxu0 0.0
      %1710 = vmatpush.msra.mxu0 0.0
      %1711 = vmatpush.msra.mxu0 0.0
      %1712 = vmatpush.msra.mxu0 0.0
      %1713 = vmatpush.msra.mxu0 0.0
      %1714 = vmatpush.msra.mxu0 0.0
      %1715 = vmatpush.msra.mxu0 0.0
      %1716 = vmatpush.msra.mxu0 0.0
      %1717 = vmatpush.msra.mxu0 0.0
      %1718 = vmatpush.msra.mxu0 0.0
      %1719 = vmatpush.msra.mxu0 0.0
      %1720 = vmatpush.msra.mxu0 0.0
      %1721 = vmatpush.msra.mxu0 %v1239
      %1722 = vmatpush.msra.mxu0 %v1238
      %1723 = vmatpush.msra.mxu0 %v1237
      %1724 = vmatpush.msra.mxu0 %v1236
      %1725 = vmatmul.f32.gmra.mxu0 %v1614
      %v1726 = vpop.f32.mrf.mxu0
      %v1727 = vadd.f32 %v1518, %v1726
      %1728 = vmatmul.f32.gmra.mxu0 %v1617
      %v1729 = vpop.f32.mrf.mxu0
      %v1730 = vadd.f32 %v1521, %v1729
      %1731 = vmatmul.f32.gmra.mxu0 %v1620
      %v1732 = vpop.f32.mrf.mxu0
      %v1733 = vadd.f32 %v1524, %v1732
      %1734 = vmatmul.f32.gmra.mxu0 %v1623
      %v1735 = vpop.f32.mrf.mxu0
      %v1736 = vadd.f32 %v1527, %v1735
      %1737 = vmatmul.f32.gmra.mxu0 %v1626
      %v1738 = vpop.f32.mrf.mxu0
      %v1739 = vadd.f32 %v1530, %v1738
      %1740 = vmatmul.f32.gmra.mxu0 %v1629
      %v1741 = vpop.f32.mrf.mxu0
      %v1742 = vadd.f32 %v1533, %v1741
      %1743 = vmatmul.f32.gmra.mxu0 %v1632
      %v1744 = vpop.f32.mrf.mxu0
      %v1745 = vadd.f32 %v1536, %v1744
      %1746 = vmatmul.f32.gmra.mxu0 %v1635
      %v1747 = vpop.f32.mrf.mxu0
      %v1748 = vadd.f32 %v1539, %v1747
      %1749 = vmatmul.f32.gmra.mxu0 %v1638
      %v1750 = vpop.f32.mrf.mxu0
      %v1751 = vadd.f32 %v1542, %v1750
      %1752 = vmatmul.f32.gmra.mxu0 %v1641
      %v1753 = vpop.f32.mrf.mxu0
      %v1754 = vadd.f32 %v1545, %v1753
      %1755 = vmatmul.f32.gmra.mxu0 %v1644
      %v1756 = vpop.f32.mrf.mxu0
      %v1757 = vadd.f32 %v1548, %v1756
      %1758 = vmatmul.f32.gmra.mxu0 %v1647
      %v1759 = vpop.f32.mrf.mxu0
      %v1760 = vadd.f32 %v1551, %v1759
      %1761 = vmatmul.f32.gmra.mxu0 %v1650
      %v1762 = vpop.f32.mrf.mxu0
      %v1763 = vadd.f32 %v1554, %v1762
      %1764 = vmatmul.f32.gmra.mxu0 %v1653
      %v1765 = vpop.f32.mrf.mxu0
      %v1766 = vadd.f32 %v1557, %v1765
      %1767 = vmatmul.f32.gmra.mxu0 %v1656
      %v1768 = vpop.f32.mrf.mxu0
      %v1769 = vadd.f32 %v1560, %v1768
      %1770 = vmatmul.f32.gmra.mxu0 %v1659
      %v1771 = vpop.f32.mrf.mxu0
      %v1772 = vadd.f32 %v1563, %v1771
      %1773 = vmatmul.f32.gmra.mxu0 %v1662
      %v1774 = vpop.f32.mrf.mxu0
      %v1775 = vadd.f32 %v1566, %v1774
      %1776 = vmatmul.f32.gmra.mxu0 %v1665
      %v1777 = vpop.f32.mrf.mxu0
      %v1778 = vadd.f32 %v1569, %v1777
      %1779 = vmatmul.f32.gmra.mxu0 %v1668
      %v1780 = vpop.f32.mrf.mxu0
      %v1781 = vadd.f32 %v1572, %v1780
      %1782 = vmatmul.f32.gmra.mxu0 %v1671
      %v1783 = vpop.f32.mrf.mxu0
      %v1784 = vadd.f32 %v1575, %v1783
      %1785 = vmatmul.f32.gmra.mxu0 %v1674
      %v1786 = vpop.f32.mrf.mxu0
      %v1787 = vadd.f32 %v1578, %v1786
      %1788 = vmatmul.f32.gmra.mxu0 %v1677
      %v1789 = vpop.f32.mrf.mxu0
      %v1790 = vadd.f32 %v1581, %v1789
      %1791 = vmatmul.f32.gmra.mxu0 %v1680
      %v1792 = vpop.f32.mrf.mxu0
      %v1793 = vadd.f32 %v1584, %v1792
      %1794 = vmatmul.f32.gmra.mxu0 %v1683
      %v1795 = vpop.f32.mrf.mxu0
      %v1796 = vadd.f32 %v1587, %v1795
      %1797 = vmatmul.f32.gmra.mxu0 %v1686
      %v1798 = vpop.f32.mrf.mxu0
      %v1799 = vadd.f32 %v1590, %v1798
      %1800 = vmatmul.f32.gmra.mxu0 %v1689
      %v1801 = vpop.f32.mrf.mxu0
      %v1802 = vadd.f32 %v1593, %v1801
      %1803 = vmatmul.f32.gmra.mxu0 %v1692
      %v1804 = vpop.f32.mrf.mxu0
      %v1805 = vadd.f32 %v1596, %v1804
      %1806 = vmatmul.f32.gmra.mxu0 %v1695
      %v1807 = vpop.f32.mrf.mxu0
      %v1808 = vadd.f32 %v1599, %v1807
      %1809 = vmatmul.f32.gmra.mxu0 %v1698
      %v1810 = vpop.f32.mrf.mxu0
      %v1811 = vadd.f32 %v1602, %v1810
      %1812 = vmatmul.f32.gmra.mxu0 %v1701
      %v1813 = vpop.f32.mrf.mxu0
      %v1814 = vadd.f32 %v1605, %v1813
      %1815 = vmatmul.f32.gmra.mxu0 %v1704
      %v1816 = vpop.f32.mrf.mxu0
      %v1817 = vadd.f32 %v1608, %v1816
      %1818 = vmatmul.f32.gmra.mxu0 %v1707
      %v1819 = vpop.f32.mrf.mxu0
      %v1820 = vadd.f32 %v1611, %v1819
      %1821 = vdwg.mxu0
      %vm1822 = vcmask 1045504
      %v1823 = vrot.slane %v878, 2
      %v1824 = vrot.slane %v879, 2
      %v1825 = vsel %vm1822, %v1823, %v1824
      %v1826 = vrot.slane %v880, 2
      %v1827 = vsel %vm1822, %v1824, %v1826
      %v1828 = vrot.slane %v881, 2
      %v1829 = vsel %vm1822, %v1826, %v1828
      %v1834 = vrot.slane %v850, 2
      %v1835 = vrot.slane %v851, 2
      %v1836 = vsel %vm1822, %v1834, %v1835
      %v1837 = vrot.slane %v852, 2
      %v1838 = vsel %vm1822, %v1835, %v1837
      %v1839 = vrot.slane %v853, 2
      %v1840 = vsel %vm1822, %v1837, %v1839
      %v1841 = vrot.slane %v854, 2
      %v1842 = vsel %vm1822, %v1839, %v1841
      %v1843 = vrot.slane %v855, 2
      %v1844 = vsel %vm1822, %v1841, %v1843
      %v1845 = vrot.slane %v856, 2
      %v1846 = vsel %vm1822, %v1843, %v1845
      %v1847 = vrot.slane %v857, 2
      %v1848 = vsel %vm1822, %v1845, %v1847
      %v1849 = vrot.slane %v858, 2
      %v1850 = vsel %vm1822, %v1847, %v1849
      %v1851 = vrot.slane %v859, 2
      %v1852 = vsel %vm1822, %v1849, %v1851
      %v1853 = vrot.slane %v860, 2
      %v1854 = vsel %vm1822, %v1851, %v1853
      %v1855 = vrot.slane %v861, 2
      %v1856 = vsel %vm1822, %v1853, %v1855
      %v1857 = vrot.slane %v862, 2
      %v1858 = vsel %vm1822, %v1855, %v1857
      %v1859 = vrot.slane %v863, 2
      %v1860 = vsel %vm1822, %v1857, %v1859
      %v1861 = vrot.slane %v864, 2
      %v1862 = vsel %vm1822, %v1859, %v1861
      %v1863 = vrot.slane %v865, 2
      %v1864 = vsel %vm1822, %v1861, %v1863
      %v1865 = vrot.slane %v866, 2
      %v1866 = vsel %vm1822, %v1863, %v1865
      %v1867 = vrot.slane %v867, 2
      %v1868 = vsel %vm1822, %v1865, %v1867
      %v1869 = vrot.slane %v868, 2
      %v1870 = vsel %vm1822, %v1867, %v1869
      %v1871 = vrot.slane %v869, 2
      %v1872 = vsel %vm1822, %v1869, %v1871
      %v1873 = vrot.slane %v870, 2
      %v1874 = vsel %vm1822, %v1871, %v1873
      %v1875 = vrot.slane %v871, 2
      %v1876 = vsel %vm1822, %v1873, %v1875
      %v1877 = vrot.slane %v872, 2
      %v1878 = vsel %vm1822, %v1875, %v1877
      %v1879 = vrot.slane %v873, 2
      %v1880 = vsel %vm1822, %v1877, %v1879
      %v1881 = vrot.slane %v874, 2
      %v1882 = vsel %vm1822, %v1879, %v1881
      %v1883 = vrot.slane %v875, 2
      %v1884 = vsel %vm1822, %v1881, %v1883
      %v1885 = vrot.slane %v876, 2
      %v1886 = vsel %vm1822, %v1883, %v1885
      %v1887 = vrot.slane %v877, 2
      %v1888 = vsel %vm1822, %v1885, %v1887
      %v1889 = vsel %vm1822, %v1887, %v1823
      %v1919 = vsel %vm1822, %v1828, %v1834
      %1920 = vset.pattern.permute.xlu0 2
      %1921 = vperm.xlu0 %1920, %v1012
      %v1922 = vpop.permute.xlu0 %1921
      %1924 = vset.pattern.permute.xlu0 2
      %1925 = vperm.xlu0 %1924, %v1013
      %v1926 = vpop.permute.xlu0 %1925
      %1928 = vset.pattern.permute.xlu0 2
      %1929 = vperm.xlu0 %1928, %v1014
      %v1930 = vpop.permute.xlu0 %1929
      %1932 = vset.pattern.permute.xlu0 2
      %1933 = vperm.xlu0 %1932, %v1015
      %v1934 = vpop.permute.xlu0 %1933
      %1936 = vset.pattern.permute.xlu0 2
      %1937 = vperm.xlu0 %1936, %v1016
      %v1938 = vpop.permute.xlu0 %1937
      %1940 = vset.pattern.permute.xlu0 2
      %1941 = vperm.xlu0 %1940, %v1017
      %v1942 = vpop.permute.xlu0 %1941
      %1944 = vset.pattern.permute.xlu0 2
      %1945 = vperm.xlu0 %1944, %v1018
      %v1946 = vpop.permute.xlu0 %1945
      %1948 = vset.pattern.permute.xlu0 2
      %1949 = vperm.xlu0 %1948, %v1019
      %v1950 = vpop.permute.xlu0 %1949
      %1952 = vset.pattern.permute.xlu0 2
      %1953 = vperm.xlu0 %1952, %v1020
      %v1954 = vpop.permute.xlu0 %1953
      %1956 = vset.pattern.permute.xlu0 2
      %1957 = vperm.xlu0 %1956, %v1021
      %v1958 = vpop.permute.xlu0 %1957
      %1960 = vset.pattern.permute.xlu0 2
      %1961 = vperm.xlu0 %1960, %v1022
      %v1962 = vpop.permute.xlu0 %1961
      %1964 = vset.pattern.permute.xlu0 2
      %1965 = vperm.xlu0 %1964, %v1023
      %v1966 = vpop.permute.xlu0 %1965
      %1968 = vset.pattern.permute.xlu0 2
      %1969 = vperm.xlu0 %1968, %v1024
      %v1970 = vpop.permute.xlu0 %1969
      %1972 = vset.pattern.permute.xlu0 2
      %1973 = vperm.xlu0 %1972, %v1025
      %v1974 = vpop.permute.xlu0 %1973
      %1976 = vset.pattern.permute.xlu0 2
      %1977 = vperm.xlu0 %1976, %v1026
      %v1978 = vpop.permute.xlu0 %1977
      %1980 = vset.pattern.permute.xlu0 2
      %1981 = vperm.xlu0 %1980, %v1027
      %v1982 = vpop.permute.xlu0 %1981
      %1984 = vset.pattern.permute.xlu0 2
      %1985 = vperm.xlu0 %1984, %v1028
      %v1986 = vpop.permute.xlu0 %1985
      %1988 = vset.pattern.permute.xlu0 2
      %1989 = vperm.xlu0 %1988, %v1029
      %v1990 = vpop.permute.xlu0 %1989
      %1992 = vset.pattern.permute.xlu0 2
      %1993 = vperm.xlu0 %1992, %v1030
      %v1994 = vpop.permute.xlu0 %1993
      %1996 = vset.pattern.permute.xlu0 2
      %1997 = vperm.xlu0 %1996, %v1031
      %v1998 = vpop.permute.xlu0 %1997
      %2000 = vset.pattern.permute.xlu0 2
      %2001 = vperm.xlu0 %2000, %v1032
      %v2002 = vpop.permute.xlu0 %2001
      %2004 = vset.pattern.permute.xlu0 2
      %2005 = vperm.xlu0 %2004, %v1033
      %v2006 = vpop.permute.xlu0 %2005
      %2008 = vset.pattern.permute.xlu0 2
      %2009 = vperm.xlu0 %2008, %v1034
      %v2010 = vpop.permute.xlu0 %2009
      %2012 = vset.pattern.permute.xlu0 2
      %2013 = vperm.xlu0 %2012, %v1035
      %v2014 = vpop.permute.xlu0 %2013
      %2016 = vset.pattern.permute.xlu0 2
      %2017 = vperm.xlu0 %2016, %v1036
      %v2018 = vpop.permute.xlu0 %2017
      %2020 = vset.pattern.permute.xlu0 2
      %2021 = vperm.xlu0 %2020, %v1037
      %v2022 = vpop.permute.xlu0 %2021
      %2024 = vset.pattern.permute.xlu0 2
      %2025 = vperm.xlu0 %2024, %v1038
      %v2026 = vpop.permute.xlu0 %2025
      %2028 = vset.pattern.permute.xlu0 2
      %2029 = vperm.xlu0 %2028, %v1039
      %v2030 = vpop.permute.xlu0 %2029
      %2032 = vset.pattern.permute.xlu0 2
      %2033 = vperm.xlu0 %2032, %v1040
      %v2034 = vpop.permute.xlu0 %2033
      %2036 = vset.pattern.permute.xlu0 2
      %2037 = vperm.xlu0 %2036, %v1041
      %v2038 = vpop.permute.xlu0 %2037
      %2040 = vset.pattern.permute.xlu0 2
      %2041 = vperm.xlu0 %2040, %v1042
      %v2042 = vpop.permute.xlu0 %2041
      %2044 = vset.pattern.permute.xlu0 2
      %2045 = vperm.xlu0 %2044, %v1043
      %v2046 = vpop.permute.xlu0 %2045
      %v2048 = vmul.f32 %v1825, %v1922
      %v2049 = vmul.f32 %v1827, %v1926
      %v2050 = vmul.f32 %v1829, %v1930
      %v2051 = vmul.f32 %v1919, %v1934
      %v2052 = vmul.f32 %v1836, %v1938
      %v2053 = vmul.f32 %v1838, %v1942
      %v2054 = vmul.f32 %v1840, %v1946
      %v2055 = vmul.f32 %v1842, %v1950
      %v2056 = vmul.f32 %v1844, %v1954
      %v2057 = vmul.f32 %v1846, %v1958
      %v2058 = vmul.f32 %v1848, %v1962
      %v2059 = vmul.f32 %v1850, %v1966
      %v2060 = vmul.f32 %v1852, %v1970
      %v2061 = vmul.f32 %v1854, %v1974
      %v2062 = vmul.f32 %v1856, %v1978
      %v2063 = vmul.f32 %v1858, %v1982
      %v2064 = vmul.f32 %v1860, %v1986
      %v2065 = vmul.f32 %v1862, %v1990
      %v2066 = vmul.f32 %v1864, %v1994
      %v2067 = vmul.f32 %v1866, %v1998
      %v2068 = vmul.f32 %v1868, %v2002
      %v2069 = vmul.f32 %v1870, %v2006
      %v2070 = vmul.f32 %v1872, %v2010
      %v2071 = vmul.f32 %v1874, %v2014
      %v2072 = vmul.f32 %v1876, %v2018
      %v2073 = vmul.f32 %v1878, %v2022
      %v2074 = vmul.f32 %v1880, %v2026
      %v2075 = vmul.f32 %v1882, %v2030
      %v2076 = vmul.f32 %v1884, %v2034
      %v2077 = vmul.f32 %v1886, %v2038
      %v2078 = vmul.f32 %v1888, %v2042
      %v2079 = vmul.f32 %v1889, %v2046
      %v2080 = vld [vmem:[%s5 + $0x40] sm:$0xff]
      %v2081 = vld [vmem:[%s5 + $0x48] sm:$0xff]
      %v2082 = vld [vmem:[%s5 + $0x50] sm:$0xff]
      %v2083 = vld [vmem:[%s5 + $0x58] sm:$0xff]
      %v2085 = vsel %vm554, %v2048, 0
      %v2088 = vsel %vm554, %v2049, 0
      %v2091 = vsel %vm554, %v2050, 0
      %v2094 = vsel %vm554, %v2051, 0
      %v2097 = vsel %vm554, %v2052, 0
      %v2100 = vsel %vm554, %v2053, 0
      %v2103 = vsel %vm554, %v2054, 0
      %v2106 = vsel %vm554, %v2055, 0
      %v2109 = vsel %vm554, %v2056, 0
      %v2112 = vsel %vm554, %v2057, 0
      %v2115 = vsel %vm554, %v2058, 0
      %v2118 = vsel %vm554, %v2059, 0
      %v2121 = vsel %vm554, %v2060, 0
      %v2124 = vsel %vm554, %v2061, 0
      %v2127 = vsel %vm554, %v2062, 0
      %v2130 = vsel %vm554, %v2063, 0
      %v2133 = vsel %vm554, %v2064, 0
      %v2136 = vsel %vm554, %v2065, 0
      %v2139 = vsel %vm554, %v2066, 0
      %v2142 = vsel %vm554, %v2067, 0
      %v2145 = vsel %vm554, %v2068, 0
      %v2148 = vsel %vm554, %v2069, 0
      %v2151 = vsel %vm554, %v2070, 0
      %v2154 = vsel %vm554, %v2071, 0
      %v2157 = vsel %vm554, %v2072, 0
      %v2160 = vsel %vm554, %v2073, 0
      %v2163 = vsel %vm554, %v2074, 0
      %v2166 = vsel %vm554, %v2075, 0
      %v2169 = vsel %vm554, %v2076, 0
      %v2172 = vsel %vm554, %v2077, 0
      %v2175 = vsel %vm554, %v2078, 0
      %v2178 = vsel %vm554, %v2079, 0
      %2180 = vmatpush.msra.mxu0 0.0
      %2181 = vmatpush.msra.mxu0 0.0
      %2182 = vmatpush.msra.mxu0 0.0
      %2183 = vmatpush.msra.mxu0 0.0
      %2184 = vmatpush.msra.mxu0 0.0
      %2185 = vmatpush.msra.mxu0 0.0
      %2186 = vmatpush.msra.mxu0 0.0
      %2187 = vmatpush.msra.mxu0 0.0
      %2188 = vmatpush.msra.mxu0 0.0
      %2189 = vmatpush.msra.mxu0 0.0
      %2190 = vmatpush.msra.mxu0 0.0
      %2191 = vmatpush.msra.mxu0 0.0
      %2192 = vmatpush.msra.mxu0 %v2083
      %2193 = vmatpush.msra.mxu0 %v2082
      %2194 = vmatpush.msra.mxu0 %v2081
      %2195 = vmatpush.msra.mxu0 %v2080
      %2196 = vmatmul.f32.gmra.mxu0 %v2085
      %v2197 = vpop.f32.mrf.mxu0
      %v2198 = vadd.f32 0.0, %v2197
      %2199 = vmatmul.f32.gmra.mxu0 %v2088
      %v2200 = vpop.f32.mrf.mxu0
      %v2201 = vadd.f32 0.0, %v2200
      %2202 = vmatmul.f32.gmra.mxu0 %v2091
      %v2203 = vpop.f32.mrf.mxu0
      %v2204 = vadd.f32 0.0, %v2203
      %2205 = vmatmul.f32.gmra.mxu0 %v2094
      %v2206 = vpop.f32.mrf.mxu0
      %v2207 = vadd.f32 0.0, %v2206
      %2208 = vmatmul.f32.gmra.mxu0 %v2097
      %v2209 = vpop.f32.mrf.mxu0
      %v2210 = vadd.f32 0.0, %v2209
      %2211 = vmatmul.f32.gmra.mxu0 %v2100
      %v2212 = vpop.f32.mrf.mxu0
      %v2213 = vadd.f32 0.0, %v2212
      %2214 = vmatmul.f32.gmra.mxu0 %v2103
      %v2215 = vpop.f32.mrf.mxu0
      %v2216 = vadd.f32 0.0, %v2215
      %2217 = vmatmul.f32.gmra.mxu0 %v2106
      %v2218 = vpop.f32.mrf.mxu0
      %v2219 = vadd.f32 0.0, %v2218
      %2220 = vmatmul.f32.gmra.mxu0 %v2109
      %v2221 = vpop.f32.mrf.mxu0
      %v2222 = vadd.f32 0.0, %v2221
      %2223 = vmatmul.f32.gmra.mxu0 %v2112
      %v2224 = vpop.f32.mrf.mxu0
      %v2225 = vadd.f32 0.0, %v2224
      %2226 = vmatmul.f32.gmra.mxu0 %v2115
      %v2227 = vpop.f32.mrf.mxu0
      %v2228 = vadd.f32 0.0, %v2227
      %2229 = vmatmul.f32.gmra.mxu0 %v2118
      %v2230 = vpop.f32.mrf.mxu0
      %v2231 = vadd.f32 0.0, %v2230
      %2232 = vmatmul.f32.gmra.mxu0 %v2121
      %v2233 = vpop.f32.mrf.mxu0
      %v2234 = vadd.f32 0.0, %v2233
      %2235 = vmatmul.f32.gmra.mxu0 %v2124
      %v2236 = vpop.f32.mrf.mxu0
      %v2237 = vadd.f32 0.0, %v2236
      %2238 = vmatmul.f32.gmra.mxu0 %v2127
      %v2239 = vpop.f32.mrf.mxu0
      %v2240 = vadd.f32 0.0, %v2239
      %2241 = vmatmul.f32.gmra.mxu0 %v2130
      %v2242 = vpop.f32.mrf.mxu0
      %v2243 = vadd.f32 0.0, %v2242
      %2244 = vmatmul.f32.gmra.mxu0 %v2133
      %v2245 = vpop.f32.mrf.mxu0
      %v2246 = vadd.f32 0.0, %v2245
      %2247 = vmatmul.f32.gmra.mxu0 %v2136
      %v2248 = vpop.f32.mrf.mxu0
      %v2249 = vadd.f32 0.0, %v2248
      %2250 = vmatmul.f32.gmra.mxu0 %v2139
      %v2251 = vpop.f32.mrf.mxu0
      %v2252 = vadd.f32 0.0, %v2251
      %2253 = vmatmul.f32.gmra.mxu0 %v2142
      %v2254 = vpop.f32.mrf.mxu0
      %v2255 = vadd.f32 0.0, %v2254
      %2256 = vmatmul.f32.gmra.mxu0 %v2145
      %v2257 = vpop.f32.mrf.mxu0
      %v2258 = vadd.f32 0.0, %v2257
      %2259 = vmatmul.f32.gmra.mxu0 %v2148
      %v2260 = vpop.f32.mrf.mxu0
      %v2261 = vadd.f32 0.0, %v2260
      %2262 = vmatmul.f32.gmra.mxu0 %v2151
      %v2263 = vpop.f32.mrf.mxu0
      %v2264 = vadd.f32 0.0, %v2263
      %2265 = vmatmul.f32.gmra.mxu0 %v2154
      %v2266 = vpop.f32.mrf.mxu0
      %v2267 = vadd.f32 0.0, %v2266
      %2268 = vmatmul.f32.gmra.mxu0 %v2157
      %v2269 = vpop.f32.mrf.mxu0
      %v2270 = vadd.f32 0.0, %v2269
      %2271 = vmatmul.f32.gmra.mxu0 %v2160
      %v2272 = vpop.f32.mrf.mxu0
      %v2273 = vadd.f32 0.0, %v2272
      %2274 = vmatmul.f32.gmra.mxu0 %v2163
      %v2275 = vpop.f32.mrf.mxu0
      %v2276 = vadd.f32 0.0, %v2275
      %2277 = vmatmul.f32.gmra.mxu0 %v2166
      %v2278 = vpop.f32.mrf.mxu0
      %v2279 = vadd.f32 0.0, %v2278
      %2280 = vmatmul.f32.gmra.mxu0 %v2169
      %v2281 = vpop.f32.mrf.mxu0
      %v2282 = vadd.f32 0.0, %v2281
      %2283 = vmatmul.f32.gmra.mxu0 %v2172
      %v2284 = vpop.f32.mrf.mxu0
      %v2285 = vadd.f32 0.0, %v2284
      %2286 = vmatmul.f32.gmra.mxu0 %v2175
      %v2287 = vpop.f32.mrf.mxu0
      %v2288 = vadd.f32 0.0, %v2287
      %2289 = vmatmul.f32.gmra.mxu0 %v2178
      %v2290 = vpop.f32.mrf.mxu0
      %v2291 = vadd.f32 0.0, %v2290
      %2292 = vdwg.mxu0
      %v2293 = vadd.f32 %v1727, %v2198
      %v2294 = vadd.f32 %v1730, %v2201
      %v2295 = vadd.f32 %v1733, %v2204
      %v2296 = vadd.f32 %v1736, %v2207
      %v2297 = vadd.f32 %v1739, %v2210
      %v2298 = vadd.f32 %v1742, %v2213
      %v2299 = vadd.f32 %v1745, %v2216
      %v2300 = vadd.f32 %v1748, %v2219
      %v2301 = vadd.f32 %v1751, %v2222
      %v2302 = vadd.f32 %v1754, %v2225
      %v2303 = vadd.f32 %v1757, %v2228
      %v2304 = vadd.f32 %v1760, %v2231
      %v2305 = vadd.f32 %v1763, %v2234
      %v2306 = vadd.f32 %v1766, %v2237
      %v2307 = vadd.f32 %v1769, %v2240
      %v2308 = vadd.f32 %v1772, %v2243
      %v2309 = vadd.f32 %v1775, %v2246
      %v2310 = vadd.f32 %v1778, %v2249
      %v2311 = vadd.f32 %v1781, %v2252
      %v2312 = vadd.f32 %v1784, %v2255
      %v2313 = vadd.f32 %v1787, %v2258
      %v2314 = vadd.f32 %v1790, %v2261
      %v2315 = vadd.f32 %v1793, %v2264
      %v2316 = vadd.f32 %v1796, %v2267
      %v2317 = vadd.f32 %v1799, %v2270
      %v2318 = vadd.f32 %v1802, %v2273
      %v2319 = vadd.f32 %v1805, %v2276
      %v2320 = vadd.f32 %v1808, %v2279
      %v2321 = vadd.f32 %v1811, %v2282
      %v2322 = vadd.f32 %v1814, %v2285
      %v2323 = vadd.f32 %v1817, %v2288
      %v2324 = vadd.f32 %v1820, %v2291
      %2325 = vset.pattern.permute.xlu0 3
      %2326 = vperm.xlu0 %2325, %v1012
      %v2327 = vpop.permute.xlu0 %2326
      %2329 = vset.pattern.permute.xlu0 3
      %2330 = vperm.xlu0 %2329, %v1013
      %v2331 = vpop.permute.xlu0 %2330
      %2333 = vset.pattern.permute.xlu0 3
      %2334 = vperm.xlu0 %2333, %v1014
      %v2335 = vpop.permute.xlu0 %2334
      %2337 = vset.pattern.permute.xlu0 3
      %2338 = vperm.xlu0 %2337, %v1015
      %v2339 = vpop.permute.xlu0 %2338
      %2341 = vset.pattern.permute.xlu0 3
      %2342 = vperm.xlu0 %2341, %v1016
      %v2343 = vpop.permute.xlu0 %2342
      %2345 = vset.pattern.permute.xlu0 3
      %2346 = vperm.xlu0 %2345, %v1017
      %v2347 = vpop.permute.xlu0 %2346
      %2349 = vset.pattern.permute.xlu0 3
      %2350 = vperm.xlu0 %2349, %v1018
      %v2351 = vpop.permute.xlu0 %2350
      %2353 = vset.pattern.permute.xlu0 3
      %2354 = vperm.xlu0 %2353, %v1019
      %v2355 = vpop.permute.xlu0 %2354
      %2357 = vset.pattern.permute.xlu0 3
      %2358 = vperm.xlu0 %2357, %v1020
      %v2359 = vpop.permute.xlu0 %2358
      %2361 = vset.pattern.permute.xlu0 3
      %2362 = vperm.xlu0 %2361, %v1021
      %v2363 = vpop.permute.xlu0 %2362
      %2365 = vset.pattern.permute.xlu0 3
      %2366 = vperm.xlu0 %2365, %v1022
      %v2367 = vpop.permute.xlu0 %2366
      %2369 = vset.pattern.permute.xlu0 3
      %2370 = vperm.xlu0 %2369, %v1023
      %v2371 = vpop.permute.xlu0 %2370
      %2373 = vset.pattern.permute.xlu0 3
      %2374 = vperm.xlu0 %2373, %v1024
      %v2375 = vpop.permute.xlu0 %2374
      %2377 = vset.pattern.permute.xlu0 3
      %2378 = vperm.xlu0 %2377, %v1025
      %v2379 = vpop.permute.xlu0 %2378
      %2381 = vset.pattern.permute.xlu0 3
      %2382 = vperm.xlu0 %2381, %v1026
      %v2383 = vpop.permute.xlu0 %2382
      %2385 = vset.pattern.permute.xlu0 3
      %2386 = vperm.xlu0 %2385, %v1027
      %v2387 = vpop.permute.xlu0 %2386
      %2389 = vset.pattern.permute.xlu0 3
      %2390 = vperm.xlu0 %2389, %v1028
      %v2391 = vpop.permute.xlu0 %2390
      %2393 = vset.pattern.permute.xlu0 3
      %2394 = vperm.xlu0 %2393, %v1029
      %v2395 = vpop.permute.xlu0 %2394
      %2397 = vset.pattern.permute.xlu0 3
      %2398 = vperm.xlu0 %2397, %v1030
      %v2399 = vpop.permute.xlu0 %2398
      %2401 = vset.pattern.permute.xlu0 3
      %2402 = vperm.xlu0 %2401, %v1031
      %v2403 = vpop.permute.xlu0 %2402
      %2405 = vset.pattern.permute.xlu0 3
      %2406 = vperm.xlu0 %2405, %v1032
      %v2407 = vpop.permute.xlu0 %2406
      %2409 = vset.pattern.permute.xlu0 3
      %2410 = vperm.xlu0 %2409, %v1033
      %v2411 = vpop.permute.xlu0 %2410
      %2413 = vset.pattern.permute.xlu0 3
      %2414 = vperm.xlu0 %2413, %v1034
      %v2415 = vpop.permute.xlu0 %2414
      %2417 = vset.pattern.permute.xlu0 3
      %2418 = vperm.xlu0 %2417, %v1035
      %v2419 = vpop.permute.xlu0 %2418
      %2421 = vset.pattern.permute.xlu0 3
      %2422 = vperm.xlu0 %2421, %v1036
      %v2423 = vpop.permute.xlu0 %2422
      %2425 = vset.pattern.permute.xlu0 3
      %2426 = vperm.xlu0 %2425, %v1037
      %v2427 = vpop.permute.xlu0 %2426
      %2429 = vset.pattern.permute.xlu0 3
      %2430 = vperm.xlu0 %2429, %v1038
      %v2431 = vpop.permute.xlu0 %2430
      %2433 = vset.pattern.permute.xlu0 3
      %2434 = vperm.xlu0 %2433, %v1039
      %v2435 = vpop.permute.xlu0 %2434
      %2437 = vset.pattern.permute.xlu0 3
      %2438 = vperm.xlu0 %2437, %v1040
      %v2439 = vpop.permute.xlu0 %2438
      %2441 = vset.pattern.permute.xlu0 3
      %2442 = vperm.xlu0 %2441, %v1041
      %v2443 = vpop.permute.xlu0 %2442
      %2445 = vset.pattern.permute.xlu0 3
      %2446 = vperm.xlu0 %2445, %v1042
      %v2447 = vpop.permute.xlu0 %2446
      %2449 = vset.pattern.permute.xlu0 3
      %2450 = vperm.xlu0 %2449, %v1043
      %v2451 = vpop.permute.xlu0 %2450
      %v2453 = vmul.f32 %v1011, %v2327
      %v2454 = vmul.f32 %v931, %v2331
      %v2455 = vmul.f32 %v933, %v2335
      %v2456 = vmul.f32 %v935, %v2339
      %v2457 = vmul.f32 %v937, %v2343
      %v2458 = vmul.f32 %v939, %v2347
      %v2459 = vmul.f32 %v941, %v2351
      %v2460 = vmul.f32 %v943, %v2355
      %v2461 = vmul.f32 %v945, %v2359
      %v2462 = vmul.f32 %v947, %v2363
      %v2463 = vmul.f32 %v949, %v2367
      %v2464 = vmul.f32 %v951, %v2371
      %v2465 = vmul.f32 %v953, %v2375
      %v2466 = vmul.f32 %v955, %v2379
      %v2467 = vmul.f32 %v957, %v2383
      %v2468 = vmul.f32 %v959, %v2387
      %v2469 = vmul.f32 %v961, %v2391
      %v2470 = vmul.f32 %v963, %v2395
      %v2471 = vmul.f32 %v965, %v2399
      %v2472 = vmul.f32 %v967, %v2403
      %v2473 = vmul.f32 %v969, %v2407
      %v2474 = vmul.f32 %v971, %v2411
      %v2475 = vmul.f32 %v973, %v2415
      %v2476 = vmul.f32 %v975, %v2419
      %v2477 = vmul.f32 %v977, %v2423
      %v2478 = vmul.f32 %v979, %v2427
      %v2479 = vmul.f32 %v981, %v2431
      %v2480 = vmul.f32 %v982, %v2435
      %v2481 = vmul.f32 %v890, %v2439
      %v2482 = vmul.f32 %v892, %v2443
      %v2483 = vmul.f32 %v894, %v2447
      %v2484 = vmul.f32 %v896, %v2451
      %v2485 = vld [vmem:[%s5 + $0x60] sm:$0xff]
      %v2486 = vld [vmem:[%s5 + $0x68] sm:$0xff]
      %v2487 = vld [vmem:[%s5 + $0x70] sm:$0xff]
      %v2488 = vld [vmem:[%s5 + $0x78] sm:$0xff]
      %v2490 = vsel %vm554, %v2453, 0
      %v2493 = vsel %vm554, %v2454, 0
      %v2496 = vsel %vm554, %v2455, 0
      %v2499 = vsel %vm554, %v2456, 0
      %v2502 = vsel %vm554, %v2457, 0
      %v2505 = vsel %vm554, %v2458, 0
      %v2508 = vsel %vm554, %v2459, 0
      %v2511 = vsel %vm554, %v2460, 0
      %v2514 = vsel %vm554, %v2461, 0
      %v2517 = vsel %vm554, %v2462, 0
      %v2520 = vsel %vm554, %v2463, 0
      %v2523 = vsel %vm554, %v2464, 0
      %v2526 = vsel %vm554, %v2465, 0
      %v2529 = vsel %vm554, %v2466, 0
      %v2532 = vsel %vm554, %v2467, 0
      %v2535 = vsel %vm554, %v2468, 0
      %v2538 = vsel %vm554, %v2469, 0
      %v2541 = vsel %vm554, %v2470, 0
      %v2544 = vsel %vm554, %v2471, 0
      %v2547 = vsel %vm554, %v2472, 0
      %v2550 = vsel %vm554, %v2473, 0
      %v2553 = vsel %vm554, %v2474, 0
      %v2556 = vsel %vm554, %v2475, 0
      %v2559 = vsel %vm554, %v2476, 0
      %v2562 = vsel %vm554, %v2477, 0
      %v2565 = vsel %vm554, %v2478, 0
      %v2568 = vsel %vm554, %v2479, 0
      %v2571 = vsel %vm554, %v2480, 0
      %v2574 = vsel %vm554, %v2481, 0
      %v2577 = vsel %vm554, %v2482, 0
      %v2580 = vsel %vm554, %v2483, 0
      %v2583 = vsel %vm554, %v2484, 0
      %2585 = vmatpush.msra.mxu0 0.0
      %2586 = vmatpush.msra.mxu0 0.0
      %2587 = vmatpush.msra.mxu0 0.0
      %2588 = vmatpush.msra.mxu0 0.0
      %2589 = vmatpush.msra.mxu0 0.0
      %2590 = vmatpush.msra.mxu0 0.0
      %2591 = vmatpush.msra.mxu0 0.0
      %2592 = vmatpush.msra.mxu0 0.0
      %2593 = vmatpush.msra.mxu0 0.0
      %2594 = vmatpush.msra.mxu0 0.0
      %2595 = vmatpush.msra.mxu0 0.0
      %2596 = vmatpush.msra.mxu0 0.0
      %2597 = vmatpush.msra.mxu0 %v2488
      %2598 = vmatpush.msra.mxu0 %v2487
      %2599 = vmatpush.msra.mxu0 %v2486
      %2600 = vmatpush.msra.mxu0 %v2485
      %2601 = vmatmul.f32.gmra.mxu0 %v2490
      %v2602 = vpop.f32.mrf.mxu0
      %v2603 = vadd.f32 0.0, %v2602
      %2604 = vmatmul.f32.gmra.mxu0 %v2493
      %v2605 = vpop.f32.mrf.mxu0
      %v2606 = vadd.f32 0.0, %v2605
      %2607 = vmatmul.f32.gmra.mxu0 %v2496
      %v2608 = vpop.f32.mrf.mxu0
      %v2609 = vadd.f32 0.0, %v2608
      %2610 = vmatmul.f32.gmra.mxu0 %v2499
      %v2611 = vpop.f32.mrf.mxu0
      %v2612 = vadd.f32 0.0, %v2611
      %2613 = vmatmul.f32.gmra.mxu0 %v2502
      %v2614 = vpop.f32.mrf.mxu0
      %v2615 = vadd.f32 0.0, %v2614
      %2616 = vmatmul.f32.gmra.mxu0 %v2505
      %v2617 = vpop.f32.mrf.mxu0
      %v2618 = vadd.f32 0.0, %v2617
      %2619 = vmatmul.f32.gmra.mxu0 %v2508
      %v2620 = vpop.f32.mrf.mxu0
      %v2621 = vadd.f32 0.0, %v2620
      %2622 = vmatmul.f32.gmra.mxu0 %v2511
      %v2623 = vpop.f32.mrf.mxu0
      %v2624 = vadd.f32 0.0, %v2623
      %2625 = vmatmul.f32.gmra.mxu0 %v2514
      %v2626 = vpop.f32.mrf.mxu0
      %v2627 = vadd.f32 0.0, %v2626
      %2628 = vmatmul.f32.gmra.mxu0 %v2517
      %v2629 = vpop.f32.mrf.mxu0
      %v2630 = vadd.f32 0.0, %v2629
      %2631 = vmatmul.f32.gmra.mxu0 %v2520
      %v2632 = vpop.f32.mrf.mxu0
      %v2633 = vadd.f32 0.0, %v2632
      %2634 = vmatmul.f32.gmra.mxu0 %v2523
      %v2635 = vpop.f32.mrf.mxu0
      %v2636 = vadd.f32 0.0, %v2635
      %2637 = vmatmul.f32.gmra.mxu0 %v2526
      %v2638 = vpop.f32.mrf.mxu0
      %v2639 = vadd.f32 0.0, %v2638
      %2640 = vmatmul.f32.gmra.mxu0 %v2529
      %v2641 = vpop.f32.mrf.mxu0
      %v2642 = vadd.f32 0.0, %v2641
      %2643 = vmatmul.f32.gmra.mxu0 %v2532
      %v2644 = vpop.f32.mrf.mxu0
      %v2645 = vadd.f32 0.0, %v2644
      %2646 = vmatmul.f32.gmra.mxu0 %v2535
      %v2647 = vpop.f32.mrf.mxu0
      %v2648 = vadd.f32 0.0, %v2647
      %2649 = vmatmul.f32.gmra.mxu0 %v2538
      %v2650 = vpop.f32.mrf.mxu0
      %v2651 = vadd.f32 0.0, %v2650
      %2652 = vmatmul.f32.gmra.mxu0 %v2541
      %v2653 = vpop.f32.mrf.mxu0
      %v2654 = vadd.f32 0.0, %v2653
      %2655 = vmatmul.f32.gmra.mxu0 %v2544
      %v2656 = vpop.f32.mrf.mxu0
      %v2657 = vadd.f32 0.0, %v2656
      %2658 = vmatmul.f32.gmra.mxu0 %v2547
      %v2659 = vpop.f32.mrf.mxu0
      %v2660 = vadd.f32 0.0, %v2659
      %2661 = vmatmul.f32.gmra.mxu0 %v2550
      %v2662 = vpop.f32.mrf.mxu0
      %v2663 = vadd.f32 0.0, %v2662
      %2664 = vmatmul.f32.gmra.mxu0 %v2553
      %v2665 = vpop.f32.mrf.mxu0
      %v2666 = vadd.f32 0.0, %v2665
      %2667 = vmatmul.f32.gmra.mxu0 %v2556
      %v2668 = vpop.f32.mrf.mxu0
      %v2669 = vadd.f32 0.0, %v2668
      %2670 = vmatmul.f32.gmra.mxu0 %v2559
      %v2671 = vpop.f32.mrf.mxu0
      %v2672 = vadd.f32 0.0, %v2671
      %2673 = vmatmul.f32.gmra.mxu0 %v2562
      %v2674 = vpop.f32.mrf.mxu0
      %v2675 = vadd.f32 0.0, %v2674
      %2676 = vmatmul.f32.gmra.mxu0 %v2565
      %v2677 = vpop.f32.mrf.mxu0
      %v2678 = vadd.f32 0.0, %v2677
      %2679 = vmatmul.f32.gmra.mxu0 %v2568
      %v2680 = vpop.f32.mrf.mxu0
      %v2681 = vadd.f32 0.0, %v2680
      %2682 = vmatmul.f32.gmra.mxu0 %v2571
      %v2683 = vpop.f32.mrf.mxu0
      %v2684 = vadd.f32 0.0, %v2683
      %2685 = vmatmul.f32.gmra.mxu0 %v2574
      %v2686 = vpop.f32.mrf.mxu0
      %v2687 = vadd.f32 0.0, %v2686
      %2688 = vmatmul.f32.gmra.mxu0 %v2577
      %v2689 = vpop.f32.mrf.mxu0
      %v2690 = vadd.f32 0.0, %v2689
      %2691 = vmatmul.f32.gmra.mxu0 %v2580
      %v2692 = vpop.f32.mrf.mxu0
      %v2693 = vadd.f32 0.0, %v2692
      %2694 = vmatmul.f32.gmra.mxu0 %v2583
      %v2695 = vpop.f32.mrf.mxu0
      %v2696 = vadd.f32 0.0, %v2695
      %2697 = vdwg.mxu0
      %v2698 = vadd.f32 %v2293, %v2603
      %v2699 = vadd.f32 %v2294, %v2606
      %v2700 = vadd.f32 %v2295, %v2609
      %v2701 = vadd.f32 %v2296, %v2612
      %v2702 = vadd.f32 %v2297, %v2615
      %v2703 = vadd.f32 %v2298, %v2618
      %v2704 = vadd.f32 %v2299, %v2621
      %v2705 = vadd.f32 %v2300, %v2624
      %v2706 = vadd.f32 %v2301, %v2627
      %v2707 = vadd.f32 %v2302, %v2630
      %v2708 = vadd.f32 %v2303, %v2633
      %v2709 = vadd.f32 %v2304, %v2636
      %v2710 = vadd.f32 %v2305, %v2639
      %v2711 = vadd.f32 %v2306, %v2642
      %v2712 = vadd.f32 %v2307, %v2645
      %v2713 = vadd.f32 %v2308, %v2648
      %v2714 = vadd.f32 %v2309, %v2651
      %v2715 = vadd.f32 %v2310, %v2654
      %v2716 = vadd.f32 %v2311, %v2657
      %v2717 = vadd.f32 %v2312, %v2660
      %v2718 = vadd.f32 %v2313, %v2663
      %v2719 = vadd.f32 %v2314, %v2666
      %v2720 = vadd.f32 %v2315, %v2669
      %v2721 = vadd.f32 %v2316, %v2672
      %v2722 = vadd.f32 %v2317, %v2675
      %v2723 = vadd.f32 %v2318, %v2678
      %v2724 = vadd.f32 %v2319, %v2681
      %v2725 = vadd.f32 %v2320, %v2684
      %v2726 = vadd.f32 %v2321, %v2687
      %v2727 = vadd.f32 %v2322, %v2690
      %v2728 = vadd.f32 %v2323, %v2693
      %v2729 = vadd.f32 %v2324, %v2696
      %v2730 = vld [vmem:[%s5 + $0x80] sm:$0xff]
      %v2731 = vld [vmem:[%s5 + $0x88] sm:$0xff]
      %v2732 = vld [vmem:[%s5 + $0x90] sm:$0xff]
      %v2733 = vld [vmem:[%s5 + $0x98] sm:$0xff]
      %v2734 = vsel %vm554, %v850, 0
      %v2736 = vsel %vm554, %v851, 0
      %v2738 = vsel %vm554, %v852, 0
      %v2740 = vsel %vm554, %v853, 0
      %v2742 = vsel %vm554, %v854, 0
      %v2744 = vsel %vm554, %v855, 0
      %v2746 = vsel %vm554, %v856, 0
      %v2748 = vsel %vm554, %v857, 0
      %v2750 = vsel %vm554, %v858, 0
      %v2752 = vsel %vm554, %v859, 0
      %v2754 = vsel %vm554, %v860, 0
      %v2756 = vsel %vm554, %v861, 0
      %v2758 = vsel %vm554, %v862, 0
      %v2760 = vsel %vm554, %v863, 0
      %v2762 = vsel %vm554, %v864, 0
      %v2764 = vsel %vm554, %v865, 0
      %v2766 = vsel %vm554, %v866, 0
      %v2768 = vsel %vm554, %v867, 0
      %v2770 = vsel %vm554, %v868, 0
      %v2772 = vsel %vm554, %v869, 0
      %v2774 = vsel %vm554, %v870, 0
      %v2776 = vsel %vm554, %v871, 0
      %v2778 = vsel %vm554, %v872, 0
      %v2780 = vsel %vm554, %v873, 0
      %v2782 = vsel %vm554, %v874, 0
      %v2784 = vsel %vm554, %v875, 0
      %v2786 = vsel %vm554, %v876, 0
      %v2788 = vsel %vm554, %v877, 0
      %v2790 = vsel %vm554, %v878, 0
      %v2792 = vsel %vm554, %v879, 0
      %v2794 = vsel %vm554, %v880, 0
      %v2796 = vsel %vm554, %v881, 0
      %2798 = vmatpush.msra.mxu0 0.0
      %2799 = vmatpush.msra.mxu0 0.0
      %2800 = vmatpush.msra.mxu0 0.0
      %2801 = vmatpush.msra.mxu0 0.0
      %2802 = vmatpush.msra.mxu0 0.0
      %2803 = vmatpush.msra.mxu0 0.0
      %2804 = vmatpush.msra.mxu0 0.0
      %2805 = vmatpush.msra.mxu0 0.0
      %2806 = vmatpush.msra.mxu0 0.0
      %2807 = vmatpush.msra.mxu0 0.0
      %2808 = vmatpush.msra.mxu0 0.0
      %2809 = vmatpush.msra.mxu0 0.0
      %2810 = vmatpush.msra.mxu0 %v2733
      %2811 = vmatpush.msra.mxu0 %v2732
      %2812 = vmatpush.msra.mxu0 %v2731
      %2813 = vmatpush.msra.mxu0 %v2730
      %2814 = vmatmul.f32.gmra.mxu0 %v2734
      %v2815 = vpop.f32.mrf.mxu0
      %v2816 = vadd.f32 0.0, %v2815
      %2817 = vmatmul.f32.gmra.mxu0 %v2736
      %v2818 = vpop.f32.mrf.mxu0
      %v2819 = vadd.f32 0.0, %v2818
      %2820 = vmatmul.f32.gmra.mxu0 %v2738
      %v2821 = vpop.f32.mrf.mxu0
      %v2822 = vadd.f32 0.0, %v2821
      %2823 = vmatmul.f32.gmra.mxu0 %v2740
      %v2824 = vpop.f32.mrf.mxu0
      %v2825 = vadd.f32 0.0, %v2824
      %2826 = vmatmul.f32.gmra.mxu0 %v2742
      %v2827 = vpop.f32.mrf.mxu0
      %v2828 = vadd.f32 0.0, %v2827
      %2829 = vmatmul.f32.gmra.mxu0 %v2744
      %v2830 = vpop.f32.mrf.mxu0
      %v2831 = vadd.f32 0.0, %v2830
      %2832 = vmatmul.f32.gmra.mxu0 %v2746
      %v2833 = vpop.f32.mrf.mxu0
      %v2834 = vadd.f32 0.0, %v2833
      %2835 = vmatmul.f32.gmra.mxu0 %v2748
      %v2836 = vpop.f32.mrf.mxu0
      %v2837 = vadd.f32 0.0, %v2836
      %2838 = vmatmul.f32.gmra.mxu0 %v2750
      %v2839 = vpop.f32.mrf.mxu0
      %v2840 = vadd.f32 0.0, %v2839
      %2841 = vmatmul.f32.gmra.mxu0 %v2752
      %v2842 = vpop.f32.mrf.mxu0
      %v2843 = vadd.f32 0.0, %v2842
      %2844 = vmatmul.f32.gmra.mxu0 %v2754
      %v2845 = vpop.f32.mrf.mxu0
      %v2846 = vadd.f32 0.0, %v2845
      %2847 = vmatmul.f32.gmra.mxu0 %v2756
      %v2848 = vpop.f32.mrf.mxu0
      %v2849 = vadd.f32 0.0, %v2848
      %2850 = vmatmul.f32.gmra.mxu0 %v2758
      %v2851 = vpop.f32.mrf.mxu0
      %v2852 = vadd.f32 0.0, %v2851
      %2853 = vmatmul.f32.gmra.mxu0 %v2760
      %v2854 = vpop.f32.mrf.mxu0
      %v2855 = vadd.f32 0.0, %v2854
      %2856 = vmatmul.f32.gmra.mxu0 %v2762
      %v2857 = vpop.f32.mrf.mxu0
      %v2858 = vadd.f32 0.0, %v2857
      %2859 = vmatmul.f32.gmra.mxu0 %v2764
      %v2860 = vpop.f32.mrf.mxu0
      %v2861 = vadd.f32 0.0, %v2860
      %2862 = vmatmul.f32.gmra.mxu0 %v2766
      %v2863 = vpop.f32.mrf.mxu0
      %v2864 = vadd.f32 0.0, %v2863
      %2865 = vmatmul.f32.gmra.mxu0 %v2768
      %v2866 = vpop.f32.mrf.mxu0
      %v2867 = vadd.f32 0.0, %v2866
      %2868 = vmatmul.f32.gmra.mxu0 %v2770
      %v2869 = vpop.f32.mrf.mxu0
      %v2870 = vadd.f32 0.0, %v2869
      %2871 = vmatmul.f32.gmra.mxu0 %v2772
      %v2872 = vpop.f32.mrf.mxu0
      %v2873 = vadd.f32 0.0, %v2872
      %2874 = vmatmul.f32.gmra.mxu0 %v2774
      %v2875 = vpop.f32.mrf.mxu0
      %v2876 = vadd.f32 0.0, %v2875
      %2877 = vmatmul.f32.gmra.mxu0 %v2776
      %v2878 = vpop.f32.mrf.mxu0
      %v2879 = vadd.f32 0.0, %v2878
      %2880 = vmatmul.f32.gmra.mxu0 %v2778
      %v2881 = vpop.f32.mrf.mxu0
      %v2882 = vadd.f32 0.0, %v2881
      %2883 = vmatmul.f32.gmra.mxu0 %v2780
      %v2884 = vpop.f32.mrf.mxu0
      %v2885 = vadd.f32 0.0, %v2884
      %2886 = vmatmul.f32.gmra.mxu0 %v2782
      %v2887 = vpop.f32.mrf.mxu0
      %v2888 = vadd.f32 0.0, %v2887
      %2889 = vmatmul.f32.gmra.mxu0 %v2784
      %v2890 = vpop.f32.mrf.mxu0
      %v2891 = vadd.f32 0.0, %v2890
      %2892 = vmatmul.f32.gmra.mxu0 %v2786
      %v2893 = vpop.f32.mrf.mxu0
      %v2894 = vadd.f32 0.0, %v2893
      %2895 = vmatmul.f32.gmra.mxu0 %v2788
      %v2896 = vpop.f32.mrf.mxu0
      %v2897 = vadd.f32 0.0, %v2896
      %2898 = vmatmul.f32.gmra.mxu0 %v2790
      %v2899 = vpop.f32.mrf.mxu0
      %v2900 = vadd.f32 0.0, %v2899
      %2901 = vmatmul.f32.gmra.mxu0 %v2792
      %v2902 = vpop.f32.mrf.mxu0
      %v2903 = vadd.f32 0.0, %v2902
      %2904 = vmatmul.f32.gmra.mxu0 %v2794
      %v2905 = vpop.f32.mrf.mxu0
      %v2906 = vadd.f32 0.0, %v2905
      %2907 = vmatmul.f32.gmra.mxu0 %v2796
      %v2908 = vpop.f32.mrf.mxu0
      %v2909 = vadd.f32 0.0, %v2908
      %2910 = vdwg.mxu0
      %v2911 = vadd.f32 %v2698, %v2816
      %v2912 = vadd.f32 %v2699, %v2819
      %v2913 = vadd.f32 %v2700, %v2822
      %v2914 = vadd.f32 %v2701, %v2825
      %v2915 = vadd.f32 %v2702, %v2828
      %v2916 = vadd.f32 %v2703, %v2831
      %v2917 = vadd.f32 %v2704, %v2834
      %v2918 = vadd.f32 %v2705, %v2837
      %v2919 = vadd.f32 %v2706, %v2840
      %v2920 = vadd.f32 %v2707, %v2843
      %v2921 = vadd.f32 %v2708, %v2846
      %v2922 = vadd.f32 %v2709, %v2849
      %v2923 = vadd.f32 %v2710, %v2852
      %v2924 = vadd.f32 %v2711, %v2855
      %v2925 = vadd.f32 %v2712, %v2858
      %v2926 = vadd.f32 %v2713, %v2861
      %v2927 = vadd.f32 %v2714, %v2864
      %v2928 = vadd.f32 %v2715, %v2867
      %v2929 = vadd.f32 %v2716, %v2870
      %v2930 = vadd.f32 %v2717, %v2873
      %v2931 = vadd.f32 %v2718, %v2876
      %v2932 = vadd.f32 %v2719, %v2879
      %v2933 = vadd.f32 %v2720, %v2882
      %v2934 = vadd.f32 %v2721, %v2885
      %v2935 = vadd.f32 %v2722, %v2888
      %v2936 = vadd.f32 %v2723, %v2891
      %v2937 = vadd.f32 %v2724, %v2894
      %v2938 = vadd.f32 %v2725, %v2897
      %v2939 = vadd.f32 %v2726, %v2900
      %v2940 = vadd.f32 %v2727, %v2903
      %v2941 = vadd.f32 %v2728, %v2906
      %v2942 = vadd.f32 %v2729, %v2909
      %2943 = vset.pattern.permute.xlu0 5
      %2944 = vperm.xlu0 %2943, %v1012
      %v2945 = vpop.permute.xlu0 %2944
      %2947 = vset.pattern.permute.xlu0 5
      %2948 = vperm.xlu0 %2947, %v1013
      %v2949 = vpop.permute.xlu0 %2948
      %2951 = vset.pattern.permute.xlu0 5
      %2952 = vperm.xlu0 %2951, %v1014
      %v2953 = vpop.permute.xlu0 %2952
      %2955 = vset.pattern.permute.xlu0 5
      %2956 = vperm.xlu0 %2955, %v1015
      %v2957 = vpop.permute.xlu0 %2956
      %2959 = vset.pattern.permute.xlu0 5
      %2960 = vperm.xlu0 %2959, %v1016
      %v2961 = vpop.permute.xlu0 %2960
      %2963 = vset.pattern.permute.xlu0 5
      %2964 = vperm.xlu0 %2963, %v1017
      %v2965 = vpop.permute.xlu0 %2964
      %2967 = vset.pattern.permute.xlu0 5
      %2968 = vperm.xlu0 %2967, %v1018
      %v2969 = vpop.permute.xlu0 %2968
      %2971 = vset.pattern.permute.xlu0 5
      %2972 = vperm.xlu0 %2971, %v1019
      %v2973 = vpop.permute.xlu0 %2972
      %2975 = vset.pattern.permute.xlu0 5
      %2976 = vperm.xlu0 %2975, %v1020
      %v2977 = vpop.permute.xlu0 %2976
      %2979 = vset.pattern.permute.xlu0 5
      %2980 = vperm.xlu0 %2979, %v1021
      %v2981 = vpop.permute.xlu0 %2980
      %2983 = vset.pattern.permute.xlu0 5
      %2984 = vperm.xlu0 %2983, %v1022
      %v2985 = vpop.permute.xlu0 %2984
      %2987 = vset.pattern.permute.xlu0 5
      %2988 = vperm.xlu0 %2987, %v1023
      %v2989 = vpop.permute.xlu0 %2988
      %2991 = vset.pattern.permute.xlu0 5
      %2992 = vperm.xlu0 %2991, %v1024
      %v2993 = vpop.permute.xlu0 %2992
      %2995 = vset.pattern.permute.xlu0 5
      %2996 = vperm.xlu0 %2995, %v1025
      %v2997 = vpop.permute.xlu0 %2996
      %2999 = vset.pattern.permute.xlu0 5
      %3000 = vperm.xlu0 %2999, %v1026
      %v3001 = vpop.permute.xlu0 %3000
      %3003 = vset.pattern.permute.xlu0 5
      %3004 = vperm.xlu0 %3003, %v1027
      %v3005 = vpop.permute.xlu0 %3004
      %3007 = vset.pattern.permute.xlu0 5
      %3008 = vperm.xlu0 %3007, %v1028
      %v3009 = vpop.permute.xlu0 %3008
      %3011 = vset.pattern.permute.xlu0 5
      %3012 = vperm.xlu0 %3011, %v1029
      %v3013 = vpop.permute.xlu0 %3012
      %3015 = vset.pattern.permute.xlu0 5
      %3016 = vperm.xlu0 %3015, %v1030
      %v3017 = vpop.permute.xlu0 %3016
      %3019 = vset.pattern.permute.xlu0 5
      %3020 = vperm.xlu0 %3019, %v1031
      %v3021 = vpop.permute.xlu0 %3020
      %3023 = vset.pattern.permute.xlu0 5
      %3024 = vperm.xlu0 %3023, %v1032
      %v3025 = vpop.permute.xlu0 %3024
      %3027 = vset.pattern.permute.xlu0 5
      %3028 = vperm.xlu0 %3027, %v1033
      %v3029 = vpop.permute.xlu0 %3028
      %3031 = vset.pattern.permute.xlu0 5
      %3032 = vperm.xlu0 %3031, %v1034
      %v3033 = vpop.permute.xlu0 %3032
      %3035 = vset.pattern.permute.xlu0 5
      %3036 = vperm.xlu0 %3035, %v1035
      %v3037 = vpop.permute.xlu0 %3036
      %3039 = vset.pattern.permute.xlu0 5
      %3040 = vperm.xlu0 %3039, %v1036
      %v3041 = vpop.permute.xlu0 %3040
      %3043 = vset.pattern.permute.xlu0 5
      %3044 = vperm.xlu0 %3043, %v1037
      %v3045 = vpop.permute.xlu0 %3044
      %3047 = vset.pattern.permute.xlu0 5
      %3048 = vperm.xlu0 %3047, %v1038
      %v3049 = vpop.permute.xlu0 %3048
      %3051 = vset.pattern.permute.xlu0 5
      %3052 = vperm.xlu0 %3051, %v1039
      %v3053 = vpop.permute.xlu0 %3052
      %3055 = vset.pattern.permute.xlu0 5
      %3056 = vperm.xlu0 %3055, %v1040
      %v3057 = vpop.permute.xlu0 %3056
      %3059 = vset.pattern.permute.xlu0 5
      %3060 = vperm.xlu0 %3059, %v1041
      %v3061 = vpop.permute.xlu0 %3060
      %3063 = vset.pattern.permute.xlu0 5
      %3064 = vperm.xlu0 %3063, %v1042
      %v3065 = vpop.permute.xlu0 %3064
      %3067 = vset.pattern.permute.xlu0 5
      %3068 = vperm.xlu0 %3067, %v1043
      %v3069 = vpop.permute.xlu0 %3068
      %v3071 = vmul.f32 %v1836, %v2945
      %v3072 = vmul.f32 %v1838, %v2949
      %v3073 = vmul.f32 %v1840, %v2953
      %v3074 = vmul.f32 %v1842, %v2957
      %v3075 = vmul.f32 %v1844, %v2961
      %v3076 = vmul.f32 %v1846, %v2965
      %v3077 = vmul.f32 %v1848, %v2969
      %v3078 = vmul.f32 %v1850, %v2973
      %v3079 = vmul.f32 %v1852, %v2977
      %v3080 = vmul.f32 %v1854, %v2981
      %v3081 = vmul.f32 %v1856, %v2985
      %v3082 = vmul.f32 %v1858, %v2989
      %v3083 = vmul.f32 %v1860, %v2993
      %v3084 = vmul.f32 %v1862, %v2997
      %v3085 = vmul.f32 %v1864, %v3001
      %v3086 = vmul.f32 %v1866, %v3005
      %v3087 = vmul.f32 %v1868, %v3009
      %v3088 = vmul.f32 %v1870, %v3013
      %v3089 = vmul.f32 %v1872, %v3017
      %v3090 = vmul.f32 %v1874, %v3021
      %v3091 = vmul.f32 %v1876, %v3025
      %v3092 = vmul.f32 %v1878, %v3029
      %v3093 = vmul.f32 %v1880, %v3033
      %v3094 = vmul.f32 %v1882, %v3037
      %v3095 = vmul.f32 %v1884, %v3041
      %v3096 = vmul.f32 %v1886, %v3045
      %v3097 = vmul.f32 %v1888, %v3049
      %v3098 = vmul.f32 %v1889, %v3053
      %v3099 = vmul.f32 %v1825, %v3057
      %v3100 = vmul.f32 %v1827, %v3061
      %v3101 = vmul.f32 %v1829, %v3065
      %v3102 = vmul.f32 %v1919, %v3069
      %v3103 = vld [vmem:[%s5 + $0xa0] sm:$0xff]
      %v3104 = vld [vmem:[%s5 + $0xa8] sm:$0xff]
      %v3105 = vld [vmem:[%s5 + $0xb0] sm:$0xff]
      %v3106 = vld [vmem:[%s5 + $0xb8] sm:$0xff]
      %v3108 = vsel %vm554, %v3071, 0
      %v3111 = vsel %vm554, %v3072, 0
      %v3114 = vsel %vm554, %v3073, 0
      %v3117 = vsel %vm554, %v3074, 0
      %v3120 = vsel %vm554, %v3075, 0
      %v3123 = vsel %vm554, %v3076, 0
      %v3126 = vsel %vm554, %v3077, 0
      %v3129 = vsel %vm554, %v3078, 0
      %v3132 = vsel %vm554, %v3079, 0
      %v3135 = vsel %vm554, %v3080, 0
      %v3138 = vsel %vm554, %v3081, 0
      %v3141 = vsel %vm554, %v3082, 0
      %v3144 = vsel %vm554, %v3083, 0
      %v3147 = vsel %vm554, %v3084, 0
      %v3150 = vsel %vm554, %v3085, 0
      %v3153 = vsel %vm554, %v3086, 0
      %v3156 = vsel %vm554, %v3087, 0
      %v3159 = vsel %vm554, %v3088, 0
      %v3162 = vsel %vm554, %v3089, 0
      %v3165 = vsel %vm554, %v3090, 0
      %v3168 = vsel %vm554, %v3091, 0
      %v3171 = vsel %vm554, %v3092, 0
      %v3174 = vsel %vm554, %v3093, 0
      %v3177 = vsel %vm554, %v3094, 0
      %v3180 = vsel %vm554, %v3095, 0
      %v3183 = vsel %vm554, %v3096, 0
      %v3186 = vsel %vm554, %v3097, 0
      %v3189 = vsel %vm554, %v3098, 0
      %v3192 = vsel %vm554, %v3099, 0
      %v3195 = vsel %vm554, %v3100, 0
      %v3198 = vsel %vm554, %v3101, 0
      %v3201 = vsel %vm554, %v3102, 0
      %3203 = vmatpush.msra.mxu0 0.0
      %3204 = vmatpush.msra.mxu0 0.0
      %3205 = vmatpush.msra.mxu0 0.0
      %3206 = vmatpush.msra.mxu0 0.0
      %3207 = vmatpush.msra.mxu0 0.0
      %3208 = vmatpush.msra.mxu0 0.0
      %3209 = vmatpush.msra.mxu0 0.0
      %3210 = vmatpush.msra.mxu0 0.0
      %3211 = vmatpush.msra.mxu0 0.0
      %3212 = vmatpush.msra.mxu0 0.0
      %3213 = vmatpush.msra.mxu0 0.0
      %3214 = vmatpush.msra.mxu0 0.0
      %3215 = vmatpush.msra.mxu0 %v3106
      %3216 = vmatpush.msra.mxu0 %v3105
      %3217 = vmatpush.msra.mxu0 %v3104
      %3218 = vmatpush.msra.mxu0 %v3103
      %3219 = vmatmul.f32.gmra.mxu0 %v3108
      %v3220 = vpop.f32.mrf.mxu0
      %v3221 = vadd.f32 0.0, %v3220
      %3222 = vmatmul.f32.gmra.mxu0 %v3111
      %v3223 = vpop.f32.mrf.mxu0
      %v3224 = vadd.f32 0.0, %v3223
      %3225 = vmatmul.f32.gmra.mxu0 %v3114
      %v3226 = vpop.f32.mrf.mxu0
      %v3227 = vadd.f32 0.0, %v3226
      %3228 = vmatmul.f32.gmra.mxu0 %v3117
      %v3229 = vpop.f32.mrf.mxu0
      %v3230 = vadd.f32 0.0, %v3229
      %3231 = vmatmul.f32.gmra.mxu0 %v3120
      %v3232 = vpop.f32.mrf.mxu0
      %v3233 = vadd.f32 0.0, %v3232
      %3234 = vmatmul.f32.gmra.mxu0 %v3123
      %v3235 = vpop.f32.mrf.mxu0
      %v3236 = vadd.f32 0.0, %v3235
      %3237 = vmatmul.f32.gmra.mxu0 %v3126
      %v3238 = vpop.f32.mrf.mxu0
      %v3239 = vadd.f32 0.0, %v3238
      %3240 = vmatmul.f32.gmra.mxu0 %v3129
      %v3241 = vpop.f32.mrf.mxu0
      %v3242 = vadd.f32 0.0, %v3241
      %3243 = vmatmul.f32.gmra.mxu0 %v3132
      %v3244 = vpop.f32.mrf.mxu0
      %v3245 = vadd.f32 0.0, %v3244
      %3246 = vmatmul.f32.gmra.mxu0 %v3135
      %v3247 = vpop.f32.mrf.mxu0
      %v3248 = vadd.f32 0.0, %v3247
      %3249 = vmatmul.f32.gmra.mxu0 %v3138
      %v3250 = vpop.f32.mrf.mxu0
      %v3251 = vadd.f32 0.0, %v3250
      %3252 = vmatmul.f32.gmra.mxu0 %v3141
      %v3253 = vpop.f32.mrf.mxu0
      %v3254 = vadd.f32 0.0, %v3253
      %3255 = vmatmul.f32.gmra.mxu0 %v3144
      %v3256 = vpop.f32.mrf.mxu0
      %v3257 = vadd.f32 0.0, %v3256
      %3258 = vmatmul.f32.gmra.mxu0 %v3147
      %v3259 = vpop.f32.mrf.mxu0
      %v3260 = vadd.f32 0.0, %v3259
      %3261 = vmatmul.f32.gmra.mxu0 %v3150
      %v3262 = vpop.f32.mrf.mxu0
      %v3263 = vadd.f32 0.0, %v3262
      %3264 = vmatmul.f32.gmra.mxu0 %v3153
      %v3265 = vpop.f32.mrf.mxu0
      %v3266 = vadd.f32 0.0, %v3265
      %3267 = vmatmul.f32.gmra.mxu0 %v3156
      %v3268 = vpop.f32.mrf.mxu0
      %v3269 = vadd.f32 0.0, %v3268
      %3270 = vmatmul.f32.gmra.mxu0 %v3159
      %v3271 = vpop.f32.mrf.mxu0
      %v3272 = vadd.f32 0.0, %v3271
      %3273 = vmatmul.f32.gmra.mxu0 %v3162
      %v3274 = vpop.f32.mrf.mxu0
      %v3275 = vadd.f32 0.0, %v3274
      %3276 = vmatmul.f32.gmra.mxu0 %v3165
      %v3277 = vpop.f32.mrf.mxu0
      %v3278 = vadd.f32 0.0, %v3277
      %3279 = vmatmul.f32.gmra.mxu0 %v3168
      %v3280 = vpop.f32.mrf.mxu0
      %v3281 = vadd.f32 0.0, %v3280
      %3282 = vmatmul.f32.gmra.mxu0 %v3171
      %v3283 = vpop.f32.mrf.mxu0
      %v3284 = vadd.f32 0.0, %v3283
      %3285 = vmatmul.f32.gmra.mxu0 %v3174
      %v3286 = vpop.f32.mrf.mxu0
      %v3287 = vadd.f32 0.0, %v3286
      %3288 = vmatmul.f32.gmra.mxu0 %v3177
      %v3289 = vpop.f32.mrf.mxu0
      %v3290 = vadd.f32 0.0, %v3289
      %3291 = vmatmul.f32.gmra.mxu0 %v3180
      %v3292 = vpop.f32.mrf.mxu0
      %v3293 = vadd.f32 0.0, %v3292
      %3294 = vmatmul.f32.gmra.mxu0 %v3183
      %v3295 = vpop.f32.mrf.mxu0
      %v3296 = vadd.f32 0.0, %v3295
      %3297 = vmatmul.f32.gmra.mxu0 %v3186
      %v3298 = vpop.f32.mrf.mxu0
      %v3299 = vadd.f32 0.0, %v3298
      %3300 = vmatmul.f32.gmra.mxu0 %v3189
      %v3301 = vpop.f32.mrf.mxu0
      %v3302 = vadd.f32 0.0, %v3301
      %3303 = vmatmul.f32.gmra.mxu0 %v3192
      %v3304 = vpop.f32.mrf.mxu0
      %v3305 = vadd.f32 0.0, %v3304
      %3306 = vmatmul.f32.gmra.mxu0 %v3195
      %v3307 = vpop.f32.mrf.mxu0
      %v3308 = vadd.f32 0.0, %v3307
      %3309 = vmatmul.f32.gmra.mxu0 %v3198
      %v3310 = vpop.f32.mrf.mxu0
      %v3311 = vadd.f32 0.0, %v3310
      %3312 = vmatmul.f32.gmra.mxu0 %v3201
      %v3313 = vpop.f32.mrf.mxu0
      %v3314 = vadd.f32 0.0, %v3313
      %3315 = vdwg.mxu0
      %v3316 = vadd.f32 %v2911, %v3221
      %v3317 = vadd.f32 %v2912, %v3224
      %v3318 = vadd.f32 %v2913, %v3227
      %v3319 = vadd.f32 %v2914, %v3230
      %v3320 = vadd.f32 %v2915, %v3233
      %v3321 = vadd.f32 %v2916, %v3236
      %v3322 = vadd.f32 %v2917, %v3239
      %v3323 = vadd.f32 %v2918, %v3242
      %v3324 = vadd.f32 %v2919, %v3245
      %v3325 = vadd.f32 %v2920, %v3248
      %v3326 = vadd.f32 %v2921, %v3251
      %v3327 = vadd.f32 %v2922, %v3254
      %v3328 = vadd.f32 %v2923, %v3257
      %v3329 = vadd.f32 %v2924, %v3260
      %v3330 = vadd.f32 %v2925, %v3263
      %v3331 = vadd.f32 %v2926, %v3266
      %v3332 = vadd.f32 %v2927, %v3269
      %v3333 = vadd.f32 %v2928, %v3272
      %v3334 = vadd.f32 %v2929, %v3275
      %v3335 = vadd.f32 %v2930, %v3278
      %v3336 = vadd.f32 %v2931, %v3281
      %v3337 = vadd.f32 %v2932, %v3284
      %v3338 = vadd.f32 %v2933, %v3287
      %v3339 = vadd.f32 %v2934, %v3290
      %v3340 = vadd.f32 %v2935, %v3293
      %v3341 = vadd.f32 %v2936, %v3296
      %v3342 = vadd.f32 %v2937, %v3299
      %v3343 = vadd.f32 %v2938, %v3302
      %v3344 = vadd.f32 %v2939, %v3305
      %v3345 = vadd.f32 %v2940, %v3308
      %v3346 = vadd.f32 %v2941, %v3311
      %v3347 = vadd.f32 %v2942, %v3314
      %3348 = vset.pattern.permute.xlu0 6
      %3349 = vperm.xlu0 %3348, %v1012
      %v3350 = vpop.permute.xlu0 %3349
      %3352 = vset.pattern.permute.xlu0 6
      %3353 = vperm.xlu0 %3352, %v1013
      %v3354 = vpop.permute.xlu0 %3353
      %3356 = vset.pattern.permute.xlu0 6
      %3357 = vperm.xlu0 %3356, %v1014
      %v3358 = vpop.permute.xlu0 %3357
      %3360 = vset.pattern.permute.xlu0 6
      %3361 = vperm.xlu0 %3360, %v1015
      %v3362 = vpop.permute.xlu0 %3361
      %3364 = vset.pattern.permute.xlu0 6
      %3365 = vperm.xlu0 %3364, %v1016
      %v3366 = vpop.permute.xlu0 %3365
      %3368 = vset.pattern.permute.xlu0 6
      %3369 = vperm.xlu0 %3368, %v1017
      %v3370 = vpop.permute.xlu0 %3369
      %3372 = vset.pattern.permute.xlu0 6
      %3373 = vperm.xlu0 %3372, %v1018
      %v3374 = vpop.permute.xlu0 %3373
      %3376 = vset.pattern.permute.xlu0 6
      %3377 = vperm.xlu0 %3376, %v1019
      %v3378 = vpop.permute.xlu0 %3377
      %3380 = vset.pattern.permute.xlu0 6
      %3381 = vperm.xlu0 %3380, %v1020
      %v3382 = vpop.permute.xlu0 %3381
      %3384 = vset.pattern.permute.xlu0 6
      %3385 = vperm.xlu0 %3384, %v1021
      %v3386 = vpop.permute.xlu0 %3385
      %3388 = vset.pattern.permute.xlu0 6
      %3389 = vperm.xlu0 %3388, %v1022
      %v3390 = vpop.permute.xlu0 %3389
      %3392 = vset.pattern.permute.xlu0 6
      %3393 = vperm.xlu0 %3392, %v1023
      %v3394 = vpop.permute.xlu0 %3393
      %3396 = vset.pattern.permute.xlu0 6
      %3397 = vperm.xlu0 %3396, %v1024
      %v3398 = vpop.permute.xlu0 %3397
      %3400 = vset.pattern.permute.xlu0 6
      %3401 = vperm.xlu0 %3400, %v1025
      %v3402 = vpop.permute.xlu0 %3401
      %3404 = vset.pattern.permute.xlu0 6
      %3405 = vperm.xlu0 %3404, %v1026
      %v3406 = vpop.permute.xlu0 %3405
      %3408 = vset.pattern.permute.xlu0 6
      %3409 = vperm.xlu0 %3408, %v1027
      %v3410 = vpop.permute.xlu0 %3409
      %3412 = vset.pattern.permute.xlu0 6
      %3413 = vperm.xlu0 %3412, %v1028
      %v3414 = vpop.permute.xlu0 %3413
      %3416 = vset.pattern.permute.xlu0 6
      %3417 = vperm.xlu0 %3416, %v1029
      %v3418 = vpop.permute.xlu0 %3417
      %3420 = vset.pattern.permute.xlu0 6
      %3421 = vperm.xlu0 %3420, %v1030
      %v3422 = vpop.permute.xlu0 %3421
      %3424 = vset.pattern.permute.xlu0 6
      %3425 = vperm.xlu0 %3424, %v1031
      %v3426 = vpop.permute.xlu0 %3425
      %3428 = vset.pattern.permute.xlu0 6
      %3429 = vperm.xlu0 %3428, %v1032
      %v3430 = vpop.permute.xlu0 %3429
      %3432 = vset.pattern.permute.xlu0 6
      %3433 = vperm.xlu0 %3432, %v1033
      %v3434 = vpop.permute.xlu0 %3433
      %3436 = vset.pattern.permute.xlu0 6
      %3437 = vperm.xlu0 %3436, %v1034
      %v3438 = vpop.permute.xlu0 %3437
      %3440 = vset.pattern.permute.xlu0 6
      %3441 = vperm.xlu0 %3440, %v1035
      %v3442 = vpop.permute.xlu0 %3441
      %3444 = vset.pattern.permute.xlu0 6
      %3445 = vperm.xlu0 %3444, %v1036
      %v3446 = vpop.permute.xlu0 %3445
      %3448 = vset.pattern.permute.xlu0 6
      %3449 = vperm.xlu0 %3448, %v1037
      %v3450 = vpop.permute.xlu0 %3449
      %3452 = vset.pattern.permute.xlu0 6
      %3453 = vperm.xlu0 %3452, %v1038
      %v3454 = vpop.permute.xlu0 %3453
      %3456 = vset.pattern.permute.xlu0 6
      %3457 = vperm.xlu0 %3456, %v1039
      %v3458 = vpop.permute.xlu0 %3457
      %3460 = vset.pattern.permute.xlu0 6
      %3461 = vperm.xlu0 %3460, %v1040
      %v3462 = vpop.permute.xlu0 %3461
      %3464 = vset.pattern.permute.xlu0 6
      %3465 = vperm.xlu0 %3464, %v1041
      %v3466 = vpop.permute.xlu0 %3465
      %3468 = vset.pattern.permute.xlu0 6
      %3469 = vperm.xlu0 %3468, %v1042
      %v3470 = vpop.permute.xlu0 %3469
      %3472 = vset.pattern.permute.xlu0 6
      %3473 = vperm.xlu0 %3472, %v1043
      %v3474 = vpop.permute.xlu0 %3473
      %v3476 = vmul.f32 %v937, %v3350
      %v3477 = vmul.f32 %v939, %v3354
      %v3478 = vmul.f32 %v941, %v3358
      %v3479 = vmul.f32 %v943, %v3362
      %v3480 = vmul.f32 %v945, %v3366
      %v3481 = vmul.f32 %v947, %v3370
      %v3482 = vmul.f32 %v949, %v3374
      %v3483 = vmul.f32 %v951, %v3378
      %v3484 = vmul.f32 %v953, %v3382
      %v3485 = vmul.f32 %v955, %v3386
      %v3486 = vmul.f32 %v957, %v3390
      %v3487 = vmul.f32 %v959, %v3394
      %v3488 = vmul.f32 %v961, %v3398
      %v3489 = vmul.f32 %v963, %v3402
      %v3490 = vmul.f32 %v965, %v3406
      %v3491 = vmul.f32 %v967, %v3410
      %v3492 = vmul.f32 %v969, %v3414
      %v3493 = vmul.f32 %v971, %v3418
      %v3494 = vmul.f32 %v973, %v3422
      %v3495 = vmul.f32 %v975, %v3426
      %v3496 = vmul.f32 %v977, %v3430
      %v3497 = vmul.f32 %v979, %v3434
      %v3498 = vmul.f32 %v981, %v3438
      %v3499 = vmul.f32 %v982, %v3442
      %v3500 = vmul.f32 %v890, %v3446
      %v3501 = vmul.f32 %v892, %v3450
      %v3502 = vmul.f32 %v894, %v3454
      %v3503 = vmul.f32 %v896, %v3458
      %v3504 = vmul.f32 %v1011, %v3462
      %v3505 = vmul.f32 %v931, %v3466
      %v3506 = vmul.f32 %v933, %v3470
      %v3507 = vmul.f32 %v935, %v3474
      %v3508 = vld [vmem:[%s5 + $0xc0] sm:$0xff]
      %v3509 = vld [vmem:[%s5 + $0xc8] sm:$0xff]
      %v3510 = vld [vmem:[%s5 + $0xd0] sm:$0xff]
      %v3511 = vld [vmem:[%s5 + $0xd8] sm:$0xff]
      %v3513 = vsel %vm554, %v3476, 0
      %v3516 = vsel %vm554, %v3477, 0
      %v3519 = vsel %vm554, %v3478, 0
      %v3522 = vsel %vm554, %v3479, 0
      %v3525 = vsel %vm554, %v3480, 0
      %v3528 = vsel %vm554, %v3481, 0
      %v3531 = vsel %vm554, %v3482, 0
      %v3534 = vsel %vm554, %v3483, 0
      %v3537 = vsel %vm554, %v3484, 0
      %v3540 = vsel %vm554, %v3485, 0
      %v3543 = vsel %vm554, %v3486, 0
      %v3546 = vsel %vm554, %v3487, 0
      %v3549 = vsel %vm554, %v3488, 0
      %v3552 = vsel %vm554, %v3489, 0
      %v3555 = vsel %vm554, %v3490, 0
      %v3558 = vsel %vm554, %v3491, 0
      %v3561 = vsel %vm554, %v3492, 0
      %v3564 = vsel %vm554, %v3493, 0
      %v3567 = vsel %vm554, %v3494, 0
      %v3570 = vsel %vm554, %v3495, 0
      %v3573 = vsel %vm554, %v3496, 0
      %v3576 = vsel %vm554, %v3497, 0
      %v3579 = vsel %vm554, %v3498, 0
      %v3582 = vsel %vm554, %v3499, 0
      %v3585 = vsel %vm554, %v3500, 0
      %v3588 = vsel %vm554, %v3501, 0
      %v3591 = vsel %vm554, %v3502, 0
      %v3594 = vsel %vm554, %v3503, 0
      %v3597 = vsel %vm554, %v3504, 0
      %v3600 = vsel %vm554, %v3505, 0
      %v3603 = vsel %vm554, %v3506, 0
      %v3606 = vsel %vm554, %v3507, 0
      %3608 = vmatpush.msra.mxu0 0.0
      %3609 = vmatpush.msra.mxu0 0.0
      %3610 = vmatpush.msra.mxu0 0.0
      %3611 = vmatpush.msra.mxu0 0.0
      %3612 = vmatpush.msra.mxu0 0.0
      %3613 = vmatpush.msra.mxu0 0.0
      %3614 = vmatpush.msra.mxu0 0.0
      %3615 = vmatpush.msra.mxu0 0.0
      %3616 = vmatpush.msra.mxu0 0.0
      %3617 = vmatpush.msra.mxu0 0.0
      %3618 = vmatpush.msra.mxu0 0.0
      %3619 = vmatpush.msra.mxu0 0.0
      %3620 = vmatpush.msra.mxu0 %v3511
      %3621 = vmatpush.msra.mxu0 %v3510
      %3622 = vmatpush.msra.mxu0 %v3509
      %3623 = vmatpush.msra.mxu0 %v3508
      %3624 = vmatmul.f32.gmra.mxu0 %v3513
      %v3625 = vpop.f32.mrf.mxu0
      %v3626 = vadd.f32 0.0, %v3625
      %3627 = vmatmul.f32.gmra.mxu0 %v3516
      %v3628 = vpop.f32.mrf.mxu0
      %v3629 = vadd.f32 0.0, %v3628
      %3630 = vmatmul.f32.gmra.mxu0 %v3519
      %v3631 = vpop.f32.mrf.mxu0
      %v3632 = vadd.f32 0.0, %v3631
      %3633 = vmatmul.f32.gmra.mxu0 %v3522
      %v3634 = vpop.f32.mrf.mxu0
      %v3635 = vadd.f32 0.0, %v3634
      %3636 = vmatmul.f32.gmra.mxu0 %v3525
      %v3637 = vpop.f32.mrf.mxu0
      %v3638 = vadd.f32 0.0, %v3637
      %3639 = vmatmul.f32.gmra.mxu0 %v3528
      %v3640 = vpop.f32.mrf.mxu0
      %v3641 = vadd.f32 0.0, %v3640
      %3642 = vmatmul.f32.gmra.mxu0 %v3531
      %v3643 = vpop.f32.mrf.mxu0
      %v3644 = vadd.f32 0.0, %v3643
      %3645 = vmatmul.f32.gmra.mxu0 %v3534
      %v3646 = vpop.f32.mrf.mxu0
      %v3647 = vadd.f32 0.0, %v3646
      %3648 = vmatmul.f32.gmra.mxu0 %v3537
      %v3649 = vpop.f32.mrf.mxu0
      %v3650 = vadd.f32 0.0, %v3649
      %3651 = vmatmul.f32.gmra.mxu0 %v3540
      %v3652 = vpop.f32.mrf.mxu0
      %v3653 = vadd.f32 0.0, %v3652
      %3654 = vmatmul.f32.gmra.mxu0 %v3543
      %v3655 = vpop.f32.mrf.mxu0
      %v3656 = vadd.f32 0.0, %v3655
      %3657 = vmatmul.f32.gmra.mxu0 %v3546
      %v3658 = vpop.f32.mrf.mxu0
      %v3659 = vadd.f32 0.0, %v3658
      %3660 = vmatmul.f32.gmra.mxu0 %v3549
      %v3661 = vpop.f32.mrf.mxu0
      %v3662 = vadd.f32 0.0, %v3661
      %3663 = vmatmul.f32.gmra.mxu0 %v3552
      %v3664 = vpop.f32.mrf.mxu0
      %v3665 = vadd.f32 0.0, %v3664
      %3666 = vmatmul.f32.gmra.mxu0 %v3555
      %v3667 = vpop.f32.mrf.mxu0
      %v3668 = vadd.f32 0.0, %v3667
      %3669 = vmatmul.f32.gmra.mxu0 %v3558
      %v3670 = vpop.f32.mrf.mxu0
      %v3671 = vadd.f32 0.0, %v3670
      %3672 = vmatmul.f32.gmra.mxu0 %v3561
      %v3673 = vpop.f32.mrf.mxu0
      %v3674 = vadd.f32 0.0, %v3673
      %3675 = vmatmul.f32.gmra.mxu0 %v3564
      %v3676 = vpop.f32.mrf.mxu0
      %v3677 = vadd.f32 0.0, %v3676
      %3678 = vmatmul.f32.gmra.mxu0 %v3567
      %v3679 = vpop.f32.mrf.mxu0
      %v3680 = vadd.f32 0.0, %v3679
      %3681 = vmatmul.f32.gmra.mxu0 %v3570
      %v3682 = vpop.f32.mrf.mxu0
      %v3683 = vadd.f32 0.0, %v3682
      %3684 = vmatmul.f32.gmra.mxu0 %v3573
      %v3685 = vpop.f32.mrf.mxu0
      %v3686 = vadd.f32 0.0, %v3685
      %3687 = vmatmul.f32.gmra.mxu0 %v3576
      %v3688 = vpop.f32.mrf.mxu0
      %v3689 = vadd.f32 0.0, %v3688
      %3690 = vmatmul.f32.gmra.mxu0 %v3579
      %v3691 = vpop.f32.mrf.mxu0
      %v3692 = vadd.f32 0.0, %v3691
      %3693 = vmatmul.f32.gmra.mxu0 %v3582
      %v3694 = vpop.f32.mrf.mxu0
      %v3695 = vadd.f32 0.0, %v3694
      %3696 = vmatmul.f32.gmra.mxu0 %v3585
      %v3697 = vpop.f32.mrf.mxu0
      %v3698 = vadd.f32 0.0, %v3697
      %3699 = vmatmul.f32.gmra.mxu0 %v3588
      %v3700 = vpop.f32.mrf.mxu0
      %v3701 = vadd.f32 0.0, %v3700
      %3702 = vmatmul.f32.gmra.mxu0 %v3591
      %v3703 = vpop.f32.mrf.mxu0
      %v3704 = vadd.f32 0.0, %v3703
      %3705 = vmatmul.f32.gmra.mxu0 %v3594
      %v3706 = vpop.f32.mrf.mxu0
      %v3707 = vadd.f32 0.0, %v3706
      %3708 = vmatmul.f32.gmra.mxu0 %v3597
      %v3709 = vpop.f32.mrf.mxu0
      %v3710 = vadd.f32 0.0, %v3709
      %3711 = vmatmul.f32.gmra.mxu0 %v3600
      %v3712 = vpop.f32.mrf.mxu0
      %v3713 = vadd.f32 0.0, %v3712
      %3714 = vmatmul.f32.gmra.mxu0 %v3603
      %v3715 = vpop.f32.mrf.mxu0
      %v3716 = vadd.f32 0.0, %v3715
      %3717 = vmatmul.f32.gmra.mxu0 %v3606
      %v3718 = vpop.f32.mrf.mxu0
      %v3719 = vadd.f32 0.0, %v3718
      %3720 = vdwg.mxu0
      %v3721 = vadd.f32 %v3316, %v3626
      %v3722 = vadd.f32 %v3317, %v3629
      %v3723 = vadd.f32 %v3318, %v3632
      %v3724 = vadd.f32 %v3319, %v3635
      %v3725 = vadd.f32 %v3320, %v3638
      %v3726 = vadd.f32 %v3321, %v3641
      %v3727 = vadd.f32 %v3322, %v3644
      %v3728 = vadd.f32 %v3323, %v3647
      %v3729 = vadd.f32 %v3324, %v3650
      %v3730 = vadd.f32 %v3325, %v3653
      %v3731 = vadd.f32 %v3326, %v3656
      %v3732 = vadd.f32 %v3327, %v3659
      %v3733 = vadd.f32 %v3328, %v3662
      %v3734 = vadd.f32 %v3329, %v3665
      %v3735 = vadd.f32 %v3330, %v3668
      %v3736 = vadd.f32 %v3331, %v3671
      %v3737 = vadd.f32 %v3332, %v3674
      %v3738 = vadd.f32 %v3333, %v3677
      %v3739 = vadd.f32 %v3334, %v3680
      %v3740 = vadd.f32 %v3335, %v3683
      %v3741 = vadd.f32 %v3336, %v3686
      %v3742 = vadd.f32 %v3337, %v3689
      %v3743 = vadd.f32 %v3338, %v3692
      %v3744 = vadd.f32 %v3339, %v3695
      %v3745 = vadd.f32 %v3340, %v3698
      %v3746 = vadd.f32 %v3341, %v3701
      %v3747 = vadd.f32 %v3342, %v3704
      %v3748 = vadd.f32 %v3343, %v3707
      %v3749 = vadd.f32 %v3344, %v3710
      %v3750 = vadd.f32 %v3345, %v3713
      %v3751 = vadd.f32 %v3346, %v3716
      %v3752 = vadd.f32 %v3347, %v3719
      %3753 = vset.pattern.permute.xlu0 7
      %3754 = vperm.xlu0 %3753, %v1012
      %v3755 = vpop.permute.xlu0 %3754
      %3757 = vset.pattern.permute.xlu0 7
      %3758 = vperm.xlu0 %3757, %v1013
      %v3759 = vpop.permute.xlu0 %3758
      %3761 = vset.pattern.permute.xlu0 7
      %3762 = vperm.xlu0 %3761, %v1014
      %v3763 = vpop.permute.xlu0 %3762
      %3765 = vset.pattern.permute.xlu0 7
      %3766 = vperm.xlu0 %3765, %v1015
      %v3767 = vpop.permute.xlu0 %3766
      %3769 = vset.pattern.permute.xlu0 7
      %3770 = vperm.xlu0 %3769, %v1016
      %v3771 = vpop.permute.xlu0 %3770
      %3773 = vset.pattern.permute.xlu0 7
      %3774 = vperm.xlu0 %3773, %v1017
      %v3775 = vpop.permute.xlu0 %3774
      %3777 = vset.pattern.permute.xlu0 7
      %3778 = vperm.xlu0 %3777, %v1018
      %v3779 = vpop.permute.xlu0 %3778
      %3781 = vset.pattern.permute.xlu0 7
      %3782 = vperm.xlu0 %3781, %v1019
      %v3783 = vpop.permute.xlu0 %3782
      %3785 = vset.pattern.permute.xlu0 7
      %3786 = vperm.xlu0 %3785, %v1020
      %v3787 = vpop.permute.xlu0 %3786
      %3789 = vset.pattern.permute.xlu0 7
      %3790 = vperm.xlu0 %3789, %v1021
      %v3791 = vpop.permute.xlu0 %3790
      %3793 = vset.pattern.permute.xlu0 7
      %3794 = vperm.xlu0 %3793, %v1022
      %v3795 = vpop.permute.xlu0 %3794
      %3797 = vset.pattern.permute.xlu0 7
      %3798 = vperm.xlu0 %3797, %v1023
      %v3799 = vpop.permute.xlu0 %3798
      %3801 = vset.pattern.permute.xlu0 7
      %3802 = vperm.xlu0 %3801, %v1024
      %v3803 = vpop.permute.xlu0 %3802
      %3805 = vset.pattern.permute.xlu0 7
      %3806 = vperm.xlu0 %3805, %v1025
      %v3807 = vpop.permute.xlu0 %3806
      %3809 = vset.pattern.permute.xlu0 7
      %3810 = vperm.xlu0 %3809, %v1026
      %v3811 = vpop.permute.xlu0 %3810
      %3813 = vset.pattern.permute.xlu0 7
      %3814 = vperm.xlu0 %3813, %v1027
      %v3815 = vpop.permute.xlu0 %3814
      %3817 = vset.pattern.permute.xlu0 7
      %3818 = vperm.xlu0 %3817, %v1028
      %v3819 = vpop.permute.xlu0 %3818
      %3821 = vset.pattern.permute.xlu0 7
      %3822 = vperm.xlu0 %3821, %v1029
      %v3823 = vpop.permute.xlu0 %3822
      %3825 = vset.pattern.permute.xlu0 7
      %3826 = vperm.xlu0 %3825, %v1030
      %v3827 = vpop.permute.xlu0 %3826
      %3829 = vset.pattern.permute.xlu0 7
      %3830 = vperm.xlu0 %3829, %v1031
      %v3831 = vpop.permute.xlu0 %3830
      %3833 = vset.pattern.permute.xlu0 7
      %3834 = vperm.xlu0 %3833, %v1032
      %v3835 = vpop.permute.xlu0 %3834
      %3837 = vset.pattern.permute.xlu0 7
      %3838 = vperm.xlu0 %3837, %v1033
      %v3839 = vpop.permute.xlu0 %3838
      %3841 = vset.pattern.permute.xlu0 7
      %3842 = vperm.xlu0 %3841, %v1034
      %v3843 = vpop.permute.xlu0 %3842
      %3845 = vset.pattern.permute.xlu0 7
      %3846 = vperm.xlu0 %3845, %v1035
      %v3847 = vpop.permute.xlu0 %3846
      %3849 = vset.pattern.permute.xlu0 7
      %3850 = vperm.xlu0 %3849, %v1036
      %v3851 = vpop.permute.xlu0 %3850
      %3853 = vset.pattern.permute.xlu0 7
      %3854 = vperm.xlu0 %3853, %v1037
      %v3855 = vpop.permute.xlu0 %3854
      %3857 = vset.pattern.permute.xlu0 7
      %3858 = vperm.xlu0 %3857, %v1038
      %v3859 = vpop.permute.xlu0 %3858
      %3861 = vset.pattern.permute.xlu0 7
      %3862 = vperm.xlu0 %3861, %v1039
      %v3863 = vpop.permute.xlu0 %3862
      %3865 = vset.pattern.permute.xlu0 7
      %3866 = vperm.xlu0 %3865, %v1040
      %v3867 = vpop.permute.xlu0 %3866
      %3869 = vset.pattern.permute.xlu0 7
      %3870 = vperm.xlu0 %3869, %v1041
      %v3871 = vpop.permute.xlu0 %3870
      %3873 = vset.pattern.permute.xlu0 7
      %3874 = vperm.xlu0 %3873, %v1042
      %v3875 = vpop.permute.xlu0 %3874
      %3877 = vset.pattern.permute.xlu0 7
      %3878 = vperm.xlu0 %3877, %v1043
      %v3879 = vpop.permute.xlu0 %3878
      %v3881 = vmul.f32 %v854, %v3755
      %v3882 = vmul.f32 %v855, %v3759
      %v3883 = vmul.f32 %v856, %v3763
      %v3884 = vmul.f32 %v857, %v3767
      %v3885 = vmul.f32 %v858, %v3771
      %v3886 = vmul.f32 %v859, %v3775
      %v3887 = vmul.f32 %v860, %v3779
      %v3888 = vmul.f32 %v861, %v3783
      %v3889 = vmul.f32 %v862, %v3787
      %v3890 = vmul.f32 %v863, %v3791
      %v3891 = vmul.f32 %v864, %v3795
      %v3892 = vmul.f32 %v865, %v3799
      %v3893 = vmul.f32 %v866, %v3803
      %v3894 = vmul.f32 %v867, %v3807
      %v3895 = vmul.f32 %v868, %v3811
      %v3896 = vmul.f32 %v869, %v3815
      %v3897 = vmul.f32 %v870, %v3819
      %v3898 = vmul.f32 %v871, %v3823
      %v3899 = vmul.f32 %v872, %v3827
      %v3900 = vmul.f32 %v873, %v3831
      %v3901 = vmul.f32 %v874, %v3835
      %v3902 = vmul.f32 %v875, %v3839
      %v3903 = vmul.f32 %v876, %v3843
      %v3904 = vmul.f32 %v877, %v3847
      %v3905 = vmul.f32 %v878, %v3851
      %v3906 = vmul.f32 %v879, %v3855
      %v3907 = vmul.f32 %v880, %v3859
      %v3908 = vmul.f32 %v881, %v3863
      %v3909 = vmul.f32 %v850, %v3867
      %v3910 = vmul.f32 %v851, %v3871
      %v3911 = vmul.f32 %v852, %v3875
      %v3912 = vmul.f32 %v853, %v3879
      %v3913 = vld [vmem:[%s5 + $0xe0] sm:$0xff]
      %v3914 = vld [vmem:[%s5 + $0xe8] sm:$0xff]
      %v3915 = vld [vmem:[%s5 + $0xf0] sm:$0xff]
      %v3916 = vld [vmem:[%s5 + $0xf8] sm:$0xff]
      %v3918 = vsel %vm554, %v3881, 0
      %v3921 = vsel %vm554, %v3882, 0
      %v3924 = vsel %vm554, %v3883, 0
      %v3927 = vsel %vm554, %v3884, 0
      %v3930 = vsel %vm554, %v3885, 0
      %v3933 = vsel %vm554, %v3886, 0
      %v3936 = vsel %vm554, %v3887, 0
      %v3939 = vsel %vm554, %v3888, 0
      %v3942 = vsel %vm554, %v3889, 0
      %v3945 = vsel %vm554, %v3890, 0
      %v3948 = vsel %vm554, %v3891, 0
      %v3951 = vsel %vm554, %v3892, 0
      %v3954 = vsel %vm554, %v3893, 0
      %v3957 = vsel %vm554, %v3894, 0
      %v3960 = vsel %vm554, %v3895, 0
      %v3963 = vsel %vm554, %v3896, 0
      %v3966 = vsel %vm554, %v3897, 0
      %v3969 = vsel %vm554, %v3898, 0
      %v3972 = vsel %vm554, %v3899, 0
      %v3975 = vsel %vm554, %v3900, 0
      %v3978 = vsel %vm554, %v3901, 0
      %v3981 = vsel %vm554, %v3902, 0
      %v3984 = vsel %vm554, %v3903, 0
      %v3987 = vsel %vm554, %v3904, 0
      %v3990 = vsel %vm554, %v3905, 0
      %v3993 = vsel %vm554, %v3906, 0
      %v3996 = vsel %vm554, %v3907, 0
      %v3999 = vsel %vm554, %v3908, 0
      %v4002 = vsel %vm554, %v3909, 0
      %v4005 = vsel %vm554, %v3910, 0
      %v4008 = vsel %vm554, %v3911, 0
      %v4011 = vsel %vm554, %v3912, 0
      %4013 = vmatpush.msra.mxu0 0.0
      %4014 = vmatpush.msra.mxu0 0.0
      %4015 = vmatpush.msra.mxu0 0.0
      %4016 = vmatpush.msra.mxu0 0.0
      %4017 = vmatpush.msra.mxu0 0.0
      %4018 = vmatpush.msra.mxu0 0.0
      %4019 = vmatpush.msra.mxu0 0.0
      %4020 = vmatpush.msra.mxu0 0.0
      %4021 = vmatpush.msra.mxu0 0.0
      %4022 = vmatpush.msra.mxu0 0.0
      %4023 = vmatpush.msra.mxu0 0.0
      %4024 = vmatpush.msra.mxu0 0.0
      %4025 = vmatpush.msra.mxu0 %v3916
      %4026 = vmatpush.msra.mxu0 %v3915
      %4027 = vmatpush.msra.mxu0 %v3914
      %4028 = vmatpush.msra.mxu0 %v3913
      %4029 = vmatmul.f32.gmra.mxu0 %v3918
      %v4030 = vpop.f32.mrf.mxu0
      %v4031 = vadd.f32 0.0, %v4030
      %4032 = vmatmul.f32.gmra.mxu0 %v3921
      %v4033 = vpop.f32.mrf.mxu0
      %v4034 = vadd.f32 0.0, %v4033
      %4035 = vmatmul.f32.gmra.mxu0 %v3924
      %v4036 = vpop.f32.mrf.mxu0
      %v4037 = vadd.f32 0.0, %v4036
      %4038 = vmatmul.f32.gmra.mxu0 %v3927
      %v4039 = vpop.f32.mrf.mxu0
      %v4040 = vadd.f32 0.0, %v4039
      %4041 = vmatmul.f32.gmra.mxu0 %v3930
      %v4042 = vpop.f32.mrf.mxu0
      %v4043 = vadd.f32 0.0, %v4042
      %4044 = vmatmul.f32.gmra.mxu0 %v3933
      %v4045 = vpop.f32.mrf.mxu0
      %v4046 = vadd.f32 0.0, %v4045
      %4047 = vmatmul.f32.gmra.mxu0 %v3936
      %v4048 = vpop.f32.mrf.mxu0
      %v4049 = vadd.f32 0.0, %v4048
      %4050 = vmatmul.f32.gmra.mxu0 %v3939
      %v4051 = vpop.f32.mrf.mxu0
      %v4052 = vadd.f32 0.0, %v4051
      %4053 = vmatmul.f32.gmra.mxu0 %v3942
      %v4054 = vpop.f32.mrf.mxu0
      %v4055 = vadd.f32 0.0, %v4054
      %4056 = vmatmul.f32.gmra.mxu0 %v3945
      %v4057 = vpop.f32.mrf.mxu0
      %v4058 = vadd.f32 0.0, %v4057
      %4059 = vmatmul.f32.gmra.mxu0 %v3948
      %v4060 = vpop.f32.mrf.mxu0
      %v4061 = vadd.f32 0.0, %v4060
      %4062 = vmatmul.f32.gmra.mxu0 %v3951
      %v4063 = vpop.f32.mrf.mxu0
      %v4064 = vadd.f32 0.0, %v4063
      %4065 = vmatmul.f32.gmra.mxu0 %v3954
      %v4066 = vpop.f32.mrf.mxu0
      %v4067 = vadd.f32 0.0, %v4066
      %4068 = vmatmul.f32.gmra.mxu0 %v3957
      %v4069 = vpop.f32.mrf.mxu0
      %v4070 = vadd.f32 0.0, %v4069
      %4071 = vmatmul.f32.gmra.mxu0 %v3960
      %v4072 = vpop.f32.mrf.mxu0
      %v4073 = vadd.f32 0.0, %v4072
      %4074 = vmatmul.f32.gmra.mxu0 %v3963
      %v4075 = vpop.f32.mrf.mxu0
      %v4076 = vadd.f32 0.0, %v4075
      %4077 = vmatmul.f32.gmra.mxu0 %v3966
      %v4078 = vpop.f32.mrf.mxu0
      %v4079 = vadd.f32 0.0, %v4078
      %4080 = vmatmul.f32.gmra.mxu0 %v3969
      %v4081 = vpop.f32.mrf.mxu0
      %v4082 = vadd.f32 0.0, %v4081
      %4083 = vmatmul.f32.gmra.mxu0 %v3972
      %v4084 = vpop.f32.mrf.mxu0
      %v4085 = vadd.f32 0.0, %v4084
      %4086 = vmatmul.f32.gmra.mxu0 %v3975
      %v4087 = vpop.f32.mrf.mxu0
      %v4088 = vadd.f32 0.0, %v4087
      %4089 = vmatmul.f32.gmra.mxu0 %v3978
      %v4090 = vpop.f32.mrf.mxu0
      %v4091 = vadd.f32 0.0, %v4090
      %4092 = vmatmul.f32.gmra.mxu0 %v3981
      %v4093 = vpop.f32.mrf.mxu0
      %v4094 = vadd.f32 0.0, %v4093
      %4095 = vmatmul.f32.gmra.mxu0 %v3984
      %v4096 = vpop.f32.mrf.mxu0
      %v4097 = vadd.f32 0.0, %v4096
      %4098 = vmatmul.f32.gmra.mxu0 %v3987
      %v4099 = vpop.f32.mrf.mxu0
      %v4100 = vadd.f32 0.0, %v4099
      %4101 = vmatmul.f32.gmra.mxu0 %v3990
      %v4102 = vpop.f32.mrf.mxu0
      %v4103 = vadd.f32 0.0, %v4102
      %4104 = vmatmul.f32.gmra.mxu0 %v3993
      %v4105 = vpop.f32.mrf.mxu0
      %v4106 = vadd.f32 0.0, %v4105
      %4107 = vmatmul.f32.gmra.mxu0 %v3996
      %v4108 = vpop.f32.mrf.mxu0
      %v4109 = vadd.f32 0.0, %v4108
      %4110 = vmatmul.f32.gmra.mxu0 %v3999
      %v4111 = vpop.f32.mrf.mxu0
      %v4112 = vadd.f32 0.0, %v4111
      %4113 = vmatmul.f32.gmra.mxu0 %v4002
      %v4114 = vpop.f32.mrf.mxu0
      %v4115 = vadd.f32 0.0, %v4114
      %4116 = vmatmul.f32.gmra.mxu0 %v4005
      %v4117 = vpop.f32.mrf.mxu0
      %v4118 = vadd.f32 0.0, %v4117
      %4119 = vmatmul.f32.gmra.mxu0 %v4008
      %v4120 = vpop.f32.mrf.mxu0
      %v4121 = vadd.f32 0.0, %v4120
      %4122 = vmatmul.f32.gmra.mxu0 %v4011
      %v4123 = vpop.f32.mrf.mxu0
      %v4124 = vadd.f32 0.0, %v4123
      %4125 = vdwg.mxu0
      %v4126 = vadd.f32 %v3721, %v4031
      %v4127 = vadd.f32 %v3722, %v4034
      %v4128 = vadd.f32 %v3723, %v4037
      %v4129 = vadd.f32 %v3724, %v4040
      %v4130 = vadd.f32 %v3725, %v4043
      %v4131 = vadd.f32 %v3726, %v4046
      %v4132 = vadd.f32 %v3727, %v4049
      %v4133 = vadd.f32 %v3728, %v4052
      %v4134 = vadd.f32 %v3729, %v4055
      %v4135 = vadd.f32 %v3730, %v4058
      %v4136 = vadd.f32 %v3731, %v4061
      %v4137 = vadd.f32 %v3732, %v4064
      %v4138 = vadd.f32 %v3733, %v4067
      %v4139 = vadd.f32 %v3734, %v4070
      %v4140 = vadd.f32 %v3735, %v4073
      %v4141 = vadd.f32 %v3736, %v4076
      %v4142 = vadd.f32 %v3737, %v4079
      %v4143 = vadd.f32 %v3738, %v4082
      %v4144 = vadd.f32 %v3739, %v4085
      %v4145 = vadd.f32 %v3740, %v4088
      %v4146 = vadd.f32 %v3741, %v4091
      %v4147 = vadd.f32 %v3742, %v4094
      %v4148 = vadd.f32 %v3743, %v4097
      %v4149 = vadd.f32 %v3744, %v4100
      %v4150 = vadd.f32 %v3745, %v4103
      %v4151 = vadd.f32 %v3746, %v4106
      %v4152 = vadd.f32 %v3747, %v4109
      %v4153 = vadd.f32 %v3748, %v4112
      %v4154 = vadd.f32 %v3749, %v4115
      %v4155 = vadd.f32 %v3750, %v4118
      %v4156 = vadd.f32 %v3751, %v4121
      %v4157 = vadd.f32 %v3752, %v4124
      %4158 = vset.pattern.permute.xlu0 8
      %4159 = vperm.xlu0 %4158, %v1012
      %v4160 = vpop.permute.xlu0 %4159
      %4162 = vset.pattern.permute.xlu0 8
      %4163 = vperm.xlu0 %4162, %v1013
      %v4164 = vpop.permute.xlu0 %4163
      %4166 = vset.pattern.permute.xlu0 8
      %4167 = vperm.xlu0 %4166, %v1014
      %v4168 = vpop.permute.xlu0 %4167
      %4170 = vset.pattern.permute.xlu0 8
      %4171 = vperm.xlu0 %4170, %v1015
      %v4172 = vpop.permute.xlu0 %4171
      %4174 = vset.pattern.permute.xlu0 8
      %4175 = vperm.xlu0 %4174, %v1016
      %v4176 = vpop.permute.xlu0 %4175
      %4178 = vset.pattern.permute.xlu0 8
      %4179 = vperm.xlu0 %4178, %v1017
      %v4180 = vpop.permute.xlu0 %4179
      %4182 = vset.pattern.permute.xlu0 8
      %4183 = vperm.xlu0 %4182, %v1018
      %v4184 = vpop.permute.xlu0 %4183
      %4186 = vset.pattern.permute.xlu0 8
      %4187 = vperm.xlu0 %4186, %v1019
      %v4188 = vpop.permute.xlu0 %4187
      %4190 = vset.pattern.permute.xlu0 8
      %4191 = vperm.xlu0 %4190, %v1020
      %v4192 = vpop.permute.xlu0 %4191
      %4194 = vset.pattern.permute.xlu0 8
      %4195 = vperm.xlu0 %4194, %v1021
      %v4196 = vpop.permute.xlu0 %4195
      %4198 = vset.pattern.permute.xlu0 8
      %4199 = vperm.xlu0 %4198, %v1022
      %v4200 = vpop.permute.xlu0 %4199
      %4202 = vset.pattern.permute.xlu0 8
      %4203 = vperm.xlu0 %4202, %v1023
      %v4204 = vpop.permute.xlu0 %4203
      %4206 = vset.pattern.permute.xlu0 8
      %4207 = vperm.xlu0 %4206, %v1024
      %v4208 = vpop.permute.xlu0 %4207
      %4210 = vset.pattern.permute.xlu0 8
      %4211 = vperm.xlu0 %4210, %v1025
      %v4212 = vpop.permute.xlu0 %4211
      %4214 = vset.pattern.permute.xlu0 8
      %4215 = vperm.xlu0 %4214, %v1026
      %v4216 = vpop.permute.xlu0 %4215
      %4218 = vset.pattern.permute.xlu0 8
      %4219 = vperm.xlu0 %4218, %v1027
      %v4220 = vpop.permute.xlu0 %4219
      %4222 = vset.pattern.permute.xlu0 8
      %4223 = vperm.xlu0 %4222, %v1028
      %v4224 = vpop.permute.xlu0 %4223
      %4226 = vset.pattern.permute.xlu0 8
      %4227 = vperm.xlu0 %4226, %v1029
      %v4228 = vpop.permute.xlu0 %4227
      %4230 = vset.pattern.permute.xlu0 8
      %4231 = vperm.xlu0 %4230, %v1030
      %v4232 = vpop.permute.xlu0 %4231
      %4234 = vset.pattern.permute.xlu0 8
      %4235 = vperm.xlu0 %4234, %v1031
      %v4236 = vpop.permute.xlu0 %4235
      %4238 = vset.pattern.permute.xlu0 8
      %4239 = vperm.xlu0 %4238, %v1032
      %v4240 = vpop.permute.xlu0 %4239
      %4242 = vset.pattern.permute.xlu0 8
      %4243 = vperm.xlu0 %4242, %v1033
      %v4244 = vpop.permute.xlu0 %4243
      %4246 = vset.pattern.permute.xlu0 8
      %4247 = vperm.xlu0 %4246, %v1034
      %v4248 = vpop.permute.xlu0 %4247
      %4250 = vset.pattern.permute.xlu0 8
      %4251 = vperm.xlu0 %4250, %v1035
      %v4252 = vpop.permute.xlu0 %4251
      %4254 = vset.pattern.permute.xlu0 8
      %4255 = vperm.xlu0 %4254, %v1036
      %v4256 = vpop.permute.xlu0 %4255
      %4258 = vset.pattern.permute.xlu0 8
      %4259 = vperm.xlu0 %4258, %v1037
      %v4260 = vpop.permute.xlu0 %4259
      %4262 = vset.pattern.permute.xlu0 8
      %4263 = vperm.xlu0 %4262, %v1038
      %v4264 = vpop.permute.xlu0 %4263
      %4266 = vset.pattern.permute.xlu0 8
      %4267 = vperm.xlu0 %4266, %v1039
      %v4268 = vpop.permute.xlu0 %4267
      %4270 = vset.pattern.permute.xlu0 8
      %4271 = vperm.xlu0 %4270, %v1040
      %v4272 = vpop.permute.xlu0 %4271
      %4274 = vset.pattern.permute.xlu0 8
      %4275 = vperm.xlu0 %4274, %v1041
      %v4276 = vpop.permute.xlu0 %4275
      %4278 = vset.pattern.permute.xlu0 8
      %4279 = vperm.xlu0 %4278, %v1042
      %v4280 = vpop.permute.xlu0 %4279
      %4282 = vset.pattern.permute.xlu0 8
      %4283 = vperm.xlu0 %4282, %v1043
      %v4284 = vpop.permute.xlu0 %4283
      %v4286 = vmul.f32 %v1844, %v4160
      %v4287 = vmul.f32 %v1846, %v4164
      %v4288 = vmul.f32 %v1848, %v4168
      %v4289 = vmul.f32 %v1850, %v4172
      %v4290 = vmul.f32 %v1852, %v4176
      %v4291 = vmul.f32 %v1854, %v4180
      %v4292 = vmul.f32 %v1856, %v4184
      %v4293 = vmul.f32 %v1858, %v4188
      %v4294 = vmul.f32 %v1860, %v4192
      %v4295 = vmul.f32 %v1862, %v4196
      %v4296 = vmul.f32 %v1864, %v4200
      %v4297 = vmul.f32 %v1866, %v4204
      %v4298 = vmul.f32 %v1868, %v4208
      %v4299 = vmul.f32 %v1870, %v4212
      %v4300 = vmul.f32 %v1872, %v4216
      %v4301 = vmul.f32 %v1874, %v4220
      %v4302 = vmul.f32 %v1876, %v4224
      %v4303 = vmul.f32 %v1878, %v4228
      %v4304 = vmul.f32 %v1880, %v4232
      %v4305 = vmul.f32 %v1882, %v4236
      %v4306 = vmul.f32 %v1884, %v4240
      %v4307 = vmul.f32 %v1886, %v4244
      %v4308 = vmul.f32 %v1888, %v4248
      %v4309 = vmul.f32 %v1889, %v4252
      %v4310 = vmul.f32 %v1825, %v4256
      %v4311 = vmul.f32 %v1827, %v4260
      %v4312 = vmul.f32 %v1829, %v4264
      %v4313 = vmul.f32 %v1919, %v4268
      %v4314 = vmul.f32 %v1836, %v4272
      %v4315 = vmul.f32 %v1838, %v4276
      %v4316 = vmul.f32 %v1840, %v4280
      %v4317 = vmul.f32 %v1842, %v4284
      %v4318 = vld [vmem:[%s5 + $0x100] sm:$0xff]
      %v4319 = vld [vmem:[%s5 + $0x108] sm:$0xff]
      %v4320 = vld [vmem:[%s5 + $0x110] sm:$0xff]
      %v4321 = vld [vmem:[%s5 + $0x118] sm:$0xff]
      %v4323 = vsel %vm554, %v4286, 0
      %v4326 = vsel %vm554, %v4287, 0
      %v4329 = vsel %vm554, %v4288, 0
      %v4332 = vsel %vm554, %v4289, 0
      %v4335 = vsel %vm554, %v4290, 0
      %v4338 = vsel %vm554, %v4291, 0
      %v4341 = vsel %vm554, %v4292, 0
      %v4344 = vsel %vm554, %v4293, 0
      %v4347 = vsel %vm554, %v4294, 0
      %v4350 = vsel %vm554, %v4295, 0
      %v4353 = vsel %vm554, %v4296, 0
      %v4356 = vsel %vm554, %v4297, 0
      %v4359 = vsel %vm554, %v4298, 0
      %v4362 = vsel %vm554, %v4299, 0
      %v4365 = vsel %vm554, %v4300, 0
      %v4368 = vsel %vm554, %v4301, 0
      %v4371 = vsel %vm554, %v4302, 0
      %v4374 = vsel %vm554, %v4303, 0
      %v4377 = vsel %vm554, %v4304, 0
      %v4380 = vsel %vm554, %v4305, 0
      %v4383 = vsel %vm554, %v4306, 0
      %v4386 = vsel %vm554, %v4307, 0
      %v4389 = vsel %vm554, %v4308, 0
      %v4392 = vsel %vm554, %v4309, 0
      %v4395 = vsel %vm554, %v4310, 0
      %v4398 = vsel %vm554, %v4311, 0
      %v4401 = vsel %vm554, %v4312, 0
      %v4404 = vsel %vm554, %v4313, 0
      %v4407 = vsel %vm554, %v4314, 0
      %v4410 = vsel %vm554, %v4315, 0
      %v4413 = vsel %vm554, %v4316, 0
      %v4416 = vsel %vm554, %v4317, 0
      %4418 = vmatpush.msra.mxu0 0.0
      %4419 = vmatpush.msra.mxu0 0.0
      %4420 = vmatpush.msra.mxu0 0.0
      %4421 = vmatpush.msra.mxu0 0.0
      %4422 = vmatpush.msra.mxu0 0.0
      %4423 = vmatpush.msra.mxu0 0.0
      %4424 = vmatpush.msra.mxu0 0.0
      %4425 = vmatpush.msra.mxu0 0.0
      %4426 = vmatpush.msra.mxu0 0.0
      %4427 = vmatpush.msra.mxu0 0.0
      %4428 = vmatpush.msra.mxu0 0.0
      %4429 = vmatpush.msra.mxu0 0.0
      %4430 = vmatpush.msra.mxu0 %v4321
      %4431 = vmatpush.msra.mxu0 %v4320
      %4432 = vmatpush.msra.mxu0 %v4319
      %4433 = vmatpush.msra.mxu0 %v4318
      %4434 = vmatmul.f32.gmra.mxu0 %v4323
      %v4435 = vpop.f32.mrf.mxu0
      %v4436 = vadd.f32 0.0, %v4435
      %4437 = vmatmul.f32.gmra.mxu0 %v4326
      %v4438 = vpop.f32.mrf.mxu0
      %v4439 = vadd.f32 0.0, %v4438
      %4440 = vmatmul.f32.gmra.mxu0 %v4329
      %v4441 = vpop.f32.mrf.mxu0
      %v4442 = vadd.f32 0.0, %v4441
      %4443 = vmatmul.f32.gmra.mxu0 %v4332
      %v4444 = vpop.f32.mrf.mxu0
      %v4445 = vadd.f32 0.0, %v4444
      %4446 = vmatmul.f32.gmra.mxu0 %v4335
      %v4447 = vpop.f32.mrf.mxu0
      %v4448 = vadd.f32 0.0, %v4447
      %4449 = vmatmul.f32.gmra.mxu0 %v4338
      %v4450 = vpop.f32.mrf.mxu0
      %v4451 = vadd.f32 0.0, %v4450
      %4452 = vmatmul.f32.gmra.mxu0 %v4341
      %v4453 = vpop.f32.mrf.mxu0
      %v4454 = vadd.f32 0.0, %v4453
      %4455 = vmatmul.f32.gmra.mxu0 %v4344
      %v4456 = vpop.f32.mrf.mxu0
      %v4457 = vadd.f32 0.0, %v4456
      %4458 = vmatmul.f32.gmra.mxu0 %v4347
      %v4459 = vpop.f32.mrf.mxu0
      %v4460 = vadd.f32 0.0, %v4459
      %4461 = vmatmul.f32.gmra.mxu0 %v4350
      %v4462 = vpop.f32.mrf.mxu0
      %v4463 = vadd.f32 0.0, %v4462
      %4464 = vmatmul.f32.gmra.mxu0 %v4353
      %v4465 = vpop.f32.mrf.mxu0
      %v4466 = vadd.f32 0.0, %v4465
      %4467 = vmatmul.f32.gmra.mxu0 %v4356
      %v4468 = vpop.f32.mrf.mxu0
      %v4469 = vadd.f32 0.0, %v4468
      %4470 = vmatmul.f32.gmra.mxu0 %v4359
      %v4471 = vpop.f32.mrf.mxu0
      %v4472 = vadd.f32 0.0, %v4471
      %4473 = vmatmul.f32.gmra.mxu0 %v4362
      %v4474 = vpop.f32.mrf.mxu0
      %v4475 = vadd.f32 0.0, %v4474
      %4476 = vmatmul.f32.gmra.mxu0 %v4365
      %v4477 = vpop.f32.mrf.mxu0
      %v4478 = vadd.f32 0.0, %v4477
      %4479 = vmatmul.f32.gmra.mxu0 %v4368
      %v4480 = vpop.f32.mrf.mxu0
      %v4481 = vadd.f32 0.0, %v4480
      %4482 = vmatmul.f32.gmra.mxu0 %v4371
      %v4483 = vpop.f32.mrf.mxu0
      %v4484 = vadd.f32 0.0, %v4483
      %4485 = vmatmul.f32.gmra.mxu0 %v4374
      %v4486 = vpop.f32.mrf.mxu0
      %v4487 = vadd.f32 0.0, %v4486
      %4488 = vmatmul.f32.gmra.mxu0 %v4377
      %v4489 = vpop.f32.mrf.mxu0
      %v4490 = vadd.f32 0.0, %v4489
      %4491 = vmatmul.f32.gmra.mxu0 %v4380
      %v4492 = vpop.f32.mrf.mxu0
      %v4493 = vadd.f32 0.0, %v4492
      %4494 = vmatmul.f32.gmra.mxu0 %v4383
      %v4495 = vpop.f32.mrf.mxu0
      %v4496 = vadd.f32 0.0, %v4495
      %4497 = vmatmul.f32.gmra.mxu0 %v4386
      %v4498 = vpop.f32.mrf.mxu0
      %v4499 = vadd.f32 0.0, %v4498
      %4500 = vmatmul.f32.gmra.mxu0 %v4389
      %v4501 = vpop.f32.mrf.mxu0
      %v4502 = vadd.f32 0.0, %v4501
      %4503 = vmatmul.f32.gmra.mxu0 %v4392
      %v4504 = vpop.f32.mrf.mxu0
      %v4505 = vadd.f32 0.0, %v4504
      %4506 = vmatmul.f32.gmra.mxu0 %v4395
      %v4507 = vpop.f32.mrf.mxu0
      %v4508 = vadd.f32 0.0, %v4507
      %4509 = vmatmul.f32.gmra.mxu0 %v4398
      %v4510 = vpop.f32.mrf.mxu0
      %v4511 = vadd.f32 0.0, %v4510
      %4512 = vmatmul.f32.gmra.mxu0 %v4401
      %v4513 = vpop.f32.mrf.mxu0
      %v4514 = vadd.f32 0.0, %v4513
      %4515 = vmatmul.f32.gmra.mxu0 %v4404
      %v4516 = vpop.f32.mrf.mxu0
      %v4517 = vadd.f32 0.0, %v4516
      %4518 = vmatmul.f32.gmra.mxu0 %v4407
      %v4519 = vpop.f32.mrf.mxu0
      %v4520 = vadd.f32 0.0, %v4519
      %4521 = vmatmul.f32.gmra.mxu0 %v4410
      %v4522 = vpop.f32.mrf.mxu0
      %v4523 = vadd.f32 0.0, %v4522
      %4524 = vmatmul.f32.gmra.mxu0 %v4413
      %v4525 = vpop.f32.mrf.mxu0
      %v4526 = vadd.f32 0.0, %v4525
      %4527 = vmatmul.f32.gmra.mxu0 %v4416
      %v4528 = vpop.f32.mrf.mxu0
      %v4529 = vadd.f32 0.0, %v4528
      %4530 = vdwg.mxu0
      %v4531 = vadd.f32 %v4126, %v4436
      %v4532 = vadd.f32 %v4127, %v4439
      %v4533 = vadd.f32 %v4128, %v4442
      %v4534 = vadd.f32 %v4129, %v4445
      %v4535 = vadd.f32 %v4130, %v4448
      %v4536 = vadd.f32 %v4131, %v4451
      %v4537 = vadd.f32 %v4132, %v4454
      %v4538 = vadd.f32 %v4133, %v4457
      %v4539 = vadd.f32 %v4134, %v4460
      %v4540 = vadd.f32 %v4135, %v4463
      %v4541 = vadd.f32 %v4136, %v4466
      %v4542 = vadd.f32 %v4137, %v4469
      %v4543 = vadd.f32 %v4138, %v4472
      %v4544 = vadd.f32 %v4139, %v4475
      %v4545 = vadd.f32 %v4140, %v4478
      %v4546 = vadd.f32 %v4141, %v4481
      %v4547 = vadd.f32 %v4142, %v4484
      %v4548 = vadd.f32 %v4143, %v4487
      %v4549 = vadd.f32 %v4144, %v4490
      %v4550 = vadd.f32 %v4145, %v4493
      %v4551 = vadd.f32 %v4146, %v4496
      %v4552 = vadd.f32 %v4147, %v4499
      %v4553 = vadd.f32 %v4148, %v4502
      %v4554 = vadd.f32 %v4149, %v4505
      %v4555 = vadd.f32 %v4150, %v4508
      %v4556 = vadd.f32 %v4151, %v4511
      %v4557 = vadd.f32 %v4152, %v4514
      %v4558 = vadd.f32 %v4153, %v4517
      %v4559 = vadd.f32 %v4154, %v4520
      %v4560 = vadd.f32 %v4155, %v4523
      %v4561 = vadd.f32 %v4156, %v4526
      %v4562 = vadd.f32 %v4157, %v4529
      %v4563 = vld [vmem:[%s6] sm:$0x1]
      %v4565 = vperm.slane %v4563, 0
      %v4567 = vadd.f32 %v4531, %v4565
      %v4568 = vadd.f32 %v4532, %v4565
      %v4569 = vadd.f32 %v4533, %v4565
      %v4570 = vadd.f32 %v4534, %v4565
      %v4571 = vadd.f32 %v4535, %v4565
      %v4572 = vadd.f32 %v4536, %v4565
      %v4573 = vadd.f32 %v4537, %v4565
      %v4574 = vadd.f32 %v4538, %v4565
      %v4575 = vadd.f32 %v4539, %v4565
      %v4576 = vadd.f32 %v4540, %v4565
      %v4577 = vadd.f32 %v4541, %v4565
      %v4578 = vadd.f32 %v4542, %v4565
      %v4579 = vadd.f32 %v4543, %v4565
      %v4580 = vadd.f32 %v4544, %v4565
      %v4581 = vadd.f32 %v4545, %v4565
      %v4582 = vadd.f32 %v4546, %v4565
      %v4583 = vadd.f32 %v4547, %v4565
      %v4584 = vadd.f32 %v4548, %v4565
      %v4585 = vadd.f32 %v4549, %v4565
      %v4586 = vadd.f32 %v4550, %v4565
      %v4587 = vadd.f32 %v4551, %v4565
      %v4588 = vadd.f32 %v4552, %v4565
      %v4589 = vadd.f32 %v4553, %v4565
      %v4590 = vadd.f32 %v4554, %v4565
      %v4591 = vadd.f32 %v4555, %v4565
      %v4592 = vadd.f32 %v4556, %v4565
      %v4593 = vadd.f32 %v4557, %v4565
      %v4594 = vadd.f32 %v4558, %v4565
      %v4595 = vadd.f32 %v4559, %v4565
      %v4596 = vadd.f32 %v4560, %v4565
      %v4597 = vadd.f32 %v4561, %v4565
      %v4598 = vadd.f32 %v4562, %v4565
      %v4599 = vmax.f32 %v4567, 0.0
      %v4600 = vmax.f32 %v4568, 0.0
      %v4601 = vmax.f32 %v4569, 0.0
      %v4602 = vmax.f32 %v4570, 0.0
      %v4603 = vmax.f32 %v4571, 0.0
      %v4604 = vmax.f32 %v4572, 0.0
      %v4605 = vmax.f32 %v4573, 0.0
      %v4606 = vmax.f32 %v4574, 0.0
      %v4607 = vmax.f32 %v4575, 0.0
      %v4608 = vmax.f32 %v4576, 0.0
      %v4609 = vmax.f32 %v4577, 0.0
      %v4610 = vmax.f32 %v4578, 0.0
      %v4611 = vmax.f32 %v4579, 0.0
      %v4612 = vmax.f32 %v4580, 0.0
      %v4613 = vmax.f32 %v4581, 0.0
      %v4614 = vmax.f32 %v4582, 0.0
      %v4615 = vmax.f32 %v4583, 0.0
      %v4616 = vmax.f32 %v4584, 0.0
      %v4617 = vmax.f32 %v4585, 0.0
      %v4618 = vmax.f32 %v4586, 0.0
      %v4619 = vmax.f32 %v4587, 0.0
      %v4620 = vmax.f32 %v4588, 0.0
      %v4621 = vmax.f32 %v4589, 0.0
      %v4622 = vmax.f32 %v4590, 0.0
      %v4623 = vmax.f32 %v4591, 0.0
      %v4624 = vmax.f32 %v4592, 0.0
      %v4625 = vmax.f32 %v4593, 0.0
      %v4626 = vmax.f32 %v4594, 0.0
      %v4627 = vmax.f32 %v4595, 0.0
      %v4628 = vmax.f32 %v4596, 0.0
      %v4629 = vmax.f32 %v4597, 0.0
      %v4630 = vmax.f32 %v4598, 0.0
      %4631 = vst.msk [vmem:[%s305] sm:$0xff] %vm554, %v4599
      %4632 = vst.msk [vmem:[%s305 + $0x8] sm:$0xff] %vm554, %v4600
      %4633 = vst.msk [vmem:[%s305 + $0x10] sm:$0xff] %vm554, %v4601
      %4634 = vst.msk [vmem:[%s305 + $0x18] sm:$0xff] %vm554, %v4602
      %4635 = vst.msk [vmem:[%s305 + $0x20] sm:$0xff] %vm554, %v4603
      %4636 = vst.msk [vmem:[%s305 + $0x28] sm:$0xff] %vm554, %v4604
      %4637 = vst.msk [vmem:[%s305 + $0x30] sm:$0xff] %vm554, %v4605
      %4638 = vst.msk [vmem:[%s305 + $0x38] sm:$0xff] %vm554, %v4606
      %4639 = vst.msk [vmem:[%s305 + $0x40] sm:$0xff] %vm554, %v4607
      %4640 = vst.msk [vmem:[%s305 + $0x48] sm:$0xff] %vm554, %v4608
      %4641 = vst.msk [vmem:[%s305 + $0x50] sm:$0xff] %vm554, %v4609
      %4642 = vst.msk [vmem:[%s305 + $0x58] sm:$0xff] %vm554, %v4610
      %4643 = vst.msk [vmem:[%s305 + $0x60] sm:$0xff] %vm554, %v4611
      %4644 = vst.msk [vmem:[%s305 + $0x68] sm:$0xff] %vm554, %v4612
      %4645 = vst.msk [vmem:[%s305 + $0x70] sm:$0xff] %vm554, %v4613
      %4646 = vst.msk [vmem:[%s305 + $0x78] sm:$0xff] %vm554, %v4614
      %4647 = vst.msk [vmem:[%s305 + $0x80] sm:$0xff] %vm554, %v4615
      %4648 = vst.msk [vmem:[%s305 + $0x88] sm:$0xff] %vm554, %v4616
      %4649 = vst.msk [vmem:[%s305 + $0x90] sm:$0xff] %vm554, %v4617
      %4650 = vst.msk [vmem:[%s305 + $0x98] sm:$0xff] %vm554, %v4618
      %4651 = vst.msk [vmem:[%s305 + $0xa0] sm:$0xff] %vm554, %v4619
      %4652 = vst.msk [vmem:[%s305 + $0xa8] sm:$0xff] %vm554, %v4620
      %4653 = vst.msk [vmem:[%s305 + $0xb0] sm:$0xff] %vm554, %v4621
      %4654 = vst.msk [vmem:[%s305 + $0xb8] sm:$0xff] %vm554, %v4622
      %4655 = vst.msk [vmem:[%s305 + $0xc0] sm:$0xff] %vm554, %v4623
      %4656 = vst.msk [vmem:[%s305 + $0xc8] sm:$0xff] %vm554, %v4624
      %4657 = vst.msk [vmem:[%s305 + $0xd0] sm:$0xff] %vm554, %v4625
      %4658 = vst.msk [vmem:[%s305 + $0xd8] sm:$0xff] %vm554, %v4626
      %4659 = vst.msk [vmem:[%s305 + $0xe0] sm:$0xff] %vm554, %v4627
      %4660 = vst.msk [vmem:[%s305 + $0xe8] sm:$0xff] %vm554, %v4628
      %4661 = vst.msk [vmem:[%s305 + $0xf0] sm:$0xff] %vm554, %v4629
      %4662 = vst.msk [vmem:[%s305 + $0xf8] sm:$0xff] %vm554, %v4630
      %p4663 = scmp.lt.s32.totalorder %s19, 1
      %s4664 = scalar_select %p4663, %s19, 1
      %s4665 = smul.addr %s4664, 32
      %s4666 = smul.addr %s4665, 8
      %s4667 = scalar_lea.vmem %s8, %s4666
      // Predicated region
      $region53: #{tpu_custom_call.1} parent=51 // pred_check
        %p4668 = pneg %p210
      $region54: #{tpu_custom_call.1} parent=51 // pred_check_branch
        %4670 = sbr.rel (%p4668) target = $region56
      $region55: #{tpu_custom_call.1} parent=51 // pred_region
        _
      $region56: #{tpu_custom_call.1} parent=51 // pred_fallthru
        _
    $region52: #{tpu_custom_call.1} parent=5 // pred_fallthru
      _
    %p4671 = scmp.le.s32.totalorder 2, %s14
    // Predicated region
    $region57: #{tpu_custom_call.1} parent=5 // pred_check
      %p4672 = pneg %p4671
    $region58: #{tpu_custom_call.1} parent=5 // pred_check_branch
      %4674 = sbr.rel (%p4672) target = $region60
    $region59: #{tpu_custom_call.1} parent=5 // pred_region
      %s4675 = ssub.s32 %s14, 2
      // Predicated region
      $region61: #{tpu_custom_call.1} parent=59 // pred_check
        %p4676 = pneg %p216
      $region62: #{tpu_custom_call.1} parent=59 // pred_check_branch
        %4678 = sbr.rel (%p4676) target = $region64
      $region63: #{tpu_custom_call.1} parent=59 // pred_region
        %p4679 = scmp.lt.s32.totalorder %s20, 1
        %s4680 = scalar_select %p4679, %s20, 1
        %s4681 = smul.addr %s4680, 32
        %s4682 = smul.addr %s4681, 8
        %s4683 = scalar_lea.vmem %s8, %s4682
      $region64: #{tpu_custom_call.1} parent=59 // pred_fallthru
        _
    $region60: #{tpu_custom_call.1} parent=5 // pred_fallthru
      _
  $region6: #{tpu_custom_call.1} parent=0 // loop_footer
    %s18 = sadd.s32 1, %s14
  $region7: #{tpu_custom_call.1} parent=0 // loop_footer_branch
    %13 = sbr.rel target = $region3
  $region8: #{tpu_custom_call.1} parent=0 // loop_exit
    _

</llo_original>
